<compile_context>
chip_gen: v6e
topology: v6e:2x2x1
jax: 0.10.0
libtpu: 0.0.40
codegen_flags: <defaults>
</compile_context>

<pallas_src>
import math

import jax
import jax.numpy as jnp
from jax.experimental import pallas as pl
from jax.experimental.pallas import tpu as pltpu

# ---- small config (scaled down from module defaults hidden=768, heads=12, ffn=2048, layers=4) ----
BATCH = 2
SEQ = 8            # number of objects (L)
HIDDEN = 32        # hidden_size (D)
NUM_HEADS = 4      # num_attention_heads
FFN = 64           # dim_feedforward
SPATIAL_DIM = 5
DIM_LOC = 6
NUM_LAYERS = 2     # num_layers (module default is 4; kept small for the demo)

EPS_PAIR = 1e-10
LN_EPS = 1e-5
NEG_INF = -1e30


# ------------------------------ in-kernel helpers ------------------------------
def _gelu_tanh(x):
    # tanh-approx GELU: one EUP tanh instead of the erf polynomial (~10 VALU ops + divide + exp),
    # which matters most on v5e's f32-only VALUs.  Drift vs torch's exact erf GELU is <~1e-3.
    c0 = 0.7978845608028654   # sqrt(2/pi)
    return 0.5 * x * (1.0 + jnp.tanh(c0 * (x + 0.044715 * x * x * x)))


def _layer_norm(x, g, b):
    m = jnp.mean(x, axis=-1, keepdims=True)
    c = x - m
    v = jnp.mean(c * c, axis=-1, keepdims=True)
    return c * jax.lax.rsqrt(v + LN_EPS) * g + b


# ------------------------------ Pallas kernel ------------------------------
def _encoder_kernel(feats_ref, locs_ref, valid_ref,
                    wloc_ref, locvec_ref,
                    wqkv_ref, bqkv_ref, wc_ref, bc_ref, wo_ref,
                    w1_ref, b1_ref, w2_ref, vecd_ref,
                    out_ref,
                    x_scr, qp_scr, p_scr):
    f32 = jnp.float32
    L, D = feats_ref.shape
    S = p_scr.shape[0]                  # spatial_dim
    HC = wc_ref.shape[2]                # num_heads * (spatial_dim + 1)
    H = HC // (S + 1)
    DH = D // H
    scale = 1.0 / math.sqrt(DH)
    cdt = wqkv_ref.dtype                # matmul operand dtype (f32 or bf16)

    layer = pl.program_id(1)
    n_layers = pl.num_programs(1)

    # ---- per-batch-element init (layer 0): embeddings, query_pos, compact pairwise features ----
    @pl.when(layer == 0)
    def _init():
        x_scr[...] = feats_ref[...]      # dropout == identity at inference

        locs = locs_ref[...]             # (L, 6)
        # loc layer: Linear(6, D) + LayerNorm (same weights for every encoder layer)
        qp = jnp.dot(locs.astype(cdt), wloc_ref[...],
                     preferred_element_type=f32) + locvec_ref[0:1, :]
        qp_scr[...] = _layer_norm(qp, locvec_ref[1:2, :], locvec_ref[2:3, :])

        # calc_pairwise_locs('center', spatial_dist_norm=True, spatial_dim=5), kept compact (S,L,L)
        cx, cy, cz = locs[:, 0:1], locs[:, 1:2], locs[:, 2:3]
        dx = cx - cx.T                   # (L, L): center_l - center_t
        dy = cy - cy.T
        dz = cz - cz.T
        d3 = dx * dx + dy * dy + dz * dz + EPS_PAIR
        d2 = dx * dx + dy * dy + EPS_PAIR
        inv_d3 = jax.lax.rsqrt(d3)       # one EUP rsqrt instead of sqrt + approx reciprocal
        inv_d2 = jax.lax.rsqrt(d2)
        dist = d3 * inv_d3
        dist2d = d2 * inv_d2
        inv_max = pl.reciprocal(jnp.max(dist, keepdims=True), approx=True)   # per-batch norm
        feats5 = (dist * inv_max, dz * inv_d3, dist2d * inv_d3,
                  dy * inv_d2, dx * inv_d2)
        for s, pmap in enumerate(feats5):
            p_scr[s] = pmap

    pad = valid_ref[0] == 0.0            # (1, L): True on padded keys (== ~obj_masks)
    p_maps = [p_scr[s] for s in range(S)]

    # ---- one encoder layer (weights for this layer were streamed in by the BlockSpecs) ----
    x = x_scr[...] + qp_scr[...]         # obj_embeds + query_pos (added before every layer)
    x_c = x.astype(cdt)

    wqkv = wqkv_ref[0]
    wc = wc_ref[0]
    wo = wo_ref[0]
    w1 = w1_ref[0]
    w2 = w2_ref[0]
    bo = vecd_ref[0, 0:1, :]
    g1, be1 = vecd_ref[0, 1:2, :], vecd_ref[0, 2:3, :]
    b2 = vecd_ref[0, 3:4, :]
    g2, be2 = vecd_ref[0, 4:5, :], vecd_ref[0, 5:6, :]

    # fused q|k|v projection: one wide MXU call, then 3 aligned lane slices
    qkv = jnp.dot(x_c, wqkv, preferred_element_type=f32) + bqkv_ref[0]
    q = (qkv[:, 0:D] * scale).astype(cdt)
    k = qkv[:, D:2 * D].astype(cdt)
    v = qkv[:, 2 * D:3 * D].astype(cdt)

    # lang_cond_fc: compact (L, H*(S+1)) coefficient block (no pre-expanded wcx)
    sw = jnp.dot(x_c, wc, preferred_element_type=f32) + bc_ref[0]

    # TODO(synk): at production H=12 / L=80 prefer a head-batched (H, L, DH) dot_general or a
    #             lax.fori_loop over heads; the short static unroll is fine at H=4.
    ctx_heads = []
    for h in range(H):
        q_h = q[:, h * DH:(h + 1) * DH]
        k_h = k[:, h * DH:(h + 1) * DH]
        v_h = v[:, h * DH:(h + 1) * DH]

        # q_h @ k_h^T without materialising the transpose (contract both last dims)
        scores = jax.lax.dot_general(q_h, k_h, (((1,), (1,)), ((), ())),
                                     preferred_element_type=f32)       # (L, L)

        # conditional spatial attention: sigmoid(bias_h + sum_s w_{h,s} * P_s)
        base = h * (S + 1)
        loc = sw[:, base:base + 1] + sw[:, base + 1:base + 2] * p_maps[0]
        for s in range(1, S):
            loc = loc + sw[:, base + 1 + s:base + 2 + s] * p_maps[s]
        loc = jax.nn.sigmoid(loc)

        scores = jnp.where(pad, NEG_INF, scores)      # masked_fill(mask, -inf)
        loc = jnp.where(pad, 0.0, loc)                # masked_fill(mask, 0)
        fused = jnp.log(jnp.maximum(loc, 1e-6)) + scores

        # per-head softmax over keys (per-head max fixes the cross-head exp-underflow hazard)
        m = jnp.max(fused, axis=-1, keepdims=True)
        e = jnp.exp(fused - m)
        denom = jnp.sum(e, axis=-1, keepdims=True)
        prob = e * pl.reciprocal(denom, approx=True)

        ctx_heads.append(jnp.dot(prob.astype(cdt), v_h, preferred_element_type=f32))
    ctx = jnp.concatenate(ctx_heads, axis=1)          # (L, D), heads merged along lanes

    attn_out = jnp.dot(ctx.astype(cdt), wo, preferred_element_type=f32) + bo

    # post-norm transformer layer (dropouts are identity at inference)
    x1 = _layer_norm(x + attn_out, g1, be1)
    h1 = _gelu_tanh(jnp.dot(x1.astype(cdt), w1, preferred_element_type=f32) + b1_ref[0])
    h2 = jnp.dot(h1.astype(cdt), w2, preferred_element_type=f32) + b2
    x2 = _layer_norm(x1 + h2, g2, be2)

    x_scr[...] = x2                                   # carry obj_embeds to the next layer

    @pl.when(layer == n_layers - 1)
    def _final():
        out_ref[...] = x2.astype(out_ref.dtype)


# ------------------------------ wrapper ------------------------------
def point_tokenize_encoder(obj_feats, obj_locs, obj_masks, params, *,
                           matmul_dtype=jnp.float32):
    """matmul_dtype=jnp.bfloat16 casts all matmul operands (weights + activations at the MXU) to
    bf16 while keeping LayerNorm / softmax statistics and residual adds in f32."""
    B, L, D = obj_feats.shape
    DL = obj_locs.shape[-1]
    NL = params['wq'].shape[0]
    F = params['w1'].shape[-1]
    HC = params['wc'].shape[-1]
    S = SPATIAL_DIM
    cdt = matmul_dtype

    feats2d = obj_feats.reshape(B * L, D).astype(jnp.float32)
    locs2d = obj_locs.reshape(B * L, DL).astype(jnp.float32)
    validf = obj_masks.astype(jnp.float32).reshape(B, 1, L)

    # ---- wrapper-side packing: fused qkv, stacked bias/LN vectors; weights in matmul dtype ----
    wqkv = jnp.concatenate([params['wq'], params['wk'], params['wv']], axis=-1).astype(cdt)
    bqkv = jnp.concatenate([params['bq'], params['bk'], params['bv']], axis=-1)   # (NL,1,3D) f32
    locvec = jnp.concatenate([params['bloc'], params['gloc'], params['betloc']], axis=0)  # (3, D)
    vecd = jnp.stack([params['bo'][:, 0, :], params['g1'][:, 0, :], params['be1'][:, 0, :],
                      params['b2'][:, 0, :], params['g2'][:, 0, :], params['be2'][:, 0, :]],
                     axis=1)                                                      # (NL, 6, D)

    args = [feats2d, locs2d, validf,
            params['wloc'].astype(cdt), locvec,
            wqkv, bqkv,
            params['wc'].astype(cdt), params['bc'],
            params['wo'].astype(cdt),
            params['w1'].astype(cdt), params['b1'],
            params['w2'].astype(cdt),
            vecd]

    in_specs = [
        pl.BlockSpec((L, D), lambda b, l: (b, 0)),              # feats (per batch element)
        pl.BlockSpec((L, DL), lambda b, l: (b, 0)),             # locs
        pl.BlockSpec((1, 1, L), lambda b, l: (b, 0, 0)),        # valid mask
        pl.BlockSpec((DL, D), lambda b, l: (0, 0)),             # wloc (resident)
        pl.BlockSpec((3, D), lambda b, l: (0, 0)),              # loc bias/LN vectors (resident)
        pl.BlockSpec((1, D, 3 * D), lambda b, l: (l, 0, 0)),    # wqkv   -- streamed per layer
        pl.BlockSpec((1, 1, 3 * D), lambda b, l: (l, 0, 0)),    # bqkv
        pl.BlockSpec((1, D, HC), lambda b, l: (l, 0, 0)),       # wc (compact lang_cond_fc)
        pl.BlockSpec((1, 1, HC), lambda b, l: (l, 0, 0)),       # bc
        pl.BlockSpec((1, D, D), lambda b, l: (l, 0, 0)),        # wo
        pl.BlockSpec((1, D, F), lambda b, l: (l, 0, 0)),        # w1
        pl.BlockSpec((1, 1, F), lambda b, l: (l, 0, 0)),        # b1
        pl.BlockSpec((1, F, D), lambda b, l: (l, 0, 0)),        # w2
        pl.BlockSpec((1, 6, D), lambda b, l: (l, 0, 0)),        # stacked bias/LN vectors
    ]

    out = pl.pallas_call(
        _encoder_kernel,
        out_shape=jax.ShapeDtypeStruct((B * L, D), jnp.float32),
        grid_spec=pltpu.PrefetchScalarGridSpec(
            num_scalar_prefetch=0,
            grid=(B, NL),                                       # (parallel batch, arbitrary layers)
            in_specs=in_specs,
            out_specs=pl.BlockSpec((L, D), lambda b, l: (b, 0)),
            scratch_shapes=[
                pltpu.VMEM((L, D), jnp.float32),                # obj_embeds carried across layers
                pltpu.VMEM((L, D), jnp.float32),                # query_pos (computed once at l==0)
                pltpu.VMEM((S, L, L), jnp.float32),             # compact pairwise spatial features
            ],
        ),
        compiler_params=pltpu.CompilerParams(
            dimension_semantics=("parallel", "arbitrary"),
            vmem_limit_bytes=32 * 1024 * 1024,
        ),
    )(*args)
    return out.reshape(B, L, D)


# ------------------------------ deterministic params ------------------------------
def init_params(key):
    D, H, F, S, NL, DL = HIDDEN, NUM_HEADS, FFN, SPATIAL_DIM, NUM_LAYERS, DIM_LOC
    HC = H * (S + 1)
    keys = iter(jax.random.split(key, 40))

    def w(shape, scale=0.06):
        return (scale * jax.random.normal(next(keys), shape)).astype(jnp.float32)

    def b(shape, scale=0.02):
        return (scale * jax.random.normal(next(keys), shape)).astype(jnp.float32)

    return {
        'wloc': w((DL, D)), 'bloc': b((1, D)),
        'gloc': jnp.ones((1, D), jnp.float32), 'betloc': jnp.zeros((1, D), jnp.float32),
        'wq': w((NL, D, D)), 'bq': b((NL, 1, D)),
        'wk': w((NL, D, D)), 'bk': b((NL, 1, D)),
        'wv': w((NL, D, D)), 'bv': b((NL, 1, D)),
        'wo': w((NL, D, D)), 'bo': b((NL, 1, D)),
        'wc': w((NL, D, HC)), 'bc': b((NL, 1, HC)),
        'w1': w((NL, D, F)), 'b1': b((NL, 1, F)),
        'w2': w((NL, F, D)), 'b2': b((NL, 1, D)),
        'g1': jnp.ones((NL, 1, D), jnp.float32), 'be1': jnp.zeros((NL, 1, D), jnp.float32),
        'g2': jnp.ones((NL, 1, D), jnp.float32), 'be2': jnp.zeros((NL, 1, D), jnp.float32),
    }


# ------------------------------ pure-JAX reference (for validation) ------------------------------
def reference_forward(feats, locs, masks, p):
    B, L, D = feats.shape
    H, DH, S = NUM_HEADS, HIDDEN // NUM_HEADS, SPATIAL_DIM
    NL = p['wq'].shape[0]
    hp = jax.lax.Precision.HIGHEST

    c = locs[:, :, :3]
    diff = c[:, :, None, :] - c[:, None, :, :]
    dist = jnp.sqrt(jnp.sum(diff ** 2, -1) + EPS_PAIR)
    maxd = jnp.max(dist.reshape(B, -1), axis=1)[:, None, None]
    dist2d = jnp.sqrt(jnp.sum(diff[..., :2] ** 2, -1) + EPS_PAIR)
    P = jnp.stack([dist / maxd, diff[..., 2] / dist, dist2d / dist,
                   diff[..., 1] / dist2d, diff[..., 0] / dist2d], axis=-1)   # (B,L,L,5)
    pad = jnp.logical_not(masks)[:, None, None, :]

    def ln(x, g, b):
        m = x.mean(-1, keepdims=True)
        v = ((x - m) ** 2).mean(-1, keepdims=True)
        return (x - m) / jnp.sqrt(v + LN_EPS) * g + b

    def lin(x, w_, b_):
        return jnp.einsum('bld,de->ble', x, w_, precision=hp) + b_

    qp = ln(lin(locs, p['wloc'], p['bloc']), p['gloc'], p['betloc'])
    x = feats
    for i in range(NL):
        x = x + qp
        res = x

        def split_heads(t):
            return t.reshape(B, L, H, DH).transpose(0, 2, 1, 3)

        qh = split_heads(lin(x, p['wq'][i], p['bq'][i]))
        kh = split_heads(lin(x, p['wk'][i], p['bk'][i]))
        vh = split_heads(lin(x, p['wv'][i], p['bv'][i]))
        attn = jnp.einsum('bhld,bhtd->bhlt', qh, kh, precision=hp) / math.sqrt(DH)

        sw = lin(res, p['wc'][i], p['bc'][i]).reshape(B, L, H, S + 1).transpose(0, 2, 1, 3)
        bias = sw[..., 0:1]
        wsp = sw[..., 1:]
        loc = jnp.einsum('bhld,bltd->bhlt', wsp, P, precision=hp) + bias
        loc = jax.nn.sigmoid(loc)

        attn = jnp.where(pad, NEG_INF, attn)
        loc = jnp.where(pad, 0.0, loc)
        fused = jnp.log(jnp.maximum(loc, 1e-6)) + attn
        prob = jax.nn.softmax(fused, axis=-1)

        o = jnp.einsum('bhlt,bhtv->bhlv', prob, vh, precision=hp)
        o = o.transpose(0, 2, 1, 3).reshape(B, L, D)
        o = lin(o, p['wo'][i], p['bo'][i])
        x = ln(x + o, p['g1'][i], p['be1'][i])
        h1 = jax.nn.gelu(lin(x, p['w1'][i], p['b1'][i]), approximate=False)
        h2 = lin(h1, p['w2'][i], p['b2'][i])
        x = ln(x + h2, p['g2'][i], p['be2'][i])
    return x


# ------------------------------ main ------------------------------
if __name__ == "__main__":
    key = jax.random.PRNGKey(0)
    k_feat, k_ctr, k_sz, k_par = jax.random.split(key, 4)

    obj_feats = jax.random.normal(k_feat, (BATCH, SEQ, HIDDEN), jnp.float32)
    centers = jax.random.normal(k_ctr, (BATCH, SEQ, 3), jnp.float32)
    sizes = jnp.abs(jax.random.normal(k_sz, (BATCH, SEQ, 3), jnp.float32)) * 0.5 + 0.1
    obj_locs = jnp.concatenate([centers, sizes], axis=-1)
    # batch 0: all objects valid; batch 1: last 2 objects are padding
    obj_masks = jnp.array([[True] * SEQ,
                           [True] * (SEQ - 2) + [False] * 2])

    params = init_params(k_par)
    ref = reference_forward(obj_feats, obj_locs, obj_masks, params)

    # f32 matmuls (tight parity check)
    out = point_tokenize_encoder(obj_feats, obj_locs, obj_masks, params,
                                 matmul_dtype=jnp.float32)
    out = jax.block_until_ready(out)
    err = float(jnp.max(jnp.abs(out - ref)))
    assert out.shape == (BATCH, SEQ, HIDDEN)
    assert not bool(jnp.any(jnp.isnan(out)))
    assert err < 1e-2, f"f32 max abs err {err}"

    # bf16 matmul operands (2x MXU on v6e/v7x, half the weight DMA); loose tolerance for
    # bf16 rounding of the matmul operands.
    out_bf16 = point_tokenize_encoder(obj_feats, obj_locs, obj_masks, params,
                                      matmul_dtype=jnp.bfloat16)
    out_bf16 = jax.block_until_ready(out_bf16)
    err_bf16 = float(jnp.max(jnp.abs(out_bf16 - ref)))
    assert not bool(jnp.any(jnp.isnan(out_bf16)))
    assert err_bf16 < 1e-1, f"bf16 max abs err {err_bf16}"

    print("KERNEL_OK")
</pallas_src>

<mosaic_0001>
module attributes {stable_mosaic.version = 11 : i64} {
  func.func @_encoder_kernel(%arg0: i32, %arg1: i32, %arg2: memref<8x32xf32, #tpu.memory_space<vmem>>, %arg3: memref<8x6xf32, #tpu.memory_space<vmem>>, %arg4: memref<1x1x8xf32, #tpu.memory_space<vmem>>, %arg5: memref<6x32xf32, #tpu.memory_space<vmem>>, %arg6: memref<3x32xf32, #tpu.memory_space<vmem>>, %arg7: memref<1x32x96xf32, #tpu.memory_space<vmem>>, %arg8: memref<1x1x96xf32, #tpu.memory_space<vmem>>, %arg9: memref<1x32x24xf32, #tpu.memory_space<vmem>>, %arg10: memref<1x1x24xf32, #tpu.memory_space<vmem>>, %arg11: memref<1x32x32xf32, #tpu.memory_space<vmem>>, %arg12: memref<1x32x64xf32, #tpu.memory_space<vmem>>, %arg13: memref<1x1x64xf32, #tpu.memory_space<vmem>>, %arg14: memref<1x64x32xf32, #tpu.memory_space<vmem>>, %arg15: memref<1x6x32xf32, #tpu.memory_space<vmem>>, %arg16: memref<8x32xf32, #tpu.memory_space<vmem>>, %arg17: memref<8x32xf32, #tpu.memory_space<vmem>>, %arg18: memref<8x32xf32, #tpu.memory_space<vmem>>, %arg19: memref<5x8x8xf32, #tpu.memory_space<vmem>>) attributes {dimension_semantics = [#tpu.dimension_semantics<parallel>, #tpu.dimension_semantics<arbitrary>], iteration_bounds = array<i64: 2, 2>, scalar_prefetch = 0 : i64, scratch_operands = 3 : i64, tpu.core_type = #tpu.core_type<tc>, window_params = [{transform_indices = @transform_0, window_bounds = array<i64: 8, 32>}, {transform_indices = @transform_1, window_bounds = array<i64: 8, 6>}, {transform_indices = @transform_2, window_bounds = array<i64: 1, 1, 8>}, {pipeline_mode = #tpu.pipeline_mode<synchronous>, transform_indices = @transform_3, window_bounds = array<i64: 6, 32>}, {pipeline_mode = #tpu.pipeline_mode<synchronous>, transform_indices = @transform_4, window_bounds = array<i64: 3, 32>}, {transform_indices = @transform_5, window_bounds = array<i64: 1, 32, 96>}, {transform_indices = @transform_6, window_bounds = array<i64: 1, 1, 96>}, {transform_indices = @transform_7, window_bounds = array<i64: 1, 32, 24>}, {transform_indices = @transform_8, window_bounds = array<i64: 1, 1, 24>}, {transform_indices = @transform_9, window_bounds = array<i64: 1, 32, 32>}, {transform_indices = @transform_10, window_bounds = array<i64: 1, 32, 64>}, {transform_indices = @transform_11, window_bounds = array<i64: 1, 1, 64>}, {transform_indices = @transform_12, window_bounds = array<i64: 1, 64, 32>}, {transform_indices = @transform_13, window_bounds = array<i64: 1, 6, 32>}, {transform_indices = @transform_14, window_bounds = array<i64: 8, 32>}]} {
    %c0_i32 = arith.constant 0 : i32
    %0 = arith.cmpi eq, %arg1, %c0_i32 : i32
    %1 = arith.extui %0 : i1 to i32
    %c0_i32_0 = arith.constant 0 : i32
    %2 = arith.cmpi ne, %1, %c0_i32_0 : i32
    scf.if %2 {
      %c0_114 = arith.constant 0 : index
      %c0_115 = arith.constant 0 : index
      %344 = vector.load %arg2[%c0_114, %c0_115] : memref<8x32xf32, #tpu.memory_space<vmem>>, vector<8x32xf32>
      %c0_116 = arith.constant 0 : index
      %c0_117 = arith.constant 0 : index
      %345 = vector.load %arg17[%c0_116, %c0_117] : memref<8x32xf32, #tpu.memory_space<vmem>>, vector<8x32xf32>
      tpu.vector_store %arg17[%c0_116, %c0_117], %344 {strides = array<i32>} : memref<8x32xf32, #tpu.memory_space<vmem>>, vector<8x32xf32>,
      %c0_118 = arith.constant 0 : index
      %c0_119 = arith.constant 0 : index
      %346 = vector.load %arg3[%c0_118, %c0_119] : memref<8x6xf32, #tpu.memory_space<vmem>>, vector<8x6xf32>
      %c0_120 = arith.constant 0 : index
      %c0_121 = arith.constant 0 : index
      %347 = vector.load %arg5[%c0_120, %c0_121] : memref<6x32xf32, #tpu.memory_space<vmem>>, vector<6x32xf32>
      %cst_122 = arith.constant dense<0.000000e+00> : vector<8x32xf32>
      %348 = tpu.matmul %346, %347, %cst_122 {dimension_numbers = #tpu.dot_dimension_numbers<[1], [0], [0], [1], [0, 0, 1, 1], [], []>} : vector<8x6xf32>, vector<6x32xf32>, vector<8x32xf32> -> vector<8x32xf32>
      %c0_123 = arith.constant 0 : index
      %c0_124 = arith.constant 0 : index
      %349 = vector.load %arg6[%c0_123, %c0_124] : memref<3x32xf32, #tpu.memory_space<vmem>>, vector<1x32xf32>
      %350 = vector.broadcast %349 : vector<1x32xf32> to vector<8x32xf32>
      %351 = arith.addf %348, %350 : vector<8x32xf32>
      %c1_125 = arith.constant 1 : index
      %c0_126 = arith.constant 0 : index
      %352 = vector.load %arg6[%c1_125, %c0_126] : memref<3x32xf32, #tpu.memory_space<vmem>>, vector<1x32xf32>
      %c2_127 = arith.constant 2 : index
      %c0_128 = arith.constant 0 : index
      %353 = vector.load %arg6[%c2_127, %c0_128] : memref<3x32xf32, #tpu.memory_space<vmem>>, vector<1x32xf32>
      %cst_129 = arith.constant dense<0.000000e+00> : vector<8xf32>
      %354 = vector.multi_reduction <add>, %351, %cst_129 [1] : vector<8x32xf32> to vector<8xf32>
      %355 = vector.shape_cast %354 : vector<8xf32> to vector<8x1xf32>
      %cst_130 = arith.constant 3.200000e+01 : f32
      %356 = vector.broadcast %cst_130 : f32 to vector<8x1xf32>
      %357 = arith.divf %355, %356 : vector<8x1xf32>
      %358 = vector.broadcast %357 : vector<8x1xf32> to vector<8x32xf32>
      %359 = arith.subf %351, %358 : vector<8x32xf32>
      %360 = arith.mulf %359, %359 : vector<8x32xf32>
      %cst_131 = arith.constant dense<0.000000e+00> : vector<8xf32>
      %361 = vector.multi_reduction <add>, %360, %cst_131 [1] : vector<8x32xf32> to vector<8xf32>
      %362 = vector.shape_cast %361 : vector<8xf32> to vector<8x1xf32>
      %cst_132 = arith.constant 3.200000e+01 : f32
      %363 = vector.broadcast %cst_132 : f32 to vector<8x1xf32>
      %364 = arith.divf %362, %363 : vector<8x1xf32>
      %cst_133 = arith.constant 9.99999974E-6 : f32
      %365 = vector.broadcast %cst_133 : f32 to vector<8x1xf32>
      %366 = arith.addf %364, %365 : vector<8x1xf32>
      %367 = math.rsqrt %366 : vector<8x1xf32>
      %368 = vector.broadcast %367 : vector<8x1xf32> to vector<8x32xf32>
      %369 = arith.mulf %359, %368 : vector<8x32xf32>
      %370 = vector.broadcast %352 : vector<1x32xf32> to vector<8x32xf32>
      %371 = arith.mulf %369, %370 : vector<8x32xf32>
      %372 = vector.broadcast %353 : vector<1x32xf32> to vector<8x32xf32>
      %373 = arith.addf %371, %372 : vector<8x32xf32>
      %c0_134 = arith.constant 0 : index
      %c0_135 = arith.constant 0 : index
      %374 = vector.load %arg18[%c0_134, %c0_135] : memref<8x32xf32, #tpu.memory_space<vmem>>, vector<8x32xf32>
      tpu.vector_store %arg18[%c0_134, %c0_135], %373 {strides = array<i32>} : memref<8x32xf32, #tpu.memory_space<vmem>>, vector<8x32xf32>,
      %375 = vector.extract_strided_slice %346 {offsets = [0, 0], sizes = [8, 1], strides = [1, 1]} : vector<8x6xf32> to vector<8x1xf32>
      %376 = vector.extract_strided_slice %346 {offsets = [0, 1], sizes = [8, 1], strides = [1, 1]} : vector<8x6xf32> to vector<8x1xf32>
      %377 = vector.extract_strided_slice %346 {offsets = [0, 2], sizes = [8, 1], strides = [1, 1]} : vector<8x6xf32> to vector<8x1xf32>
      %378 = tpu.transpose %375, [1, 0] : vector<8x1xf32> -> vector<1x8xf32>
      %379 = vector.broadcast %375 : vector<8x1xf32> to vector<8x8xf32>
      %380 = vector.broadcast %378 : vector<1x8xf32> to vector<8x8xf32>
      %381 = arith.subf %379, %380 : vector<8x8xf32>
      %382 = tpu.transpose %376, [1, 0] : vector<8x1xf32> -> vector<1x8xf32>
      %383 = vector.broadcast %376 : vector<8x1xf32> to vector<8x8xf32>
      %384 = vector.broadcast %382 : vector<1x8xf32> to vector<8x8xf32>
      %385 = arith.subf %383, %384 : vector<8x8xf32>
      %386 = tpu.transpose %377, [1, 0] : vector<8x1xf32> -> vector<1x8xf32>
      %387 = vector.broadcast %377 : vector<8x1xf32> to vector<8x8xf32>
      %388 = vector.broadcast %386 : vector<1x8xf32> to vector<8x8xf32>
      %389 = arith.subf %387, %388 : vector<8x8xf32>
      %390 = arith.mulf %381, %381 : vector<8x8xf32>
      %391 = arith.mulf %385, %385 : vector<8x8xf32>
      %392 = arith.addf %390, %391 : vector<8x8xf32>
      %393 = arith.mulf %389, %389 : vector<8x8xf32>
      %394 = arith.addf %392, %393 : vector<8x8xf32>
      %cst_136 = arith.constant 1.000000e-10 : f32
      %395 = vector.broadcast %cst_136 : f32 to vector<8x8xf32>
      %396 = arith.addf %394, %395 : vector<8x8xf32>
      %397 = arith.mulf %381, %381 : vector<8x8xf32>
      %398 = arith.mulf %385, %385 : vector<8x8xf32>
      %399 = arith.addf %397, %398 : vector<8x8xf32>
      %cst_137 = arith.constant 1.000000e-10 : f32
      %400 = vector.broadcast %cst_137 : f32 to vector<8x8xf32>
      %401 = arith.addf %399, %400 : vector<8x8xf32>
      %402 = math.rsqrt %396 : vector<8x8xf32>
      %403 = math.rsqrt %401 : vector<8x8xf32>
      %404 = arith.mulf %396, %402 : vector<8x8xf32>
      %405 = arith.mulf %401, %403 : vector<8x8xf32>
      %406 = vector.shape_cast %404 : vector<8x8xf32> to vector<1x8x8xf32>
      %cst_138 = arith.constant dense<0xFF800000> : vector<1xf32>
      %407 = vector.multi_reduction <maximumf>, %406, %cst_138 [1, 2] : vector<1x8x8xf32> to vector<1xf32>
      %408 = vector.shape_cast %407 : vector<1xf32> to vector<1x1x1xf32>
      %409 = vector.extract %408[0, 0, 0] : f32 from vector<1x1x1xf32>
      %410 = vector.broadcast %409 : f32 to vector<1x1xf32>
      %411 = tpu.reciprocal %410 {approx = true} : vector<1x1xf32> -> vector<1x1xf32>
      %412 = vector.broadcast %411 : vector<1x1xf32> to vector<8x8xf32>
      %413 = arith.mulf %404, %412 : vector<8x8xf32>
      %414 = arith.mulf %389, %402 : vector<8x8xf32>
      %415 = arith.mulf %405, %402 : vector<8x8xf32>
      %416 = arith.mulf %385, %403 : vector<8x8xf32>
      %417 = arith.mulf %381, %403 : vector<8x8xf32>
      %c0_139 = arith.constant 0 : index
      %c0_140 = arith.constant 0 : index
      %c0_141 = arith.constant 0 : index
      %418 = vector.load %arg19[%c0_139, %c0_140, %c0_141] : memref<5x8x8xf32, #tpu.memory_space<vmem>>, vector<1x8x8xf32>
      %419 = vector.shape_cast %418 : vector<1x8x8xf32> to vector<8x8xf32>
      %420 = vector.shape_cast %413 : vector<8x8xf32> to vector<1x8x8xf32>
      tpu.vector_store %arg19[%c0_139, %c0_140, %c0_141], %420 {strides = array<i32>} : memref<5x8x8xf32, #tpu.memory_space<vmem>>, vector<1x8x8xf32>,
      %c1_142 = arith.constant 1 : index
      %c0_143 = arith.constant 0 : index
      %c0_144 = arith.constant 0 : index
      %421 = vector.load %arg19[%c1_142, %c0_143, %c0_144] : memref<5x8x8xf32, #tpu.memory_space<vmem>>, vector<1x8x8xf32>
      %422 = vector.shape_cast %421 : vector<1x8x8xf32> to vector<8x8xf32>
      %423 = vector.shape_cast %414 : vector<8x8xf32> to vector<1x8x8xf32>
      tpu.vector_store %arg19[%c1_142, %c0_143, %c0_144], %423 {strides = array<i32>} : memref<5x8x8xf32, #tpu.memory_space<vmem>>, vector<1x8x8xf32>,
      %c2_145 = arith.constant 2 : index
      %c0_146 = arith.constant 0 : index
      %c0_147 = arith.constant 0 : index
      %424 = vector.load %arg19[%c2_145, %c0_146, %c0_147] : memref<5x8x8xf32, #tpu.memory_space<vmem>>, vector<1x8x8xf32>
      %425 = vector.shape_cast %424 : vector<1x8x8xf32> to vector<8x8xf32>
      %426 = vector.shape_cast %415 : vector<8x8xf32> to vector<1x8x8xf32>
      tpu.vector_store %arg19[%c2_145, %c0_146, %c0_147], %426 {strides = array<i32>} : memref<5x8x8xf32, #tpu.memory_space<vmem>>, vector<1x8x8xf32>,
      %c3_148 = arith.constant 3 : index
      %c0_149 = arith.constant 0 : index
      %c0_150 = arith.constant 0 : index
      %427 = vector.load %arg19[%c3_148, %c0_149, %c0_150] : memref<5x8x8xf32, #tpu.memory_space<vmem>>, vector<1x8x8xf32>
      %428 = vector.shape_cast %427 : vector<1x8x8xf32> to vector<8x8xf32>
      %429 = vector.shape_cast %416 : vector<8x8xf32> to vector<1x8x8xf32>
      tpu.vector_store %arg19[%c3_148, %c0_149, %c0_150], %429 {strides = array<i32>} : memref<5x8x8xf32, #tpu.memory_space<vmem>>, vector<1x8x8xf32>,
      %c4_151 = arith.constant 4 : index
      %c0_152 = arith.constant 0 : index
      %c0_153 = arith.constant 0 : index
      %430 = vector.load %arg19[%c4_151, %c0_152, %c0_153] : memref<5x8x8xf32, #tpu.memory_space<vmem>>, vector<1x8x8xf32>
      %431 = vector.shape_cast %430 : vector<1x8x8xf32> to vector<8x8xf32>
      %432 = vector.shape_cast %417 : vector<8x8xf32> to vector<1x8x8xf32>
      tpu.vector_store %arg19[%c4_151, %c0_152, %c0_153], %432 {strides = array<i32>} : memref<5x8x8xf32, #tpu.memory_space<vmem>>, vector<1x8x8xf32>,
    } else {
    }
    %c0 = arith.constant 0 : index
    %c0_1 = arith.constant 0 : index
    %c0_2 = arith.constant 0 : index
    %3 = vector.load %arg4[%c0, %c0_1, %c0_2] : memref<1x1x8xf32, #tpu.memory_space<vmem>>, vector<1x1x8xf32>
    %4 = vector.shape_cast %3 : vector<1x1x8xf32> to vector<1x8xf32>
    %cst = arith.constant 0.000000e+00 : f32
    %5 = vector.broadcast %cst : f32 to vector<1x8xf32>
    %6 = arith.cmpf oeq, %4, %5 : vector<1x8xf32>
    %c0_3 = arith.constant 0 : index
    %c0_4 = arith.constant 0 : index
    %c0_5 = arith.constant 0 : index
    %7 = vector.load %arg19[%c0_3, %c0_4, %c0_5] : memref<5x8x8xf32, #tpu.memory_space<vmem>>, vector<1x8x8xf32>
    %8 = vector.shape_cast %7 : vector<1x8x8xf32> to vector<8x8xf32>
    %c1 = arith.constant 1 : index
    %c0_6 = arith.constant 0 : index
    %c0_7 = arith.constant 0 : index
    %9 = vector.load %arg19[%c1, %c0_6, %c0_7] : memref<5x8x8xf32, #tpu.memory_space<vmem>>, vector<1x8x8xf32>
    %10 = vector.shape_cast %9 : vector<1x8x8xf32> to vector<8x8xf32>
    %c2 = arith.constant 2 : index
    %c0_8 = arith.constant 0 : index
    %c0_9 = arith.constant 0 : index
    %11 = vector.load %arg19[%c2, %c0_8, %c0_9] : memref<5x8x8xf32, #tpu.memory_space<vmem>>, vector<1x8x8xf32>
    %12 = vector.shape_cast %11 : vector<1x8x8xf32> to vector<8x8xf32>
    %c3 = arith.constant 3 : index
    %c0_10 = arith.constant 0 : index
    %c0_11 = arith.constant 0 : index
    %13 = vector.load %arg19[%c3, %c0_10, %c0_11] : memref<5x8x8xf32, #tpu.memory_space<vmem>>, vector<1x8x8xf32>
    %14 = vector.shape_cast %13 : vector<1x8x8xf32> to vector<8x8xf32>
    %c4 = arith.constant 4 : index
    %c0_12 = arith.constant 0 : index
    %c0_13 = arith.constant 0 : index
    %15 = vector.load %arg19[%c4, %c0_12, %c0_13] : memref<5x8x8xf32, #tpu.memory_space<vmem>>, vector<1x8x8xf32>
    %16 = vector.shape_cast %15 : vector<1x8x8xf32> to vector<8x8xf32>
    %c0_14 = arith.constant 0 : index
    %c0_15 = arith.constant 0 : index
    %17 = vector.load %arg17[%c0_14, %c0_15] : memref<8x32xf32, #tpu.memory_space<vmem>>, vector<8x32xf32>
    %c0_16 = arith.constant 0 : index
    %c0_17 = arith.constant 0 : index
    %18 = vector.load %arg18[%c0_16, %c0_17] : memref<8x32xf32, #tpu.memory_space<vmem>>, vector<8x32xf32>
    %19 = arith.addf %17, %18 : vector<8x32xf32>
    %c0_18 = arith.constant 0 : index
    %c0_19 = arith.constant 0 : index
    %c0_20 = arith.constant 0 : index
    %20 = vector.load %arg7[%c0_18, %c0_19, %c0_20] : memref<1x32x96xf32, #tpu.memory_space<vmem>>, vector<1x32x96xf32>
    %21 = vector.shape_cast %20 : vector<1x32x96xf32> to vector<32x96xf32>
    %c0_21 = arith.constant 0 : index
    %c0_22 = arith.constant 0 : index
    %c0_23 = arith.constant 0 : index
    %22 = vector.load %arg9[%c0_21, %c0_22, %c0_23] : memref<1x32x24xf32, #tpu.memory_space<vmem>>, vector<1x32x24xf32>
    %23 = vector.shape_cast %22 : vector<1x32x24xf32> to vector<32x24xf32>
    %c0_24 = arith.constant 0 : index
    %c0_25 = arith.constant 0 : index
    %c0_26 = arith.constant 0 : index
    %24 = vector.load %arg11[%c0_24, %c0_25, %c0_26] : memref<1x32x32xf32, #tpu.memory_space<vmem>>, vector<1x32x32xf32>
    %25 = vector.shape_cast %24 : vector<1x32x32xf32> to vector<32x32xf32>
    %c0_27 = arith.constant 0 : index
    %c0_28 = arith.constant 0 : index
    %c0_29 = arith.constant 0 : index
    %26 = vector.load %arg12[%c0_27, %c0_28, %c0_29] : memref<1x32x64xf32, #tpu.memory_space<vmem>>, vector<1x32x64xf32>
    %27 = vector.shape_cast %26 : vector<1x32x64xf32> to vector<32x64xf32>
    %c0_30 = arith.constant 0 : index
    %c0_31 = arith.constant 0 : index
    %c0_32 = arith.constant 0 : index
    %28 = vector.load %arg14[%c0_30, %c0_31, %c0_32] : memref<1x64x32xf32, #tpu.memory_space<vmem>>, vector<1x64x32xf32>
    %29 = vector.shape_cast %28 : vector<1x64x32xf32> to vector<64x32xf32>
    %c0_33 = arith.constant 0 : index
    %c0_34 = arith.constant 0 : index
    %c0_35 = arith.constant 0 : index
    %30 = vector.load %arg15[%c0_33, %c0_34, %c0_35] : memref<1x6x32xf32, #tpu.memory_space<vmem>>, vector<1x1x32xf32>
    %31 = vector.shape_cast %30 : vector<1x1x32xf32> to vector<1x32xf32>
    %c0_36 = arith.constant 0 : index
    %c1_37 = arith.constant 1 : index
    %c0_38 = arith.constant 0 : index
    %32 = vector.load %arg15[%c0_36, %c1_37, %c0_38] : memref<1x6x32xf32, #tpu.memory_space<vmem>>, vector<1x1x32xf32>
    %33 = vector.shape_cast %32 : vector<1x1x32xf32> to vector<1x32xf32>
    %c0_39 = arith.constant 0 : index
    %c2_40 = arith.constant 2 : index
    %c0_41 = arith.constant 0 : index
    %34 = vector.load %arg15[%c0_39, %c2_40, %c0_41] : memref<1x6x32xf32, #tpu.memory_space<vmem>>, vector<1x1x32xf32>
    %35 = vector.shape_cast %34 : vector<1x1x32xf32> to vector<1x32xf32>
    %c0_42 = arith.constant 0 : index
    %c3_43 = arith.constant 3 : index
    %c0_44 = arith.constant 0 : index
    %36 = vector.load %arg15[%c0_42, %c3_43, %c0_44] : memref<1x6x32xf32, #tpu.memory_space<vmem>>, vector<1x1x32xf32>
    %37 = vector.shape_cast %36 : vector<1x1x32xf32> to vector<1x32xf32>
    %c0_45 = arith.constant 0 : index
    %c4_46 = arith.constant 4 : index
    %c0_47 = arith.constant 0 : index
    %38 = vector.load %arg15[%c0_45, %c4_46, %c0_47] : memref<1x6x32xf32, #tpu.memory_space<vmem>>, vector<1x1x32xf32>
    %39 = vector.shape_cast %38 : vector<1x1x32xf32> to vector<1x32xf32>
    %c0_48 = arith.constant 0 : index
    %c5 = arith.constant 5 : index
    %c0_49 = arith.constant 0 : index
    %40 = vector.load %arg15[%c0_48, %c5, %c0_49] : memref<1x6x32xf32, #tpu.memory_space<vmem>>, vector<1x1x32xf32>
    %41 = vector.shape_cast %40 : vector<1x1x32xf32> to vector<1x32xf32>
    %cst_50 = arith.constant dense<0.000000e+00> : vector<8x96xf32>
    %42 = tpu.matmul %19, %21, %cst_50 {dimension_numbers = #tpu.dot_dimension_numbers<[1], [0], [0], [1], [0, 0, 1, 1], [], []>} : vector<8x32xf32>, vector<32x96xf32>, vector<8x96xf32> -> vector<8x96xf32>
    %c0_51 = arith.constant 0 : index
    %c0_52 = arith.constant 0 : index
    %c0_53 = arith.constant 0 : index
    %43 = vector.load %arg8[%c0_51, %c0_52, %c0_53] : memref<1x1x96xf32, #tpu.memory_space<vmem>>, vector<1x1x96xf32>
    %44 = vector.shape_cast %43 : vector<1x1x96xf32> to vector<1x96xf32>
    %45 = vector.broadcast %44 : vector<1x96xf32> to vector<8x96xf32>
    %46 = arith.addf %42, %45 : vector<8x96xf32>
    %47 = vector.extract_strided_slice %46 {offsets = [0, 0], sizes = [8, 32], strides = [1, 1]} : vector<8x96xf32> to vector<8x32xf32>
    %cst_54 = arith.constant 0.353553385 : f32
    %48 = vector.broadcast %cst_54 : f32 to vector<8x32xf32>
    %49 = arith.mulf %47, %48 : vector<8x32xf32>
    %50 = vector.extract_strided_slice %46 {offsets = [0, 32], sizes = [8, 32], strides = [1, 1]} : vector<8x96xf32> to vector<8x32xf32>
    %51 = vector.extract_strided_slice %46 {offsets = [0, 64], sizes = [8, 32], strides = [1, 1]} : vector<8x96xf32> to vector<8x32xf32>
    %cst_55 = arith.constant dense<0.000000e+00> : vector<8x24xf32>
    %52 = tpu.matmul %19, %23, %cst_55 {dimension_numbers = #tpu.dot_dimension_numbers<[1], [0], [0], [1], [0, 0, 1, 1], [], []>} : vector<8x32xf32>, vector<32x24xf32>, vector<8x24xf32> -> vector<8x24xf32>
    %c0_56 = arith.constant 0 : index
    %c0_57 = arith.constant 0 : index
    %c0_58 = arith.constant 0 : index
    %53 = vector.load %arg10[%c0_56, %c0_57, %c0_58] : memref<1x1x24xf32, #tpu.memory_space<vmem>>, vector<1x1x24xf32>
    %54 = vector.shape_cast %53 : vector<1x1x24xf32> to vector<1x24xf32>
    %55 = vector.broadcast %54 : vector<1x24xf32> to vector<8x24xf32>
    %56 = arith.addf %52, %55 : vector<8x24xf32>
    %57 = vector.extract_strided_slice %49 {offsets = [0, 0], sizes = [8, 8], strides = [1, 1]} : vector<8x32xf32> to vector<8x8xf32>
    %58 = vector.extract_strided_slice %50 {offsets = [0, 0], sizes = [8, 8], strides = [1, 1]} : vector<8x32xf32> to vector<8x8xf32>
    %59 = vector.extract_strided_slice %51 {offsets = [0, 0], sizes = [8, 8], strides = [1, 1]} : vector<8x32xf32> to vector<8x8xf32>
    %cst_59 = arith.constant dense<0.000000e+00> : vector<8x8xf32>
    %60 = tpu.matmul %57, %58, %cst_59 {dimension_numbers = #tpu.dot_dimension_numbers<[1], [1], [0], [0], [0, 0, 1, 0], [], []>} : vector<8x8xf32>, vector<8x8xf32>, vector<8x8xf32> -> vector<8x8xf32>
    %61 = vector.extract_strided_slice %56 {offsets = [0, 0], sizes = [8, 1], strides = [1, 1]} : vector<8x24xf32> to vector<8x1xf32>
    %62 = vector.extract_strided_slice %56 {offsets = [0, 1], sizes = [8, 1], strides = [1, 1]} : vector<8x24xf32> to vector<8x1xf32>
    %63 = vector.broadcast %62 : vector<8x1xf32> to vector<8x8xf32>
    %64 = arith.mulf %63, %8 : vector<8x8xf32>
    %65 = vector.broadcast %61 : vector<8x1xf32> to vector<8x8xf32>
    %66 = arith.addf %65, %64 : vector<8x8xf32>
    %67 = vector.extract_strided_slice %56 {offsets = [0, 2], sizes = [8, 1], strides = [1, 1]} : vector<8x24xf32> to vector<8x1xf32>
    %68 = vector.broadcast %67 : vector<8x1xf32> to vector<8x8xf32>
    %69 = arith.mulf %68, %10 : vector<8x8xf32>
    %70 = arith.addf %66, %69 : vector<8x8xf32>
    %71 = vector.extract_strided_slice %56 {offsets = [0, 3], sizes = [8, 1], strides = [1, 1]} : vector<8x24xf32> to vector<8x1xf32>
    %72 = vector.broadcast %71 : vector<8x1xf32> to vector<8x8xf32>
    %73 = arith.mulf %72, %12 : vector<8x8xf32>
    %74 = arith.addf %70, %73 : vector<8x8xf32>
    %75 = vector.extract_strided_slice %56 {offsets = [0, 4], sizes = [8, 1], strides = [1, 1]} : vector<8x24xf32> to vector<8x1xf32>
    %76 = vector.broadcast %75 : vector<8x1xf32> to vector<8x8xf32>
    %77 = arith.mulf %76, %14 : vector<8x8xf32>
    %78 = arith.addf %74, %77 : vector<8x8xf32>
    %79 = vector.extract_strided_slice %56 {offsets = [0, 5], sizes = [8, 1], strides = [1, 1]} : vector<8x24xf32> to vector<8x1xf32>
    %80 = vector.broadcast %79 : vector<8x1xf32> to vector<8x8xf32>
    %81 = arith.mulf %80, %16 : vector<8x8xf32>
    %82 = arith.addf %78, %81 : vector<8x8xf32>
    %83 = arith.negf %82 : vector<8x8xf32>
    %84 = math.exp %83 : vector<8x8xf32>
    %cst_60 = arith.constant 1.000000e+00 : f32
    %85 = vector.broadcast %cst_60 : f32 to vector<8x8xf32>
    %86 = arith.addf %85, %84 : vector<8x8xf32>
    %87 = arith.divf %85, %86 : vector<8x8xf32>
    %cst_61 = arith.constant -1.000000e+30 : f32
    %88 = vector.shape_cast %6 : vector<1x8xi1> to vector<1x8xi1>
    %89 = vector.broadcast %88 : vector<1x8xi1> to vector<8x8xi1>
    %90 = vector.broadcast %cst_61 : f32 to vector<8x8xf32>
    %91 = arith.select %89, %90, %60 : vector<8x8xi1>, vector<8x8xf32>
    %cst_62 = arith.constant 0.000000e+00 : f32
    %92 = vector.shape_cast %6 : vector<1x8xi1> to vector<1x8xi1>
    %93 = vector.broadcast %92 : vector<1x8xi1> to vector<8x8xi1>
    %94 = vector.broadcast %cst_62 : f32 to vector<8x8xf32>
    %95 = arith.select %93, %94, %87 : vector<8x8xi1>, vector<8x8xf32>
    %cst_63 = arith.constant 9.99999997E-7 : f32
    %96 = vector.broadcast %cst_63 : f32 to vector<8x8xf32>
    %97 = arith.maximumf %95, %96 : vector<8x8xf32>
    %98 = math.log %97 : vector<8x8xf32>
    %99 = arith.addf %98, %91 : vector<8x8xf32>
    %cst_64 = arith.constant dense<0xFF800000> : vector<8xf32>
    %100 = vector.multi_reduction <maximumf>, %99, %cst_64 [1] : vector<8x8xf32> to vector<8xf32>
    %101 = vector.shape_cast %100 : vector<8xf32> to vector<8x1xf32>
    %102 = vector.broadcast %101 : vector<8x1xf32> to vector<8x8xf32>
    %103 = arith.subf %99, %102 : vector<8x8xf32>
    %104 = math.exp %103 : vector<8x8xf32>
    %cst_65 = arith.constant dense<0.000000e+00> : vector<8xf32>
    %105 = vector.multi_reduction <add>, %104, %cst_65 [1] : vector<8x8xf32> to vector<8xf32>
    %106 = vector.shape_cast %105 : vector<8xf32> to vector<8x1xf32>
    %107 = tpu.reciprocal %106 {approx = true} : vector<8x1xf32> -> vector<8x1xf32>
    %108 = vector.broadcast %107 : vector<8x1xf32> to vector<8x8xf32>
    %109 = arith.mulf %104, %108 : vector<8x8xf32>
    %cst_66 = arith.constant dense<0.000000e+00> : vector<8x8xf32>
    %110 = tpu.matmul %109, %59, %cst_66 {dimension_numbers = #tpu.dot_dimension_numbers<[1], [0], [0], [1], [0, 0, 1, 1], [], []>} : vector<8x8xf32>, vector<8x8xf32>, vector<8x8xf32> -> vector<8x8xf32>
    %111 = vector.extract_strided_slice %49 {offsets = [0, 8], sizes = [8, 8], strides = [1, 1]} : vector<8x32xf32> to vector<8x8xf32>
    %112 = vector.extract_strided_slice %50 {offsets = [0, 8], sizes = [8, 8], strides = [1, 1]} : vector<8x32xf32> to vector<8x8xf32>
    %113 = vector.extract_strided_slice %51 {offsets = [0, 8], sizes = [8, 8], strides = [1, 1]} : vector<8x32xf32> to vector<8x8xf32>
    %cst_67 = arith.constant dense<0.000000e+00> : vector<8x8xf32>
    %114 = tpu.matmul %111, %112, %cst_67 {dimension_numbers = #tpu.dot_dimension_numbers<[1], [1], [0], [0], [0, 0, 1, 0], [], []>} : vector<8x8xf32>, vector<8x8xf32>, vector<8x8xf32> -> vector<8x8xf32>
    %115 = vector.extract_strided_slice %56 {offsets = [0, 6], sizes = [8, 1], strides = [1, 1]} : vector<8x24xf32> to vector<8x1xf32>
    %116 = vector.extract_strided_slice %56 {offsets = [0, 7], sizes = [8, 1], strides = [1, 1]} : vector<8x24xf32> to vector<8x1xf32>
    %117 = vector.broadcast %116 : vector<8x1xf32> to vector<8x8xf32>
    %118 = arith.mulf %117, %8 : vector<8x8xf32>
    %119 = vector.broadcast %115 : vector<8x1xf32> to vector<8x8xf32>
    %120 = arith.addf %119, %118 : vector<8x8xf32>
    %121 = vector.extract_strided_slice %56 {offsets = [0, 8], sizes = [8, 1], strides = [1, 1]} : vector<8x24xf32> to vector<8x1xf32>
    %122 = vector.broadcast %121 : vector<8x1xf32> to vector<8x8xf32>
    %123 = arith.mulf %122, %10 : vector<8x8xf32>
    %124 = arith.addf %120, %123 : vector<8x8xf32>
    %125 = vector.extract_strided_slice %56 {offsets = [0, 9], sizes = [8, 1], strides = [1, 1]} : vector<8x24xf32> to vector<8x1xf32>
    %126 = vector.broadcast %125 : vector<8x1xf32> to vector<8x8xf32>
    %127 = arith.mulf %126, %12 : vector<8x8xf32>
    %128 = arith.addf %124, %127 : vector<8x8xf32>
    %129 = vector.extract_strided_slice %56 {offsets = [0, 10], sizes = [8, 1], strides = [1, 1]} : vector<8x24xf32> to vector<8x1xf32>
    %130 = vector.broadcast %129 : vector<8x1xf32> to vector<8x8xf32>
    %131 = arith.mulf %130, %14 : vector<8x8xf32>
    %132 = arith.addf %128, %131 : vector<8x8xf32>
    %133 = vector.extract_strided_slice %56 {offsets = [0, 11], sizes = [8, 1], strides = [1, 1]} : vector<8x24xf32> to vector<8x1xf32>
    %134 = vector.broadcast %133 : vector<8x1xf32> to vector<8x8xf32>
    %135 = arith.mulf %134, %16 : vector<8x8xf32>
    %136 = arith.addf %132, %135 : vector<8x8xf32>
    %137 = arith.negf %136 : vector<8x8xf32>
    %138 = math.exp %137 : vector<8x8xf32>
    %cst_68 = arith.constant 1.000000e+00 : f32
    %139 = vector.broadcast %cst_68 : f32 to vector<8x8xf32>
    %140 = arith.addf %139, %138 : vector<8x8xf32>
    %141 = arith.divf %139, %140 : vector<8x8xf32>
    %cst_69 = arith.constant -1.000000e+30 : f32
    %142 = vector.shape_cast %6 : vector<1x8xi1> to vector<1x8xi1>
    %143 = vector.broadcast %142 : vector<1x8xi1> to vector<8x8xi1>
    %144 = vector.broadcast %cst_69 : f32 to vector<8x8xf32>
    %145 = arith.select %143, %144, %114 : vector<8x8xi1>, vector<8x8xf32>
    %cst_70 = arith.constant 0.000000e+00 : f32
    %146 = vector.shape_cast %6 : vector<1x8xi1> to vector<1x8xi1>
    %147 = vector.broadcast %146 : vector<1x8xi1> to vector<8x8xi1>
    %148 = vector.broadcast %cst_70 : f32 to vector<8x8xf32>
    %149 = arith.select %147, %148, %141 : vector<8x8xi1>, vector<8x8xf32>
    %cst_71 = arith.constant 9.99999997E-7 : f32
    %150 = vector.broadcast %cst_71 : f32 to vector<8x8xf32>
    %151 = arith.maximumf %149, %150 : vector<8x8xf32>
    %152 = math.log %151 : vector<8x8xf32>
    %153 = arith.addf %152, %145 : vector<8x8xf32>
    %cst_72 = arith.constant dense<0xFF800000> : vector<8xf32>
    %154 = vector.multi_reduction <maximumf>, %153, %cst_72 [1] : vector<8x8xf32> to vector<8xf32>
    %155 = vector.shape_cast %154 : vector<8xf32> to vector<8x1xf32>
    %156 = vector.broadcast %155 : vector<8x1xf32> to vector<8x8xf32>
    %157 = arith.subf %153, %156 : vector<8x8xf32>
    %158 = math.exp %157 : vector<8x8xf32>
    %cst_73 = arith.constant dense<0.000000e+00> : vector<8xf32>
    %159 = vector.multi_reduction <add>, %158, %cst_73 [1] : vector<8x8xf32> to vector<8xf32>
    %160 = vector.shape_cast %159 : vector<8xf32> to vector<8x1xf32>
    %161 = tpu.reciprocal %160 {approx = true} : vector<8x1xf32> -> vector<8x1xf32>
    %162 = vector.broadcast %161 : vector<8x1xf32> to vector<8x8xf32>
    %163 = arith.mulf %158, %162 : vector<8x8xf32>
    %cst_74 = arith.constant dense<0.000000e+00> : vector<8x8xf32>
    %164 = tpu.matmul %163, %113, %cst_74 {dimension_numbers = #tpu.dot_dimension_numbers<[1], [0], [0], [1], [0, 0, 1, 1], [], []>} : vector<8x8xf32>, vector<8x8xf32>, vector<8x8xf32> -> vector<8x8xf32>
    %165 = vector.extract_strided_slice %49 {offsets = [0, 16], sizes = [8, 8], strides = [1, 1]} : vector<8x32xf32> to vector<8x8xf32>
    %166 = vector.extract_strided_slice %50 {offsets = [0, 16], sizes = [8, 8], strides = [1, 1]} : vector<8x32xf32> to vector<8x8xf32>
    %167 = vector.extract_strided_slice %51 {offsets = [0, 16], sizes = [8, 8], strides = [1, 1]} : vector<8x32xf32> to vector<8x8xf32>
    %cst_75 = arith.constant dense<0.000000e+00> : vector<8x8xf32>
    %168 = tpu.matmul %165, %166, %cst_75 {dimension_numbers = #tpu.dot_dimension_numbers<[1], [1], [0], [0], [0, 0, 1, 0], [], []>} : vector<8x8xf32>, vector<8x8xf32>, vector<8x8xf32> -> vector<8x8xf32>
    %169 = vector.extract_strided_slice %56 {offsets = [0, 12], sizes = [8, 1], strides = [1, 1]} : vector<8x24xf32> to vector<8x1xf32>
    %170 = vector.extract_strided_slice %56 {offsets = [0, 13], sizes = [8, 1], strides = [1, 1]} : vector<8x24xf32> to vector<8x1xf32>
    %171 = vector.broadcast %170 : vector<8x1xf32> to vector<8x8xf32>
    %172 = arith.mulf %171, %8 : vector<8x8xf32>
    %173 = vector.broadcast %169 : vector<8x1xf32> to vector<8x8xf32>
    %174 = arith.addf %173, %172 : vector<8x8xf32>
    %175 = vector.extract_strided_slice %56 {offsets = [0, 14], sizes = [8, 1], strides = [1, 1]} : vector<8x24xf32> to vector<8x1xf32>
    %176 = vector.broadcast %175 : vector<8x1xf32> to vector<8x8xf32>
    %177 = arith.mulf %176, %10 : vector<8x8xf32>
    %178 = arith.addf %174, %177 : vector<8x8xf32>
    %179 = vector.extract_strided_slice %56 {offsets = [0, 15], sizes = [8, 1], strides = [1, 1]} : vector<8x24xf32> to vector<8x1xf32>
    %180 = vector.broadcast %179 : vector<8x1xf32> to vector<8x8xf32>
    %181 = arith.mulf %180, %12 : vector<8x8xf32>
    %182 = arith.addf %178, %181 : vector<8x8xf32>
    %183 = vector.extract_strided_slice %56 {offsets = [0, 16], sizes = [8, 1], strides = [1, 1]} : vector<8x24xf32> to vector<8x1xf32>
    %184 = vector.broadcast %183 : vector<8x1xf32> to vector<8x8xf32>
    %185 = arith.mulf %184, %14 : vector<8x8xf32>
    %186 = arith.addf %182, %185 : vector<8x8xf32>
    %187 = vector.extract_strided_slice %56 {offsets = [0, 17], sizes = [8, 1], strides = [1, 1]} : vector<8x24xf32> to vector<8x1xf32>
    %188 = vector.broadcast %187 : vector<8x1xf32> to vector<8x8xf32>
    %189 = arith.mulf %188, %16 : vector<8x8xf32>
    %190 = arith.addf %186, %189 : vector<8x8xf32>
    %191 = arith.negf %190 : vector<8x8xf32>
    %192 = math.exp %191 : vector<8x8xf32>
    %cst_76 = arith.constant 1.000000e+00 : f32
    %193 = vector.broadcast %cst_76 : f32 to vector<8x8xf32>
    %194 = arith.addf %193, %192 : vector<8x8xf32>
    %195 = arith.divf %193, %194 : vector<8x8xf32>
    %cst_77 = arith.constant -1.000000e+30 : f32
    %196 = vector.shape_cast %6 : vector<1x8xi1> to vector<1x8xi1>
    %197 = vector.broadcast %196 : vector<1x8xi1> to vector<8x8xi1>
    %198 = vector.broadcast %cst_77 : f32 to vector<8x8xf32>
    %199 = arith.select %197, %198, %168 : vector<8x8xi1>, vector<8x8xf32>
    %cst_78 = arith.constant 0.000000e+00 : f32
    %200 = vector.shape_cast %6 : vector<1x8xi1> to vector<1x8xi1>
    %201 = vector.broadcast %200 : vector<1x8xi1> to vector<8x8xi1>
    %202 = vector.broadcast %cst_78 : f32 to vector<8x8xf32>
    %203 = arith.select %201, %202, %195 : vector<8x8xi1>, vector<8x8xf32>
    %cst_79 = arith.constant 9.99999997E-7 : f32
    %204 = vector.broadcast %cst_79 : f32 to vector<8x8xf32>
    %205 = arith.maximumf %203, %204 : vector<8x8xf32>
    %206 = math.log %205 : vector<8x8xf32>
    %207 = arith.addf %206, %199 : vector<8x8xf32>
    %cst_80 = arith.constant dense<0xFF800000> : vector<8xf32>
    %208 = vector.multi_reduction <maximumf>, %207, %cst_80 [1] : vector<8x8xf32> to vector<8xf32>
    %209 = vector.shape_cast %208 : vector<8xf32> to vector<8x1xf32>
    %210 = vector.broadcast %209 : vector<8x1xf32> to vector<8x8xf32>
    %211 = arith.subf %207, %210 : vector<8x8xf32>
    %212 = math.exp %211 : vector<8x8xf32>
    %cst_81 = arith.constant dense<0.000000e+00> : vector<8xf32>
    %213 = vector.multi_reduction <add>, %212, %cst_81 [1] : vector<8x8xf32> to vector<8xf32>
    %214 = vector.shape_cast %213 : vector<8xf32> to vector<8x1xf32>
    %215 = tpu.reciprocal %214 {approx = true} : vector<8x1xf32> -> vector<8x1xf32>
    %216 = vector.broadcast %215 : vector<8x1xf32> to vector<8x8xf32>
    %217 = arith.mulf %212, %216 : vector<8x8xf32>
    %cst_82 = arith.constant dense<0.000000e+00> : vector<8x8xf32>
    %218 = tpu.matmul %217, %167, %cst_82 {dimension_numbers = #tpu.dot_dimension_numbers<[1], [0], [0], [1], [0, 0, 1, 1], [], []>} : vector<8x8xf32>, vector<8x8xf32>, vector<8x8xf32> -> vector<8x8xf32>
    %219 = vector.extract_strided_slice %49 {offsets = [0, 24], sizes = [8, 8], strides = [1, 1]} : vector<8x32xf32> to vector<8x8xf32>
    %220 = vector.extract_strided_slice %50 {offsets = [0, 24], sizes = [8, 8], strides = [1, 1]} : vector<8x32xf32> to vector<8x8xf32>
    %221 = vector.extract_strided_slice %51 {offsets = [0, 24], sizes = [8, 8], strides = [1, 1]} : vector<8x32xf32> to vector<8x8xf32>
    %cst_83 = arith.constant dense<0.000000e+00> : vector<8x8xf32>
    %222 = tpu.matmul %219, %220, %cst_83 {dimension_numbers = #tpu.dot_dimension_numbers<[1], [1], [0], [0], [0, 0, 1, 0], [], []>} : vector<8x8xf32>, vector<8x8xf32>, vector<8x8xf32> -> vector<8x8xf32>
    %223 = vector.extract_strided_slice %56 {offsets = [0, 18], sizes = [8, 1], strides = [1, 1]} : vector<8x24xf32> to vector<8x1xf32>
    %224 = vector.extract_strided_slice %56 {offsets = [0, 19], sizes = [8, 1], strides = [1, 1]} : vector<8x24xf32> to vector<8x1xf32>
    %225 = vector.broadcast %224 : vector<8x1xf32> to vector<8x8xf32>
    %226 = arith.mulf %225, %8 : vector<8x8xf32>
    %227 = vector.broadcast %223 : vector<8x1xf32> to vector<8x8xf32>
    %228 = arith.addf %227, %226 : vector<8x8xf32>
    %229 = vector.extract_strided_slice %56 {offsets = [0, 20], sizes = [8, 1], strides = [1, 1]} : vector<8x24xf32> to vector<8x1xf32>
    %230 = vector.broadcast %229 : vector<8x1xf32> to vector<8x8xf32>
    %231 = arith.mulf %230, %10 : vector<8x8xf32>
    %232 = arith.addf %228, %231 : vector<8x8xf32>
    %233 = vector.extract_strided_slice %56 {offsets = [0, 21], sizes = [8, 1], strides = [1, 1]} : vector<8x24xf32> to vector<8x1xf32>
    %234 = vector.broadcast %233 : vector<8x1xf32> to vector<8x8xf32>
    %235 = arith.mulf %234, %12 : vector<8x8xf32>
    %236 = arith.addf %232, %235 : vector<8x8xf32>
    %237 = vector.extract_strided_slice %56 {offsets = [0, 22], sizes = [8, 1], strides = [1, 1]} : vector<8x24xf32> to vector<8x1xf32>
    %238 = vector.broadcast %237 : vector<8x1xf32> to vector<8x8xf32>
    %239 = arith.mulf %238, %14 : vector<8x8xf32>
    %240 = arith.addf %236, %239 : vector<8x8xf32>
    %241 = vector.extract_strided_slice %56 {offsets = [0, 23], sizes = [8, 1], strides = [1, 1]} : vector<8x24xf32> to vector<8x1xf32>
    %242 = vector.broadcast %241 : vector<8x1xf32> to vector<8x8xf32>
    %243 = arith.mulf %242, %16 : vector<8x8xf32>
    %244 = arith.addf %240, %243 : vector<8x8xf32>
    %245 = arith.negf %244 : vector<8x8xf32>
    %246 = math.exp %245 : vector<8x8xf32>
    %cst_84 = arith.constant 1.000000e+00 : f32
    %247 = vector.broadcast %cst_84 : f32 to vector<8x8xf32>
    %248 = arith.addf %247, %246 : vector<8x8xf32>
    %249 = arith.divf %247, %248 : vector<8x8xf32>
    %cst_85 = arith.constant -1.000000e+30 : f32
    %250 = vector.shape_cast %6 : vector<1x8xi1> to vector<1x8xi1>
    %251 = vector.broadcast %250 : vector<1x8xi1> to vector<8x8xi1>
    %252 = vector.broadcast %cst_85 : f32 to vector<8x8xf32>
    %253 = arith.select %251, %252, %222 : vector<8x8xi1>, vector<8x8xf32>
    %cst_86 = arith.constant 0.000000e+00 : f32
    %254 = vector.shape_cast %6 : vector<1x8xi1> to vector<1x8xi1>
    %255 = vector.broadcast %254 : vector<1x8xi1> to vector<8x8xi1>
    %256 = vector.broadcast %cst_86 : f32 to vector<8x8xf32>
    %257 = arith.select %255, %256, %249 : vector<8x8xi1>, vector<8x8xf32>
    %cst_87 = arith.constant 9.99999997E-7 : f32
    %258 = vector.broadcast %cst_87 : f32 to vector<8x8xf32>
    %259 = arith.maximumf %257, %258 : vector<8x8xf32>
    %260 = math.log %259 : vector<8x8xf32>
    %261 = arith.addf %260, %253 : vector<8x8xf32>
    %cst_88 = arith.constant dense<0xFF800000> : vector<8xf32>
    %262 = vector.multi_reduction <maximumf>, %261, %cst_88 [1] : vector<8x8xf32> to vector<8xf32>
    %263 = vector.shape_cast %262 : vector<8xf32> to vector<8x1xf32>
    %264 = vector.broadcast %263 : vector<8x1xf32> to vector<8x8xf32>
    %265 = arith.subf %261, %264 : vector<8x8xf32>
    %266 = math.exp %265 : vector<8x8xf32>
    %cst_89 = arith.constant dense<0.000000e+00> : vector<8xf32>
    %267 = vector.multi_reduction <add>, %266, %cst_89 [1] : vector<8x8xf32> to vector<8xf32>
    %268 = vector.shape_cast %267 : vector<8xf32> to vector<8x1xf32>
    %269 = tpu.reciprocal %268 {approx = true} : vector<8x1xf32> -> vector<8x1xf32>
    %270 = vector.broadcast %269 : vector<8x1xf32> to vector<8x8xf32>
    %271 = arith.mulf %266, %270 : vector<8x8xf32>
    %cst_90 = arith.constant dense<0.000000e+00> : vector<8x8xf32>
    %272 = tpu.matmul %271, %221, %cst_90 {dimension_numbers = #tpu.dot_dimension_numbers<[1], [0], [0], [1], [0, 0, 1, 1], [], []>} : vector<8x8xf32>, vector<8x8xf32>, vector<8x8xf32> -> vector<8x8xf32>
    %273 = tpu.concatenate %110, %164, %218, %272 in 1 : vector<8x8xf32>, vector<8x8xf32>, vector<8x8xf32>, vector<8x8xf32> -> vector<8x32xf32>
    %cst_91 = arith.constant dense<0.000000e+00> : vector<8x32xf32>
    %274 = tpu.matmul %273, %25, %cst_91 {dimension_numbers = #tpu.dot_dimension_numbers<[1], [0], [0], [1], [0, 0, 1, 1], [], []>} : vector<8x32xf32>, vector<32x32xf32>, vector<8x32xf32> -> vector<8x32xf32>
    %275 = vector.broadcast %31 : vector<1x32xf32> to vector<8x32xf32>
    %276 = arith.addf %274, %275 : vector<8x32xf32>
    %277 = arith.addf %19, %276 : vector<8x32xf32>
    %cst_92 = arith.constant dense<0.000000e+00> : vector<8xf32>
    %278 = vector.multi_reduction <add>, %277, %cst_92 [1] : vector<8x32xf32> to vector<8xf32>
    %279 = vector.shape_cast %278 : vector<8xf32> to vector<8x1xf32>
    %cst_93 = arith.constant 3.200000e+01 : f32
    %280 = vector.broadcast %cst_93 : f32 to vector<8x1xf32>
    %281 = arith.divf %279, %280 : vector<8x1xf32>
    %282 = vector.broadcast %281 : vector<8x1xf32> to vector<8x32xf32>
    %283 = arith.subf %277, %282 : vector<8x32xf32>
    %284 = arith.mulf %283, %283 : vector<8x32xf32>
    %cst_94 = arith.constant dense<0.000000e+00> : vector<8xf32>
    %285 = vector.multi_reduction <add>, %284, %cst_94 [1] : vector<8x32xf32> to vector<8xf32>
    %286 = vector.shape_cast %285 : vector<8xf32> to vector<8x1xf32>
    %cst_95 = arith.constant 3.200000e+01 : f32
    %287 = vector.broadcast %cst_95 : f32 to vector<8x1xf32>
    %288 = arith.divf %286, %287 : vector<8x1xf32>
    %cst_96 = arith.constant 9.99999974E-6 : f32
    %289 = vector.broadcast %cst_96 : f32 to vector<8x1xf32>
    %290 = arith.addf %288, %289 : vector<8x1xf32>
    %291 = math.rsqrt %290 : vector<8x1xf32>
    %292 = vector.broadcast %291 : vector<8x1xf32> to vector<8x32xf32>
    %293 = arith.mulf %283, %292 : vector<8x32xf32>
    %294 = vector.broadcast %33 : vector<1x32xf32> to vector<8x32xf32>
    %295 = arith.mulf %293, %294 : vector<8x32xf32>
    %296 = vector.broadcast %35 : vector<1x32xf32> to vector<8x32xf32>
    %297 = arith.addf %295, %296 : vector<8x32xf32>
    %cst_97 = arith.constant dense<0.000000e+00> : vector<8x64xf32>
    %298 = tpu.matmul %297, %27, %cst_97 {dimension_numbers = #tpu.dot_dimension_numbers<[1], [0], [0], [1], [0, 0, 1, 1], [], []>} : vector<8x32xf32>, vector<32x64xf32>, vector<8x64xf32> -> vector<8x64xf32>
    %c0_98 = arith.constant 0 : index
    %c0_99 = arith.constant 0 : index
    %c0_100 = arith.constant 0 : index
    %299 = vector.load %arg13[%c0_98, %c0_99, %c0_100] : memref<1x1x64xf32, #tpu.memory_space<vmem>>, vector<1x1x64xf32>
    %300 = vector.shape_cast %299 : vector<1x1x64xf32> to vector<1x64xf32>
    %301 = vector.broadcast %300 : vector<1x64xf32> to vector<8x64xf32>
    %302 = arith.addf %298, %301 : vector<8x64xf32>
    %cst_101 = arith.constant 5.000000e-01 : f32
    %303 = vector.broadcast %cst_101 : f32 to vector<8x64xf32>
    %304 = arith.mulf %303, %302 : vector<8x64xf32>
    %cst_102 = arith.constant 4.471500e-02 : f32
    %305 = vector.broadcast %cst_102 : f32 to vector<8x64xf32>
    %306 = arith.mulf %305, %302 : vector<8x64xf32>
    %307 = arith.mulf %306, %302 : vector<8x64xf32>
    %308 = arith.mulf %307, %302 : vector<8x64xf32>
    %309 = arith.addf %302, %308 : vector<8x64xf32>
    %cst_103 = arith.constant 0.797884583 : f32
    %310 = vector.broadcast %cst_103 : f32 to vector<8x64xf32>
    %311 = arith.mulf %310, %309 : vector<8x64xf32>
    %312 = math.tanh %311 : vector<8x64xf32>
    %cst_104 = arith.constant 1.000000e+00 : f32
    %313 = vector.broadcast %cst_104 : f32 to vector<8x64xf32>
    %314 = arith.addf %313, %312 : vector<8x64xf32>
    %315 = arith.mulf %304, %314 : vector<8x64xf32>
    %cst_105 = arith.constant dense<0.000000e+00> : vector<8x32xf32>
    %316 = tpu.matmul %315, %29, %cst_105 {dimension_numbers = #tpu.dot_dimension_numbers<[1], [0], [0], [1], [0, 0, 1, 1], [], []>} : vector<8x64xf32>, vector<64x32xf32>, vector<8x32xf32> -> vector<8x32xf32>
    %317 = vector.broadcast %37 : vector<1x32xf32> to vector<8x32xf32>
    %318 = arith.addf %316, %317 : vector<8x32xf32>
    %319 = arith.addf %297, %318 : vector<8x32xf32>
    %cst_106 = arith.constant dense<0.000000e+00> : vector<8xf32>
    %320 = vector.multi_reduction <add>, %319, %cst_106 [1] : vector<8x32xf32> to vector<8xf32>
    %321 = vector.shape_cast %320 : vector<8xf32> to vector<8x1xf32>
    %cst_107 = arith.constant 3.200000e+01 : f32
    %322 = vector.broadcast %cst_107 : f32 to vector<8x1xf32>
    %323 = arith.divf %321, %322 : vector<8x1xf32>
    %324 = vector.broadcast %323 : vector<8x1xf32> to vector<8x32xf32>
    %325 = arith.subf %319, %324 : vector<8x32xf32>
    %326 = arith.mulf %325, %325 : vector<8x32xf32>
    %cst_108 = arith.constant dense<0.000000e+00> : vector<8xf32>
    %327 = vector.multi_reduction <add>, %326, %cst_108 [1] : vector<8x32xf32> to vector<8xf32>
    %328 = vector.shape_cast %327 : vector<8xf32> to vector<8x1xf32>
    %cst_109 = arith.constant 3.200000e+01 : f32
    %329 = vector.broadcast %cst_109 : f32 to vector<8x1xf32>
    %330 = arith.divf %328, %329 : vector<8x1xf32>
    %cst_110 = arith.constant 9.99999974E-6 : f32
    %331 = vector.broadcast %cst_110 : f32 to vector<8x1xf32>
    %332 = arith.addf %330, %331 : vector<8x1xf32>
    %333 = math.rsqrt %332 : vector<8x1xf32>
    %334 = vector.broadcast %333 : vector<8x1xf32> to vector<8x32xf32>
    %335 = arith.mulf %325, %334 : vector<8x32xf32>
    %336 = vector.broadcast %39 : vector<1x32xf32> to vector<8x32xf32>
    %337 = arith.mulf %335, %336 : vector<8x32xf32>
    %338 = vector.broadcast %41 : vector<1x32xf32> to vector<8x32xf32>
    %339 = arith.addf %337, %338 : vector<8x32xf32>
    %c0_111 = arith.constant 0 : index
    %c0_112 = arith.constant 0 : index
    %340 = vector.load %arg17[%c0_111, %c0_112] : memref<8x32xf32, #tpu.memory_space<vmem>>, vector<8x32xf32>
    tpu.vector_store %arg17[%c0_111, %c0_112], %339 {strides = array<i32>} : memref<8x32xf32, #tpu.memory_space<vmem>>, vector<8x32xf32>,
    %c1_i32 = arith.constant 1 : i32
    %341 = arith.cmpi eq, %arg1, %c1_i32 : i32
    %342 = arith.extui %341 : i1 to i32
    %c0_i32_113 = arith.constant 0 : i32
    %343 = arith.cmpi ne, %342, %c0_i32_113 : i32
    scf.if %343 {
      %c0_114 = arith.constant 0 : index
      %c0_115 = arith.constant 0 : index
      %344 = vector.load %arg16[%c0_114, %c0_115] : memref<8x32xf32, #tpu.memory_space<vmem>>, vector<8x32xf32>
      tpu.vector_store %arg16[%c0_114, %c0_115], %339 {strides = array<i32>} : memref<8x32xf32, #tpu.memory_space<vmem>>, vector<8x32xf32>,
    } else {
    }
    return
  }
  func.func @transform_0(%arg0: i32, %arg1: i32) -> (i32, i32) {
    %c0_i32 = arith.constant 0 : i32
    %c0_i32_0 = arith.constant 0 : i32
    return %arg0, %c0_i32 : i32, i32
  }
  func.func @transform_1(%arg0: i32, %arg1: i32) -> (i32, i32) {
    %c0_i32 = arith.constant 0 : i32
    %c0_i32_0 = arith.constant 0 : i32
    return %arg0, %c0_i32 : i32, i32
  }
  func.func @transform_2(%arg0: i32, %arg1: i32) -> (i32, i32, i32) {
    %c0_i32 = arith.constant 0 : i32
    %c0_i32_0 = arith.constant 0 : i32
    %c0_i32_1 = arith.constant 0 : i32
    return %arg0, %c0_i32, %c0_i32_0 : i32, i32, i32
  }
  func.func @transform_3(%arg0: i32, %arg1: i32) -> (i32, i32) {
    %c0_i32 = arith.constant 0 : i32
    %c0_i32_0 = arith.constant 0 : i32
    %c0_i32_1 = arith.constant 0 : i32
    return %c0_i32, %c0_i32_0 : i32, i32
  }
  func.func @transform_4(%arg0: i32, %arg1: i32) -> (i32, i32) {
    %c0_i32 = arith.constant 0 : i32
    %c0_i32_0 = arith.constant 0 : i32
    %c0_i32_1 = arith.constant 0 : i32
    return %c0_i32, %c0_i32_0 : i32, i32
  }
  func.func @transform_5(%arg0: i32, %arg1: i32) -> (i32, i32, i32) {
    %c0_i32 = arith.constant 0 : i32
    %c0_i32_0 = arith.constant 0 : i32
    %c0_i32_1 = arith.constant 0 : i32
    return %arg1, %c0_i32, %c0_i32_0 : i32, i32, i32
  }
  func.func @transform_6(%arg0: i32, %arg1: i32) -> (i32, i32, i32) {
    %c0_i32 = arith.constant 0 : i32
    %c0_i32_0 = arith.constant 0 : i32
    %c0_i32_1 = arith.constant 0 : i32
    return %arg1, %c0_i32, %c0_i32_0 : i32, i32, i32
  }
  func.func @transform_7(%arg0: i32, %arg1: i32) -> (i32, i32, i32) {
    %c0_i32 = arith.constant 0 : i32
    %c0_i32_0 = arith.constant 0 : i32
    %c0_i32_1 = arith.constant 0 : i32
    return %arg1, %c0_i32, %c0_i32_0 : i32, i32, i32
  }
  func.func @transform_8(%arg0: i32, %arg1: i32) -> (i32, i32, i32) {
    %c0_i32 = arith.constant 0 : i32
    %c0_i32_0 = arith.constant 0 : i32
    %c0_i32_1 = arith.constant 0 : i32
    return %arg1, %c0_i32, %c0_i32_0 : i32, i32, i32
  }
  func.func @transform_9(%arg0: i32, %arg1: i32) -> (i32, i32, i32) {
    %c0_i32 = arith.constant 0 : i32
    %c0_i32_0 = arith.constant 0 : i32
    %c0_i32_1 = arith.constant 0 : i32
    return %arg1, %c0_i32, %c0_i32_0 : i32, i32, i32
  }
  func.func @transform_10(%arg0: i32, %arg1: i32) -> (i32, i32, i32) {
    %c0_i32 = arith.constant 0 : i32
    %c0_i32_0 = arith.constant 0 : i32
    %c0_i32_1 = arith.constant 0 : i32
    return %arg1, %c0_i32, %c0_i32_0 : i32, i32, i32
  }
  func.func @transform_11(%arg0: i32, %arg1: i32) -> (i32, i32, i32) {
    %c0_i32 = arith.constant 0 : i32
    %c0_i32_0 = arith.constant 0 : i32
    %c0_i32_1 = arith.constant 0 : i32
    return %arg1, %c0_i32, %c0_i32_0 : i32, i32, i32
  }
  func.func @transform_12(%arg0: i32, %arg1: i32) -> (i32, i32, i32) {
    %c0_i32 = arith.constant 0 : i32
    %c0_i32_0 = arith.constant 0 : i32
    %c0_i32_1 = arith.constant 0 : i32
    return %arg1, %c0_i32, %c0_i32_0 : i32, i32, i32
  }
  func.func @transform_13(%arg0: i32, %arg1: i32) -> (i32, i32, i32) {
    %c0_i32 = arith.constant 0 : i32
    %c0_i32_0 = arith.constant 0 : i32
    %c0_i32_1 = arith.constant 0 : i32
    return %arg1, %c0_i32, %c0_i32_0 : i32, i32, i32
  }
  func.func @transform_14(%arg0: i32, %arg1: i32) -> (i32, i32) {
    %c0_i32 = arith.constant 0 : i32
    %c0_i32_0 = arith.constant 0 : i32
    return %arg0, %c0_i32 : i32, i32
  }
}

</mosaic_0001>

<llo_original>
// kernel: tpu_custom_call.1
$region0: #{tpu_custom_call.1}
  #allocation0 [shape = 'u32[]', space=smem, size = 0x4, offset = 0x4, fixed_abs, tag = 'smem constant byte address 0x4 - core index']
  #allocation1 [shape = 'u32[144,128]{1,0:T(1,128)}', space=vmem, size = 0x12000, scoped, tag = 'internal scratch']
  #allocation2 [shape = 'f32[8,32]{1,0:T(8,128)}', space=vmem, size = 0x1000, scoped, tag = 'scratch operand']
  #allocation3 [shape = 'f32[8,32]{1,0:T(8,128)}', space=vmem, size = 0x1000, scoped, tag = 'scratch operand']
  #allocation4 [shape = 'f32[5,8,8]{2,1,0:T(8,128)}', space=vmem, size = 0x5000, scoped, tag = 'scratch operand']
  %s0 = inlined_call_operand.vmem [shape: f32[16,32], index: 0, kind: input, shape index: {}]
  %s1 = inlined_call_operand.vmem [shape: f32[16,6], index: 1, kind: input, shape index: {}]
  %s2 = inlined_call_operand.vmem [shape: f32[2,1,8], index: 2, kind: input, shape index: {}]
  %s3 = inlined_call_operand.vmem [shape: f32[6,32], index: 3, kind: input, shape index: {}]
  %s4 = inlined_call_operand.vmem [shape: f32[3,32], index: 4, kind: input, shape index: {}]
  %s5 = inlined_call_operand.vmem [shape: f32[2,32,96], index: 5, kind: input, shape index: {}]
  %s6 = inlined_call_operand.vmem [shape: f32[2,1,96], index: 6, kind: input, shape index: {}]
  %s7 = inlined_call_operand.vmem [shape: f32[2,32,24], index: 7, kind: input, shape index: {}]
  %s8 = inlined_call_operand.vmem [shape: f32[2,1,24], index: 8, kind: input, shape index: {}]
  %s9 = inlined_call_operand.vmem [shape: f32[2,32,32], index: 9, kind: input, shape index: {}]
  %s10 = inlined_call_operand.vmem [shape: f32[2,32,64], index: 10, kind: input, shape index: {}]
  %s11 = inlined_call_operand.vmem [shape: f32[2,1,64], index: 11, kind: input, shape index: {}]
  %s12 = inlined_call_operand.vmem [shape: f32[2,64,32], index: 12, kind: input, shape index: {}]
  %s13 = inlined_call_operand.vmem [shape: f32[2,6,32], index: 13, kind: input, shape index: {}]
  %s14 = inlined_call_operand.hbm [shape: f32[16,32], index: 14, kind: output, shape index: {}]
  %s15 = sld [smem:[#allocation0]]
  $region97: #{tpu_custom_call.1} parent=0
    _
  %s17 = ssub.s32 1, %s15
  %s18 = scalar_select 0, %s17, %s15
  $region1: #{tpu_custom_call.1} parent=0
    #allocation5 [shape = 'u8[8192]{0}', space=vmem, size = 0x2000, scoped, tag = 'output window, operand 0']
    #allocation6 [shape = 's32[2]{0}', space=sflag, size = 0x8, scoped, tag = 'scoped memory for tpu_custom_call.1']
    %19 = vsyncpa [#allocation6], 0
    %s20 = scalar_lea.sflag [#allocation6], 1
    %21 = vsyncpa %s20, 0
    loop: start=0, step=1, limit=6
    $region2: #{tpu_custom_call.1} parent=1 // loop_pre_header
      _
    $region3: #{tpu_custom_call.1} parent=1 // loop_header
      %s23 = sphi 0, %s27
      %p24 = scmp.ge.s32.totalorder %s23, 6
      %s30 = sphi 0, %s42
      %s31 = sphi 0, %s38
      %s32 = sphi 0, %s30
      %s33 = sphi 0, %s31
      %s34 = sphi 0, %s32
      %s35 = sphi 0, %s33
      %s45 = sphi 0, %s47
      %s48 = sphi 0, %s45
      %s49 = sphi 0, %s48
      %s65 = sphi 0, %s49
      %s71 = sphi 0, %s73
      %s74 = sphi 0, %s71
      %s75 = sphi 0, %s74
      %s91 = sphi 0, %s75
      %s97 = sphi 0, %s99
      %s100 = sphi 0, %s97
      %s101 = sphi 0, %s100
      %s117 = sphi 0, %s101
      %s121 = sphi 0, %s121
      %s123 = sphi 0, %s121
      %s124 = sphi 0, %s123
      %s138 = sphi 0, %s124
      %s142 = sphi 0, %s142
      %s144 = sphi 0, %s142
      %s145 = sphi 0, %s144
      %s159 = sphi 0, %s145
      %s165 = sphi 0, %s167
      %s168 = sphi 0, %s165
      %s169 = sphi 0, %s168
      %s185 = sphi 0, %s169
      %s191 = sphi 0, %s193
      %s194 = sphi 0, %s191
      %s195 = sphi 0, %s194
      %s211 = sphi 0, %s195
      %s217 = sphi 0, %s219
      %s220 = sphi 0, %s217
      %s221 = sphi 0, %s220
      %s237 = sphi 0, %s221
      %s243 = sphi 0, %s245
      %s246 = sphi 0, %s243
      %s247 = sphi 0, %s246
      %s263 = sphi 0, %s247
      %s269 = sphi 0, %s271
      %s272 = sphi 0, %s269
      %s273 = sphi 0, %s272
      %s289 = sphi 0, %s273
      %s295 = sphi 0, %s297
      %s298 = sphi 0, %s295
      %s299 = sphi 0, %s298
      %s315 = sphi 0, %s299
      %s321 = sphi 0, %s323
      %s324 = sphi 0, %s321
      %s325 = sphi 0, %s324
      %s341 = sphi 0, %s325
      %s347 = sphi 0, %s349
      %s350 = sphi 0, %s347
      %s351 = sphi 0, %s350
      %s367 = sphi 0, %s351
      %s373 = sphi 0, %s375
      %s376 = sphi 0, %s373
      %s377 = sphi 0, %s376
      %s393 = sphi 0, %s377
      %s399 = sphi 0, %s401
      %s402 = sphi 0, %s399
      %s403 = sphi 0, %s402
      %s419 = sphi 0, %s403
    $region4: #{tpu_custom_call.1} parent=1 // loop_header_branch
      %26 = sbr.rel (%p24) target = $region8
    $region5: #{tpu_custom_call.1} parent=1 // loop_body
      %s28 = ssub.s32 %s23, 1
      %s29 = ssub.s32 %s23, 2
      %s36 = sadd.s32 1, %s31
      %p37 = scmp.ge.s32.totalorder %s36, 2
      %s38 = scalar_select %p37, 0, %s36
      %s39 = sadd.s32 1, %s30
      %s40 = scalar_select %p37, %s39, %s30
      %p41 = scmp.ge.s32.totalorder %s40, 2
      %s42 = scalar_select %p41, 0, %s40
      %s43 = ssub.s32 %s30, %s42
      %p44 = scmp.eq.s32.totalorder %s43, 0
      %s46 = sadd.s32 %s45, 1
      %s47 = scalar_select %p44, %s45, %s46
      %p50 = pneg %p44
      %p51 = scmp.eq.s32.totalorder %s23, 3
      %p52 = por %p50, %p51
      %p53 = scmp.ne.s32.totalorder %s45, %s48
      %p54 = scmp.eq.s32.totalorder %s23, 0
      %p55 = por %p53, %p54
      %p56 = scmp.ne.s32.totalorder %s45, %s48
      %p57 = scmp.eq.s32.totalorder %s28, 3
      %p58 = por %p56, %p57
      %p59 = scmp.ne.s32.totalorder %s48, %s49
      %p60 = scmp.eq.s32.totalorder %s28, 0
      %p61 = por %p59, %p60
      %p62 = scmp.ne.s32.totalorder %s48, %s49
      %p63 = scmp.eq.s32.totalorder %s29, 3
      %p64 = por %p62, %p63
      %p66 = scmp.ne.s32.totalorder %s49, %s65
      %p67 = scmp.eq.s32.totalorder %s29, 0
      %p68 = por %p66, %p67
      %s69 = ssub.s32 %s30, %s42
      %p70 = scmp.eq.s32.totalorder %s69, 0
      %s72 = sadd.s32 %s71, 1
      %s73 = scalar_select %p70, %s71, %s72
      %p76 = pneg %p70
      %p77 = scmp.eq.s32.totalorder %s23, 3
      %p78 = por %p76, %p77
      %p79 = scmp.ne.s32.totalorder %s71, %s74
      %p80 = scmp.eq.s32.totalorder %s23, 0
      %p81 = por %p79, %p80
      %p82 = scmp.ne.s32.totalorder %s71, %s74
      %p83 = scmp.eq.s32.totalorder %s28, 3
      %p84 = por %p82, %p83
      %p85 = scmp.ne.s32.totalorder %s74, %s75
      %p86 = scmp.eq.s32.totalorder %s28, 0
      %p87 = por %p85, %p86
      %p88 = scmp.ne.s32.totalorder %s74, %s75
      %p89 = scmp.eq.s32.totalorder %s29, 3
      %p90 = por %p88, %p89
      %p92 = scmp.ne.s32.totalorder %s75, %s91
      %p93 = scmp.eq.s32.totalorder %s29, 0
      %p94 = por %p92, %p93
      %s95 = ssub.s32 %s30, %s42
      %p96 = scmp.eq.s32.totalorder %s95, 0
      %s98 = sadd.s32 %s97, 1
      %s99 = scalar_select %p96, %s97, %s98
      %p102 = pneg %p96
      %p103 = scmp.eq.s32.totalorder %s23, 3
      %p104 = por %p102, %p103
      %p105 = scmp.ne.s32.totalorder %s97, %s100
      %p106 = scmp.eq.s32.totalorder %s23, 0
      %p107 = por %p105, %p106
      %p108 = scmp.ne.s32.totalorder %s97, %s100
      %p109 = scmp.eq.s32.totalorder %s28, 3
      %p110 = por %p108, %p109
      %p111 = scmp.ne.s32.totalorder %s100, %s101
      %p112 = scmp.eq.s32.totalorder %s28, 0
      %p113 = por %p111, %p112
      %p114 = scmp.ne.s32.totalorder %s100, %s101
      %p115 = scmp.eq.s32.totalorder %s29, 3
      %p116 = por %p114, %p115
      %p118 = scmp.ne.s32.totalorder %s101, %s117
      %p119 = scmp.eq.s32.totalorder %s29, 0
      %p120 = por %p118, %p119
      %s122 = sadd.s32 %s121, 1
      %p125 = scmp.eq.s32.totalorder %s23, 3
      %p126 = scmp.ne.s32.totalorder %s121, %s123
      %p127 = scmp.eq.s32.totalorder %s23, 0
      %p128 = por %p126, %p127
      %p129 = scmp.ne.s32.totalorder %s121, %s123
      %p130 = scmp.eq.s32.totalorder %s28, 3
      %p131 = por %p129, %p130
      %p132 = scmp.ne.s32.totalorder %s123, %s124
      %p133 = scmp.eq.s32.totalorder %s28, 0
      %p134 = por %p132, %p133
      %p135 = scmp.ne.s32.totalorder %s123, %s124
      %p136 = scmp.eq.s32.totalorder %s29, 3
      %p137 = por %p135, %p136
      %p139 = scmp.ne.s32.totalorder %s124, %s138
      %p140 = scmp.eq.s32.totalorder %s29, 0
      %p141 = por %p139, %p140
      %s143 = sadd.s32 %s142, 1
      %p146 = scmp.eq.s32.totalorder %s23, 3
      %p147 = scmp.ne.s32.totalorder %s142, %s144
      %p148 = scmp.eq.s32.totalorder %s23, 0
      %p149 = por %p147, %p148
      %p150 = scmp.ne.s32.totalorder %s142, %s144
      %p151 = scmp.eq.s32.totalorder %s28, 3
      %p152 = por %p150, %p151
      %p153 = scmp.ne.s32.totalorder %s144, %s145
      %p154 = scmp.eq.s32.totalorder %s28, 0
      %p155 = por %p153, %p154
      %p156 = scmp.ne.s32.totalorder %s144, %s145
      %p157 = scmp.eq.s32.totalorder %s29, 3
      %p158 = por %p156, %p157
      %p160 = scmp.ne.s32.totalorder %s145, %s159
      %p161 = scmp.eq.s32.totalorder %s29, 0
      %p162 = por %p160, %p161
      %s163 = ssub.s32 %s31, %s38
      %p164 = scmp.eq.s32.totalorder %s163, 0
      %s166 = sadd.s32 %s165, 1
      %s167 = scalar_select %p164, %s165, %s166
      %p170 = pneg %p164
      %p171 = scmp.eq.s32.totalorder %s23, 3
      %p172 = por %p170, %p171
      %p173 = scmp.ne.s32.totalorder %s165, %s168
      %p174 = scmp.eq.s32.totalorder %s23, 0
      %p175 = por %p173, %p174
      %p176 = scmp.ne.s32.totalorder %s165, %s168
      %p177 = scmp.eq.s32.totalorder %s28, 3
      %p178 = por %p176, %p177
      %p179 = scmp.ne.s32.totalorder %s168, %s169
      %p180 = scmp.eq.s32.totalorder %s28, 0
      %p181 = por %p179, %p180
      %p182 = scmp.ne.s32.totalorder %s168, %s169
      %p183 = scmp.eq.s32.totalorder %s29, 3
      %p184 = por %p182, %p183
      %p186 = scmp.ne.s32.totalorder %s169, %s185
      %p187 = scmp.eq.s32.totalorder %s29, 0
      %p188 = por %p186, %p187
      %s189 = ssub.s32 %s31, %s38
      %p190 = scmp.eq.s32.totalorder %s189, 0
      %s192 = sadd.s32 %s191, 1
      %s193 = scalar_select %p190, %s191, %s192
      %p196 = pneg %p190
      %p197 = scmp.eq.s32.totalorder %s23, 3
      %p198 = por %p196, %p197
      %p199 = scmp.ne.s32.totalorder %s191, %s194
      %p200 = scmp.eq.s32.totalorder %s23, 0
      %p201 = por %p199, %p200
      %p202 = scmp.ne.s32.totalorder %s191, %s194
      %p203 = scmp.eq.s32.totalorder %s28, 3
      %p204 = por %p202, %p203
      %p205 = scmp.ne.s32.totalorder %s194, %s195
      %p206 = scmp.eq.s32.totalorder %s28, 0
      %p207 = por %p205, %p206
      %p208 = scmp.ne.s32.totalorder %s194, %s195
      %p209 = scmp.eq.s32.totalorder %s29, 3
      %p210 = por %p208, %p209
      %p212 = scmp.ne.s32.totalorder %s195, %s211
      %p213 = scmp.eq.s32.totalorder %s29, 0
      %p214 = por %p212, %p213
      %s215 = ssub.s32 %s31, %s38
      %p216 = scmp.eq.s32.totalorder %s215, 0
      %s218 = sadd.s32 %s217, 1
      %s219 = scalar_select %p216, %s217, %s218
      %p222 = pneg %p216
      %p223 = scmp.eq.s32.totalorder %s23, 3
      %p224 = por %p222, %p223
      %p225 = scmp.ne.s32.totalorder %s217, %s220
      %p226 = scmp.eq.s32.totalorder %s23, 0
      %p227 = por %p225, %p226
      %p228 = scmp.ne.s32.totalorder %s217, %s220
      %p229 = scmp.eq.s32.totalorder %s28, 3
      %p230 = por %p228, %p229
      %p231 = scmp.ne.s32.totalorder %s220, %s221
      %p232 = scmp.eq.s32.totalorder %s28, 0
      %p233 = por %p231, %p232
      %p234 = scmp.ne.s32.totalorder %s220, %s221
      %p235 = scmp.eq.s32.totalorder %s29, 3
      %p236 = por %p234, %p235
      %p238 = scmp.ne.s32.totalorder %s221, %s237
      %p239 = scmp.eq.s32.totalorder %s29, 0
      %p240 = por %p238, %p239
      %s241 = ssub.s32 %s31, %s38
      %p242 = scmp.eq.s32.totalorder %s241, 0
      %s244 = sadd.s32 %s243, 1
      %s245 = scalar_select %p242, %s243, %s244
      %p248 = pneg %p242
      %p249 = scmp.eq.s32.totalorder %s23, 3
      %p250 = por %p248, %p249
      %p251 = scmp.ne.s32.totalorder %s243, %s246
      %p252 = scmp.eq.s32.totalorder %s23, 0
      %p253 = por %p251, %p252
      %p254 = scmp.ne.s32.totalorder %s243, %s246
      %p255 = scmp.eq.s32.totalorder %s28, 3
      %p256 = por %p254, %p255
      %p257 = scmp.ne.s32.totalorder %s246, %s247
      %p258 = scmp.eq.s32.totalorder %s28, 0
      %p259 = por %p257, %p258
      %p260 = scmp.ne.s32.totalorder %s246, %s247
      %p261 = scmp.eq.s32.totalorder %s29, 3
      %p262 = por %p260, %p261
      %p264 = scmp.ne.s32.totalorder %s247, %s263
      %p265 = scmp.eq.s32.totalorder %s29, 0
      %p266 = por %p264, %p265
      %s267 = ssub.s32 %s31, %s38
      %p268 = scmp.eq.s32.totalorder %s267, 0
      %s270 = sadd.s32 %s269, 1
      %s271 = scalar_select %p268, %s269, %s270
      %p274 = pneg %p268
      %p275 = scmp.eq.s32.totalorder %s23, 3
      %p276 = por %p274, %p275
      %p277 = scmp.ne.s32.totalorder %s269, %s272
      %p278 = scmp.eq.s32.totalorder %s23, 0
      %p279 = por %p277, %p278
      %p280 = scmp.ne.s32.totalorder %s269, %s272
      %p281 = scmp.eq.s32.totalorder %s28, 3
      %p282 = por %p280, %p281
      %p283 = scmp.ne.s32.totalorder %s272, %s273
      %p284 = scmp.eq.s32.totalorder %s28, 0
      %p285 = por %p283, %p284
      %p286 = scmp.ne.s32.totalorder %s272, %s273
      %p287 = scmp.eq.s32.totalorder %s29, 3
      %p288 = por %p286, %p287
      %p290 = scmp.ne.s32.totalorder %s273, %s289
      %p291 = scmp.eq.s32.totalorder %s29, 0
      %p292 = por %p290, %p291
      %s293 = ssub.s32 %s31, %s38
      %p294 = scmp.eq.s32.totalorder %s293, 0
      %s296 = sadd.s32 %s295, 1
      %s297 = scalar_select %p294, %s295, %s296
      %p300 = pneg %p294
      %p301 = scmp.eq.s32.totalorder %s23, 3
      %p302 = por %p300, %p301
      %p303 = scmp.ne.s32.totalorder %s295, %s298
      %p304 = scmp.eq.s32.totalorder %s23, 0
      %p305 = por %p303, %p304
      %p306 = scmp.ne.s32.totalorder %s295, %s298
      %p307 = scmp.eq.s32.totalorder %s28, 3
      %p308 = por %p306, %p307
      %p309 = scmp.ne.s32.totalorder %s298, %s299
      %p310 = scmp.eq.s32.totalorder %s28, 0
      %p311 = por %p309, %p310
      %p312 = scmp.ne.s32.totalorder %s298, %s299
      %p313 = scmp.eq.s32.totalorder %s29, 3
      %p314 = por %p312, %p313
      %p316 = scmp.ne.s32.totalorder %s299, %s315
      %p317 = scmp.eq.s32.totalorder %s29, 0
      %p318 = por %p316, %p317
      %s319 = ssub.s32 %s31, %s38
      %p320 = scmp.eq.s32.totalorder %s319, 0
      %s322 = sadd.s32 %s321, 1
      %s323 = scalar_select %p320, %s321, %s322
      %p326 = pneg %p320
      %p327 = scmp.eq.s32.totalorder %s23, 3
      %p328 = por %p326, %p327
      %p329 = scmp.ne.s32.totalorder %s321, %s324
      %p330 = scmp.eq.s32.totalorder %s23, 0
      %p331 = por %p329, %p330
      %p332 = scmp.ne.s32.totalorder %s321, %s324
      %p333 = scmp.eq.s32.totalorder %s28, 3
      %p334 = por %p332, %p333
      %p335 = scmp.ne.s32.totalorder %s324, %s325
      %p336 = scmp.eq.s32.totalorder %s28, 0
      %p337 = por %p335, %p336
      %p338 = scmp.ne.s32.totalorder %s324, %s325
      %p339 = scmp.eq.s32.totalorder %s29, 3
      %p340 = por %p338, %p339
      %p342 = scmp.ne.s32.totalorder %s325, %s341
      %p343 = scmp.eq.s32.totalorder %s29, 0
      %p344 = por %p342, %p343
      %s345 = ssub.s32 %s31, %s38
      %p346 = scmp.eq.s32.totalorder %s345, 0
      %s348 = sadd.s32 %s347, 1
      %s349 = scalar_select %p346, %s347, %s348
      %p352 = pneg %p346
      %p353 = scmp.eq.s32.totalorder %s23, 3
      %p354 = por %p352, %p353
      %p355 = scmp.ne.s32.totalorder %s347, %s350
      %p356 = scmp.eq.s32.totalorder %s23, 0
      %p357 = por %p355, %p356
      %p358 = scmp.ne.s32.totalorder %s347, %s350
      %p359 = scmp.eq.s32.totalorder %s28, 3
      %p360 = por %p358, %p359
      %p361 = scmp.ne.s32.totalorder %s350, %s351
      %p362 = scmp.eq.s32.totalorder %s28, 0
      %p363 = por %p361, %p362
      %p364 = scmp.ne.s32.totalorder %s350, %s351
      %p365 = scmp.eq.s32.totalorder %s29, 3
      %p366 = por %p364, %p365
      %p368 = scmp.ne.s32.totalorder %s351, %s367
      %p369 = scmp.eq.s32.totalorder %s29, 0
      %p370 = por %p368, %p369
      %s371 = ssub.s32 %s31, %s38
      %p372 = scmp.eq.s32.totalorder %s371, 0
      %s374 = sadd.s32 %s373, 1
      %s375 = scalar_select %p372, %s373, %s374
      %p378 = pneg %p372
      %p379 = scmp.eq.s32.totalorder %s23, 3
      %p380 = por %p378, %p379
      %p381 = scmp.ne.s32.totalorder %s373, %s376
      %p382 = scmp.eq.s32.totalorder %s23, 0
      %p383 = por %p381, %p382
      %p384 = scmp.ne.s32.totalorder %s373, %s376
      %p385 = scmp.eq.s32.totalorder %s28, 3
      %p386 = por %p384, %p385
      %p387 = scmp.ne.s32.totalorder %s376, %s377
      %p388 = scmp.eq.s32.totalorder %s28, 0
      %p389 = por %p387, %p388
      %p390 = scmp.ne.s32.totalorder %s376, %s377
      %p391 = scmp.eq.s32.totalorder %s29, 3
      %p392 = por %p390, %p391
      %p394 = scmp.ne.s32.totalorder %s377, %s393
      %p395 = scmp.eq.s32.totalorder %s29, 0
      %p396 = por %p394, %p395
      %s397 = ssub.s32 %s30, %s42
      %p398 = scmp.eq.s32.totalorder %s397, 0
      %s400 = sadd.s32 %s399, 1
      %s401 = scalar_select %p398, %s399, %s400
      %p404 = pneg %p398
      %p405 = scmp.eq.s32.totalorder %s23, 3
      %p406 = por %p404, %p405
      %p407 = scmp.ne.s32.totalorder %s399, %s402
      %p408 = scmp.eq.s32.totalorder %s23, 0
      %p409 = por %p407, %p408
      %p410 = scmp.ne.s32.totalorder %s399, %s402
      %p411 = scmp.eq.s32.totalorder %s28, 3
      %p412 = por %p410, %p411
      %p413 = scmp.ne.s32.totalorder %s402, %s403
      %p414 = scmp.eq.s32.totalorder %s28, 0
      %p415 = por %p413, %p414
      %p416 = scmp.ne.s32.totalorder %s402, %s403
      %p417 = scmp.eq.s32.totalorder %s29, 3
      %p418 = por %p416, %p417
      %p420 = scmp.ne.s32.totalorder %s403, %s419
      %p421 = scmp.eq.s32.totalorder %s29, 0
      %p422 = por %p420, %p421
      %p423 = scmp.le.s32.totalorder 1, %s23
      %p424 = scmp.lt.s32.totalorder %s23, 5
      %p425 = pnand %p423, %p424
      %p426 = pneg %p425
      // Predicated region
      $region9: #{tpu_custom_call.1} parent=5 // pred_check
        _
      $region10: #{tpu_custom_call.1} parent=5 // pred_check_branch
        %428 = sbr.rel (%p425) target = $region12
      $region11: #{tpu_custom_call.1} parent=5 // pred_region
        %s429 = ssub.s32 %s23, 1
        // Predicated region
        $region13: #{tpu_custom_call.1} parent=11 // pred_check
          %p430 = pneg %p134
        $region14: #{tpu_custom_call.1} parent=11 // pred_check_branch
          %432 = sbr.rel (%p430) target = $region16
        $region15: #{tpu_custom_call.1} parent=11 // pred_region
          _
        $region16: #{tpu_custom_call.1} parent=11 // pred_fallthru
          _
        // Predicated region
        $region17: #{tpu_custom_call.1} parent=11 // pred_check
          %p433 = pneg %p155
        $region18: #{tpu_custom_call.1} parent=11 // pred_check_branch
          %435 = sbr.rel (%p433) target = $region20
        $region19: #{tpu_custom_call.1} parent=11 // pred_region
          _
        $region20: #{tpu_custom_call.1} parent=11 // pred_fallthru
          _
      $region12: #{tpu_custom_call.1} parent=5 // pred_fallthru
        _
      %p436 = scmp.lt.s32.totalorder %s23, 4
      // Predicated region
      $region21: #{tpu_custom_call.1} parent=5 // pred_check
        %p437 = pneg %p436
      $region22: #{tpu_custom_call.1} parent=5 // pred_check_branch
        %439 = sbr.rel (%p437) target = $region24
      $region23: #{tpu_custom_call.1} parent=5 // pred_region
        // Predicated region
        $region25: #{tpu_custom_call.1} parent=23 // pred_check
          %p440 = pneg %p55
        $region26: #{tpu_custom_call.1} parent=23 // pred_check_branch
          %442 = sbr.rel (%p440) target = $region28
        $region27: #{tpu_custom_call.1} parent=23 // pred_region
          %p443 = scmp.lt.s32.totalorder %s30, 1
          %s444 = scalar_select %p443, %s30, 1
          %s445 = smul.addr %s444, 8
          %s446 = scalar_lea.vmem %s0, %s445
        $region28: #{tpu_custom_call.1} parent=23 // pred_fallthru
          _
        // Predicated region
        $region29: #{tpu_custom_call.1} parent=23 // pred_check
          %p447 = pneg %p81
        $region30: #{tpu_custom_call.1} parent=23 // pred_check_branch
          %449 = sbr.rel (%p447) target = $region32
        $region31: #{tpu_custom_call.1} parent=23 // pred_region
          %p450 = scmp.lt.s32.totalorder %s30, 1
          %s451 = scalar_select %p450, %s30, 1
          %s452 = smul.addr %s451, 8
          %s453 = scalar_lea.vmem %s1, %s452
        $region32: #{tpu_custom_call.1} parent=23 // pred_fallthru
          _
        // Predicated region
        $region33: #{tpu_custom_call.1} parent=23 // pred_check
          %p454 = pneg %p107
        $region34: #{tpu_custom_call.1} parent=23 // pred_check_branch
          %456 = sbr.rel (%p454) target = $region36
        $region35: #{tpu_custom_call.1} parent=23 // pred_region
          %p457 = scmp.lt.s32.totalorder %s30, 1
          %s458 = scalar_select %p457, %s30, 1
          %s459 = scalar_lea.vmem %s2, %s458
        $region36: #{tpu_custom_call.1} parent=23 // pred_fallthru
          _
        // Predicated region
        $region37: #{tpu_custom_call.1} parent=23 // pred_check
          %p460 = pneg %p175
        $region38: #{tpu_custom_call.1} parent=23 // pred_check_branch
          %462 = sbr.rel (%p460) target = $region40
        $region39: #{tpu_custom_call.1} parent=23 // pred_region
          %p463 = scmp.lt.s32.totalorder %s31, 1
          %s464 = scalar_select %p463, %s31, 1
          %s465 = smul.addr %s464, 4
          %s466 = smul.addr %s465, 8
          %s467 = scalar_lea.vmem %s5, %s466
        $region40: #{tpu_custom_call.1} parent=23 // pred_fallthru
          _
        // Predicated region
        $region41: #{tpu_custom_call.1} parent=23 // pred_check
          %p468 = pneg %p201
        $region42: #{tpu_custom_call.1} parent=23 // pred_check_branch
          %470 = sbr.rel (%p468) target = $region44
        $region43: #{tpu_custom_call.1} parent=23 // pred_region
          %p471 = scmp.lt.s32.totalorder %s31, 1
          %s472 = scalar_select %p471, %s31, 1
          %s473 = scalar_lea.vmem %s6, %s472
        $region44: #{tpu_custom_call.1} parent=23 // pred_fallthru
          _
        // Predicated region
        $region45: #{tpu_custom_call.1} parent=23 // pred_check
          %p474 = pneg %p227
        $region46: #{tpu_custom_call.1} parent=23 // pred_check_branch
          %476 = sbr.rel (%p474) target = $region48
        $region47: #{tpu_custom_call.1} parent=23 // pred_region
          %p477 = scmp.lt.s32.totalorder %s31, 1
          %s478 = scalar_select %p477, %s31, 1
          %s479 = smul.addr %s478, 4
          %s480 = smul.addr %s479, 8
          %s481 = scalar_lea.vmem %s7, %s480
        $region48: #{tpu_custom_call.1} parent=23 // pred_fallthru
          _
        // Predicated region
        $region49: #{tpu_custom_call.1} parent=23 // pred_check
          %p482 = pneg %p253
        $region50: #{tpu_custom_call.1} parent=23 // pred_check_branch
          %484 = sbr.rel (%p482) target = $region52
        $region51: #{tpu_custom_call.1} parent=23 // pred_region
          %p485 = scmp.lt.s32.totalorder %s31, 1
          %s486 = scalar_select %p485, %s31, 1
          %s487 = scalar_lea.vmem %s8, %s486
        $region52: #{tpu_custom_call.1} parent=23 // pred_fallthru
          _
        // Predicated region
        $region53: #{tpu_custom_call.1} parent=23 // pred_check
          %p488 = pneg %p279
        $region54: #{tpu_custom_call.1} parent=23 // pred_check_branch
          %490 = sbr.rel (%p488) target = $region56
        $region55: #{tpu_custom_call.1} parent=23 // pred_region
          %p491 = scmp.lt.s32.totalorder %s31, 1
          %s492 = scalar_select %p491, %s31, 1
          %s493 = smul.addr %s492, 4
          %s494 = smul.addr %s493, 8
          %s495 = scalar_lea.vmem %s9, %s494
        $region56: #{tpu_custom_call.1} parent=23 // pred_fallthru
          _
        // Predicated region
        $region57: #{tpu_custom_call.1} parent=23 // pred_check
          %p496 = pneg %p305
        $region58: #{tpu_custom_call.1} parent=23 // pred_check_branch
          %498 = sbr.rel (%p496) target = $region60
        $region59: #{tpu_custom_call.1} parent=23 // pred_region
          %p499 = scmp.lt.s32.totalorder %s31, 1
          %s500 = scalar_select %p499, %s31, 1
          %s501 = smul.addr %s500, 4
          %s502 = smul.addr %s501, 8
          %s503 = scalar_lea.vmem %s10, %s502
        $region60: #{tpu_custom_call.1} parent=23 // pred_fallthru
          _
        // Predicated region
        $region61: #{tpu_custom_call.1} parent=23 // pred_check
          %p504 = pneg %p331
        $region62: #{tpu_custom_call.1} parent=23 // pred_check_branch
          %506 = sbr.rel (%p504) target = $region64
        $region63: #{tpu_custom_call.1} parent=23 // pred_region
          %p507 = scmp.lt.s32.totalorder %s31, 1
          %s508 = scalar_select %p507, %s31, 1
          %s509 = scalar_lea.vmem %s11, %s508
        $region64: #{tpu_custom_call.1} parent=23 // pred_fallthru
          _
        // Predicated region
        $region65: #{tpu_custom_call.1} parent=23 // pred_check
          %p510 = pneg %p357
        $region66: #{tpu_custom_call.1} parent=23 // pred_check_branch
          %512 = sbr.rel (%p510) target = $region68
        $region67: #{tpu_custom_call.1} parent=23 // pred_region
          %p513 = scmp.lt.s32.totalorder %s31, 1
          %s514 = scalar_select %p513, %s31, 1
          %s515 = smul.addr %s514, 8
          %s516 = smul.addr %s515, 8
          %s517 = scalar_lea.vmem %s12, %s516
        $region68: #{tpu_custom_call.1} parent=23 // pred_fallthru
          _
        // Predicated region
        $region69: #{tpu_custom_call.1} parent=23 // pred_check
          %p518 = pneg %p383
        $region70: #{tpu_custom_call.1} parent=23 // pred_check_branch
          %520 = sbr.rel (%p518) target = $region72
        $region71: #{tpu_custom_call.1} parent=23 // pred_region
          %p521 = scmp.lt.s32.totalorder %s31, 1
          %s522 = scalar_select %p521, %s31, 1
          %s523 = smul.addr %s522, 8
          %s524 = scalar_lea.vmem %s13, %s523
        $region72: #{tpu_custom_call.1} parent=23 // pred_fallthru
          _
      $region24: #{tpu_custom_call.1} parent=5 // pred_fallthru
        _
      %p525 = scmp.le.s32.totalorder 1, %s23
      %p526 = scmp.lt.s32.totalorder %s23, 5
      %p527 = pnand %p525, %p526
      %p528 = pneg %p527
      // Predicated region
      $region73: #{tpu_custom_call.1} parent=5 // pred_check
        _
      $region74: #{tpu_custom_call.1} parent=5 // pred_check_branch
        %530 = sbr.rel (%p527) target = $region76
      $region75: #{tpu_custom_call.1} parent=5 // pred_region
        %s531 = ssub.s32 %s23, 1
        %p532 = scmp.lt.s32.totalorder %s32, 1
        %s533 = scalar_select %p532, %s32, 1
        %s534 = smul.addr %s533, 8
        %s535 = scalar_lea.vmem %s0, %s534
        %p536 = pneg %p61
        %p537 = pneg %p58
        %p538 = scmp.lt.s32.totalorder %s32, 1
        %s539 = scalar_select %p538, %s32, 1
        %s540 = smul.addr %s539, 8
        %s541 = scalar_lea.vmem %s1, %s540
        %p542 = pneg %p87
        %p543 = pneg %p84
        %p544 = scmp.lt.s32.totalorder %s32, 1
        %s545 = scalar_select %p544, %s32, 1
        %s546 = scalar_lea.vmem %s2, %s545
        %p547 = pneg %p113
        %p548 = pneg %p110
        %p549 = pneg %p134
        %p550 = pneg %p131
        %p551 = pneg %p155
        %p552 = pneg %p152
        %p553 = scmp.lt.s32.totalorder %s33, 1
        %s554 = scalar_select %p553, %s33, 1
        %s555 = smul.addr %s554, 4
        %s556 = smul.addr %s555, 8
        %s557 = scalar_lea.vmem %s5, %s556
        %p558 = pneg %p181
        %p559 = pneg %p178
        %p560 = scmp.lt.s32.totalorder %s33, 1
        %s561 = scalar_select %p560, %s33, 1
        %s562 = scalar_lea.vmem %s6, %s561
        %p563 = pneg %p207
        %p564 = pneg %p204
        %p565 = scmp.lt.s32.totalorder %s33, 1
        %s566 = scalar_select %p565, %s33, 1
        %s567 = smul.addr %s566, 4
        %s568 = smul.addr %s567, 8
        %s569 = scalar_lea.vmem %s7, %s568
        %p570 = pneg %p233
        %p571 = pneg %p230
        %p572 = scmp.lt.s32.totalorder %s33, 1
        %s573 = scalar_select %p572, %s33, 1
        %s574 = scalar_lea.vmem %s8, %s573
        %p575 = pneg %p259
        %p576 = pneg %p256
        %p577 = scmp.lt.s32.totalorder %s33, 1
        %s578 = scalar_select %p577, %s33, 1
        %s579 = smul.addr %s578, 4
        %s580 = smul.addr %s579, 8
        %s581 = scalar_lea.vmem %s9, %s580
        %p582 = pneg %p285
        %p583 = pneg %p282
        %p584 = scmp.lt.s32.totalorder %s33, 1
        %s585 = scalar_select %p584, %s33, 1
        %s586 = smul.addr %s585, 4
        %s587 = smul.addr %s586, 8
        %s588 = scalar_lea.vmem %s10, %s587
        %p589 = pneg %p311
        %p590 = pneg %p308
        %p591 = scmp.lt.s32.totalorder %s33, 1
        %s592 = scalar_select %p591, %s33, 1
        %s593 = scalar_lea.vmem %s11, %s592
        %p594 = pneg %p337
        %p595 = pneg %p334
        %p596 = scmp.lt.s32.totalorder %s33, 1
        %s597 = scalar_select %p596, %s33, 1
        %s598 = smul.addr %s597, 8
        %s599 = smul.addr %s598, 8
        %s600 = scalar_lea.vmem %s12, %s599
        %p601 = pneg %p363
        %p602 = pneg %p360
        %p603 = scmp.lt.s32.totalorder %s33, 1
        %s604 = scalar_select %p603, %s33, 1
        %s605 = smul.addr %s604, 8
        %s606 = scalar_lea.vmem %s13, %s605
        %p607 = pneg %p389
        %p608 = pneg %p386
        %p609 = pneg %p415
        %p610 = pneg %p412
        %s611 = sand.u32 %s402, 1
        %s612 = scalar_lea.sflag [#allocation6], %s611
        %s613 = sand.u32 %s402, 1
        %s614 = smul.addr %s613, 8
        %s615 = scalar_lea.vmem [#allocation5], %s614
        %p616 = scmp.lt.s32.totalorder %s32, 1
        %s617 = scalar_select %p616, %s32, 1
        %s618 = smul.addr %s617, 8
        %s619 = scalar_lea.vmem %s0, %s618
        %p620 = scmp.lt.s32.totalorder %s32, 1
        %s621 = scalar_select %p620, %s32, 1
        %s622 = smul.addr %s621, 8
        %s623 = scalar_lea.vmem %s1, %s622
        %p624 = scmp.lt.s32.totalorder %s32, 1
        %s625 = scalar_select %p624, %s32, 1
        %s626 = scalar_lea.vmem %s2, %s625
        %p627 = scmp.lt.s32.totalorder %s33, 1
        %s628 = scalar_select %p627, %s33, 1
        %s629 = smul.addr %s628, 4
        %s630 = smul.addr %s629, 8
        %s631 = scalar_lea.vmem %s5, %s630
        %p632 = scmp.lt.s32.totalorder %s33, 1
        %s633 = scalar_select %p632, %s33, 1
        %s634 = scalar_lea.vmem %s6, %s633
        %p635 = scmp.lt.s32.totalorder %s33, 1
        %s636 = scalar_select %p635, %s33, 1
        %s637 = smul.addr %s636, 4
        %s638 = smul.addr %s637, 8
        %s639 = scalar_lea.vmem %s7, %s638
        %p640 = scmp.lt.s32.totalorder %s33, 1
        %s641 = scalar_select %p640, %s33, 1
        %s642 = scalar_lea.vmem %s8, %s641
        %p643 = scmp.lt.s32.totalorder %s33, 1
        %s644 = scalar_select %p643, %s33, 1
        %s645 = smul.addr %s644, 4
        %s646 = smul.addr %s645, 8
        %s647 = scalar_lea.vmem %s9, %s646
        %p648 = scmp.lt.s32.totalorder %s33, 1
        %s649 = scalar_select %p648, %s33, 1
        %s650 = smul.addr %s649, 4
        %s651 = smul.addr %s650, 8
        %s652 = scalar_lea.vmem %s10, %s651
        %p653 = scmp.lt.s32.totalorder %s33, 1
        %s654 = scalar_select %p653, %s33, 1
        %s655 = scalar_lea.vmem %s11, %s654
        %p656 = scmp.lt.s32.totalorder %s33, 1
        %s657 = scalar_select %p656, %s33, 1
        %s658 = smul.addr %s657, 8
        %s659 = smul.addr %s658, 8
        %s660 = scalar_lea.vmem %s12, %s659
        %p661 = scmp.lt.s32.totalorder %s33, 1
        %s662 = scalar_select %p661, %s33, 1
        %s663 = smul.addr %s662, 8
        %s664 = scalar_lea.vmem %s13, %s663
        %p665 = scmp.eq.s32.totalorder %s33, 0
        // Predicated region
        $region77: #{tpu_custom_call.1} parent=75 // pred_check
          %p666 = pneg %p665
        $region78: #{tpu_custom_call.1} parent=75 // pred_check_branch
          %668 = sbr.rel (%p666) target = $region80
        $region79: #{tpu_custom_call.1} parent=75 // pred_region
          %v669 = vld [vmem:[%s619] sm:$0xff]
          %vm670 = vcmask 261120
          %671 = vst.msk [vmem:[#allocation2] sm:$0xff] %vm670, %v669
          %v672 = vld [vmem:[%s623] sm:$0xff]
          %v673 = vld [vmem:[%s3] sm:$0x3f]
          %v674 = vld [vmem:[%s4] sm:$0x1]
          %v675 = vlaneseq
          %v676 = vshrl.u32 %v675, 7
          %v677 = vsub.s32 0, %v676
          %v678 = vrot.slane %v674, %v677
          %vm679 = vcmask 48128
          %v681 = vsel %vm679, %v672, 0
          %vm683 = vcmask 1045504
          %v685 = vsel %vm683, %v673, 0
          %687 = vmatprep.subr.mxu0 0.0
          %688 = vmatpush1.msra.mxu0 0.0
          %689 = vmatprep.subr.mxu0 0.0
          %690 = vmatpush1.msra.mxu0 0.0
          %691 = vmatprep.subr.mxu0 0.0
          %692 = vmatpush1.msra.mxu0 0.0
          %693 = vmatprep.subr.mxu0 0.0
          %694 = vmatpush1.msra.mxu0 0.0
          %695 = vmatprep.subr.mxu0 0.0
          %696 = vmatpush1.msra.mxu0 0.0
          %697 = vmatprep.subr.mxu0 0.0
          %698 = vmatpush1.msra.mxu0 0.0
          %699 = vmatprep.subr.mxu0 0.0
          %700 = vmatpush1.msra.mxu0 0.0
          %701 = vmatprep.subr.mxu0 0.0
          %702 = vmatpush1.msra.mxu0 0.0
          %703 = vmatprep.subr.mxu0 0.0
          %704 = vmatpush1.msra.mxu0 0.0
          %705 = vmatprep.subr.mxu0 0.0
          %706 = vmatpush1.msra.mxu0 0.0
          %707 = vmatprep.subr.mxu0 0.0
          %708 = vmatpush1.msra.mxu0 0.0
          %709 = vmatprep.subr.mxu0 0.0
          %710 = vmatpush1.msra.mxu0 0.0
          %711 = vmatprep.subr.mxu0 0.0
          %712 = vmatpush1.msra.mxu0 0.0
          %713 = vmatprep.subr.mxu0 0.0
          %714 = vmatpush1.msra.mxu0 0.0
          %715 = vmatprep.subr.mxu0 0.0
          %716 = vmatpush1.msra.mxu0 0.0
          %717 = vmatprep.subr.mxu0 0.0
          %718 = vmatpush1.msra.mxu0 %v685
          %719 = vmatprep.subr.mxu0 0.0
          %720 = vmatpush2.msra.mxu0 0.0
          %721 = vmatprep.subr.mxu0 0.0
          %722 = vmatpush2.msra.mxu0 0.0
          %723 = vmatprep.subr.mxu0 0.0
          %724 = vmatpush2.msra.mxu0 0.0
          %725 = vmatprep.subr.mxu0 0.0
          %726 = vmatpush2.msra.mxu0 0.0
          %727 = vmatprep.subr.mxu0 0.0
          %728 = vmatpush2.msra.mxu0 0.0
          %729 = vmatprep.subr.mxu0 0.0
          %730 = vmatpush2.msra.mxu0 0.0
          %731 = vmatprep.subr.mxu0 0.0
          %732 = vmatpush2.msra.mxu0 0.0
          %733 = vmatprep.subr.mxu0 0.0
          %734 = vmatpush2.msra.mxu0 0.0
          %735 = vmatprep.subr.mxu0 0.0
          %736 = vmatpush2.msra.mxu0 0.0
          %737 = vmatprep.subr.mxu0 0.0
          %738 = vmatpush2.msra.mxu0 0.0
          %739 = vmatprep.subr.mxu0 0.0
          %740 = vmatpush2.msra.mxu0 0.0
          %741 = vmatprep.subr.mxu0 0.0
          %742 = vmatpush2.msra.mxu0 0.0
          %743 = vmatprep.subr.mxu0 0.0
          %744 = vmatpush2.msra.mxu0 0.0
          %745 = vmatprep.subr.mxu0 0.0
          %746 = vmatpush2.msra.mxu0 0.0
          %747 = vmatprep.subr.mxu0 0.0
          %748 = vmatpush2.msra.mxu0 0.0
          %749 = vmatprep.subr.mxu0 0.0
          %750 = vmatpush2.msra.mxu0 0.0
          %751 = vmatprep.mubr.f32.mxu0 0.0
          %752 = vmatmul.mubr.f32.gmra.mxu0 %v681
          %v753 = vpop.f32.mrf.mxu0
          %v754 = vadd.f32 %v678, %v753
          %v755 = vpop.f32.mrf.mxu0
          %756 = vdwg.mxu0
          %v757 = vld [vmem:[%s4 + $0x1] sm:$0x1]
          %v758 = vld [vmem:[%s4 + $0x2] sm:$0x1]
          %v759 = vsel %vm670, %v754, 0.0
          %760 = vadd.xlane.f32.xlu0 %v759
          %v761 = vpop.xlane.xlu0 %760
          %v762 = vrcp.pop 32.0
          %v763 = vmul.f32 %v761, %v762
          %v764 = vsub.f32 %v754, %v763
          %v765 = vmul.f32 %v764, %v764
          %v766 = vsel %vm670, %v765, 0.0
          %767 = vadd.xlane.f32.xlu0 %v766
          %v768 = vpop.xlane.xlu0 %767
          %v769 = vmul.f32 %v768, %v762
          %v770 = vadd.f32 %v769, 1e-05
          %v771 = vrsqrt.pop %v770
          %v772 = vmul.f32 %v764, %v771
          %v773 = vlaneseq
          %v774 = vshrl.u32 %v773, 7
          %v775 = vsub.s32 0, %v774
          %v776 = vrot.slane %v757, %v775
          %v777 = vmul.f32 %v772, %v776
          %v778 = vlaneseq
          %v779 = vshrl.u32 %v778, 7
          %v780 = vsub.s32 0, %v779
          %v781 = vrot.slane %v758, %v780
          %v782 = vadd.f32 %v777, %v781
          %783 = vst.msk [vmem:[#allocation3] sm:$0xff] %vm670, %v782
          %784 = vxpose.xlu0.b32.start [1/16] %v672, 128
          %785 = vxpose.xlu0.b32.cont [2/16] 0.0, 128
          %786 = vxpose.xlu0.b32.cont [3/16] 0.0, 128
          %787 = vxpose.xlu0.b32.cont [4/16] 0.0, 128
          %788 = vxpose.xlu0.b32.cont [5/16] 0.0, 128
          %789 = vxpose.xlu0.b32.cont [6/16] 0.0, 128
          %790 = vxpose.xlu0.b32.cont [7/16] 0.0, 128
          %791 = vxpose.xlu0.b32.cont [8/16] 0.0, 128
          %792 = vxpose.xlu0.b32.cont [9/16] 0.0, 128
          %793 = vxpose.xlu0.b32.cont [10/16] 0.0, 128
          %794 = vxpose.xlu0.b32.cont [11/16] 0.0, 128
          %795 = vxpose.xlu0.b32.cont [12/16] 0.0, 128
          %796 = vxpose.xlu0.b32.cont [13/16] 0.0, 128
          %797 = vxpose.xlu0.b32.cont [14/16] 0.0, 128
          %798 = vxpose.xlu0.b32.cont [15/16] 0.0, 128
          %799 = vxpose.xlu0.b32.end [16/16] 0.0, 128
          %v800 = vpop.trf.xlu0
          %v801 = vpop.trf.xlu0
          %v802 = vpop.trf.xlu0
          %v803 = vpop.trf.xlu0
          %v804 = vpop.trf.xlu0
          %v805 = vpop.trf.xlu0
          %v806 = vpop.trf.xlu0
          %v807 = vpop.trf.xlu0
          %v808 = vpop.trf.xlu0
          %v809 = vpop.trf.xlu0
          %v810 = vpop.trf.xlu0
          %v811 = vpop.trf.xlu0
          %v812 = vpop.trf.xlu0
          %v813 = vpop.trf.xlu0
          %v814 = vpop.trf.xlu0
          %v815 = vpop.trf.xlu0
          %816 = vset.pattern.permute.xlu0 0
          %817 = vperm.xlu0 %816, %v672
          %v818 = vpop.permute.xlu0 %817
          %v820 = vlaneseq
          %v821 = vshrl.u32 %v820, 7
          %v822 = vsub.s32 0, %v821
          %v823 = vrot.slane %v800, %v822
          %v824 = vsub.f32 %v818, %v823
          %825 = vrot.lane.b32.xlu0 %v672, 127
          %v826 = vpop.permute.xlu0 %825
          %828 = vxpose.xlu0.b32.start [1/16] %v826, 128
          %829 = vxpose.xlu0.b32.cont [2/16] 0.0, 128
          %830 = vxpose.xlu0.b32.cont [3/16] 0.0, 128
          %831 = vxpose.xlu0.b32.cont [4/16] 0.0, 128
          %832 = vxpose.xlu0.b32.cont [5/16] 0.0, 128
          %833 = vxpose.xlu0.b32.cont [6/16] 0.0, 128
          %834 = vxpose.xlu0.b32.cont [7/16] 0.0, 128
          %835 = vxpose.xlu0.b32.cont [8/16] 0.0, 128
          %836 = vxpose.xlu0.b32.cont [9/16] 0.0, 128
          %837 = vxpose.xlu0.b32.cont [10/16] 0.0, 128
          %838 = vxpose.xlu0.b32.cont [11/16] 0.0, 128
          %839 = vxpose.xlu0.b32.cont [12/16] 0.0, 128
          %840 = vxpose.xlu0.b32.cont [13/16] 0.0, 128
          %841 = vxpose.xlu0.b32.cont [14/16] 0.0, 128
          %842 = vxpose.xlu0.b32.cont [15/16] 0.0, 128
          %843 = vxpose.xlu0.b32.end [16/16] 0.0, 128
          %v844 = vpop.trf.xlu0
          %v845 = vpop.trf.xlu0
          %v846 = vpop.trf.xlu0
          %v847 = vpop.trf.xlu0
          %v848 = vpop.trf.xlu0
          %v849 = vpop.trf.xlu0
          %v850 = vpop.trf.xlu0
          %v851 = vpop.trf.xlu0
          %v852 = vpop.trf.xlu0
          %v853 = vpop.trf.xlu0
          %v854 = vpop.trf.xlu0
          %v855 = vpop.trf.xlu0
          %v856 = vpop.trf.xlu0
          %v857 = vpop.trf.xlu0
          %v858 = vpop.trf.xlu0
          %v859 = vpop.trf.xlu0
          %860 = vset.pattern.permute.xlu0 1
          %861 = vperm.xlu0 %860, %v672
          %v862 = vpop.permute.xlu0 %861
          %v864 = vlaneseq
          %v865 = vshrl.u32 %v864, 7
          %v866 = vsub.s32 0, %v865
          %v867 = vrot.slane %v844, %v866
          %v868 = vsub.f32 %v862, %v867
          %869 = vrot.lane.b32.xlu0 %v672, 126
          %v870 = vpop.permute.xlu0 %869
          %872 = vxpose.xlu0.b32.start [1/16] %v870, 128
          %873 = vxpose.xlu0.b32.cont [2/16] 0.0, 128
          %874 = vxpose.xlu0.b32.cont [3/16] 0.0, 128
          %875 = vxpose.xlu0.b32.cont [4/16] 0.0, 128
          %876 = vxpose.xlu0.b32.cont [5/16] 0.0, 128
          %877 = vxpose.xlu0.b32.cont [6/16] 0.0, 128
          %878 = vxpose.xlu0.b32.cont [7/16] 0.0, 128
          %879 = vxpose.xlu0.b32.cont [8/16] 0.0, 128
          %880 = vxpose.xlu0.b32.cont [9/16] 0.0, 128
          %881 = vxpose.xlu0.b32.cont [10/16] 0.0, 128
          %882 = vxpose.xlu0.b32.cont [11/16] 0.0, 128
          %883 = vxpose.xlu0.b32.cont [12/16] 0.0, 128
          %884 = vxpose.xlu0.b32.cont [13/16] 0.0, 128
          %885 = vxpose.xlu0.b32.cont [14/16] 0.0, 128
          %886 = vxpose.xlu0.b32.cont [15/16] 0.0, 128
          %887 = vxpose.xlu0.b32.end [16/16] 0.0, 128
          %v888 = vpop.trf.xlu0
          %v889 = vpop.trf.xlu0
          %v890 = vpop.trf.xlu0
          %v891 = vpop.trf.xlu0
          %v892 = vpop.trf.xlu0
          %v893 = vpop.trf.xlu0
          %v894 = vpop.trf.xlu0
          %v895 = vpop.trf.xlu0
          %v896 = vpop.trf.xlu0
          %v897 = vpop.trf.xlu0
          %v898 = vpop.trf.xlu0
          %v899 = vpop.trf.xlu0
          %v900 = vpop.trf.xlu0
          %v901 = vpop.trf.xlu0
          %v902 = vpop.trf.xlu0
          %v903 = vpop.trf.xlu0
          %904 = vset.pattern.permute.xlu0 2
          %905 = vperm.xlu0 %904, %v672
          %v906 = vpop.permute.xlu0 %905
          %v908 = vlaneseq
          %v909 = vshrl.u32 %v908, 7
          %v910 = vsub.s32 0, %v909
          %v911 = vrot.slane %v888, %v910
          %v912 = vsub.f32 %v906, %v911
          %v913 = vmul.f32 %v824, %v824
          %v914 = vmul.f32 %v868, %v868
          %v915 = vadd.f32 %v913, %v914
          %v916 = vmul.f32 %v912, %v912
          %v917 = vadd.f32 %v915, %v916
          %v918 = vadd.f32 %v917, 1e-10
          %v919 = vadd.f32 %v915, 1e-10
          %v920 = vrsqrt.pop %v918
          %v921 = vrsqrt.pop %v919
          %v922 = vmul.f32 %v918, %v920
          %v923 = vmul.f32 %v919, %v921
          %vm924 = vcmask 64512
          %v925 = vsel %vm924, %v922, -inf
          %926 = vmax.xlane.f32.xlu0 %v925
          %v927 = vpop.xlane.xlu0 %926
          %v928 = vrot.slane %v927, 4
          %v929 = vmax.f32 %v927, %v928
          %v930 = vrot.slane %v929, 2
          %v931 = vmax.f32 %v929, %v930
          %v932 = vrot.slane %v931, 1
          %v933 = vmax.f32 %v931, %v932
          %s934 = vtos %v933
          %v935 = vstv %s934
          %v936 = vrcp.pop %v935
          %v937 = vmul.f32 %v922, %v936
          %v938 = vmul.f32 %v912, %v920
          %v939 = vmul.f32 %v923, %v920
          %v940 = vmul.f32 %v868, %v921
          %v941 = vmul.f32 %v824, %v921
          %942 = vst.msk [vmem:[#allocation4] sm:$0xff] %vm924, %v937
          %s943 = scalar_lea.vmem [#allocation4], 8
          %944 = vst.msk [vmem:[%s943] sm:$0xff] %vm924, %v938
          %s945 = scalar_lea.vmem [#allocation4], 16
          %946 = vst.msk [vmem:[%s945] sm:$0xff] %vm924, %v939
          %s947 = scalar_lea.vmem [#allocation4], 24
          %948 = vst.msk [vmem:[%s947] sm:$0xff] %vm924, %v940
          %s949 = scalar_lea.vmem [#allocation4], 32
          %950 = vst.msk [vmem:[%s949] sm:$0xff] %vm924, %v941
        $region80: #{tpu_custom_call.1} parent=75 // pred_fallthru
          _
        %v951 = vld [vmem:[%s626] sm:$0x1]
        %vm952 = vcmp.eq.f32.partialorder %v951, 0.0
        %v953 = vld [vmem:[#allocation4] sm:$0xff]
        %s954 = scalar_lea.vmem [#allocation4], 8
        %v955 = vld [vmem:[%s954] sm:$0xff]
        %s956 = scalar_lea.vmem [#allocation4], 16
        %v957 = vld [vmem:[%s956] sm:$0xff]
        %s958 = scalar_lea.vmem [#allocation4], 24
        %v959 = vld [vmem:[%s958] sm:$0xff]
        %s960 = scalar_lea.vmem [#allocation4], 32
        %v961 = vld [vmem:[%s960] sm:$0xff]
        %v962 = vld [vmem:[#allocation2] sm:$0xff]
        %v963 = vld [vmem:[#allocation3] sm:$0xff]
        %v964 = vadd.f32 %v962, %v963
        %v965 = vld [vmem:[%s631] sm:$0xff]
        %v966 = vld [vmem:[%s631 + $0x8] sm:$0xff]
        %v967 = vld [vmem:[%s631 + $0x10] sm:$0xff]
        %v968 = vld [vmem:[%s631 + $0x18] sm:$0xff]
        %v969 = vld [vmem:[%s639] sm:$0xff]
        %v970 = vld [vmem:[%s639 + $0x8] sm:$0xff]
        %v971 = vld [vmem:[%s639 + $0x10] sm:$0xff]
        %v972 = vld [vmem:[%s639 + $0x18] sm:$0xff]
        %v973 = vld [vmem:[%s647] sm:$0xff]
        %v974 = vld [vmem:[%s647 + $0x8] sm:$0xff]
        %v975 = vld [vmem:[%s647 + $0x10] sm:$0xff]
        %v976 = vld [vmem:[%s647 + $0x18] sm:$0xff]
        %v977 = vld [vmem:[%s652] sm:$0xff]
        %v978 = vld [vmem:[%s652 + $0x8] sm:$0xff]
        %v979 = vld [vmem:[%s652 + $0x10] sm:$0xff]
        %v980 = vld [vmem:[%s652 + $0x18] sm:$0xff]
        %v981 = vld [vmem:[%s660] sm:$0xff]
        %v982 = vld [vmem:[%s660 + $0x8] sm:$0xff]
        %v983 = vld [vmem:[%s660 + $0x10] sm:$0xff]
        %v984 = vld [vmem:[%s660 + $0x18] sm:$0xff]
        %v985 = vld [vmem:[%s660 + $0x20] sm:$0xff]
        %v986 = vld [vmem:[%s660 + $0x28] sm:$0xff]
        %v987 = vld [vmem:[%s660 + $0x30] sm:$0xff]
        %v988 = vld [vmem:[%s660 + $0x38] sm:$0xff]
        %v989 = vld [vmem:[%s664] sm:$0x1]
        %v990 = vld [vmem:[%s664 + $0x1] sm:$0x1]
        %v991 = vld [vmem:[%s664 + $0x2] sm:$0x1]
        %v992 = vld [vmem:[%s664 + $0x3] sm:$0x1]
        %v993 = vld [vmem:[%s664 + $0x4] sm:$0x1]
        %v994 = vld [vmem:[%s664 + $0x5] sm:$0x1]
        %v995 = vld [vmem:[%s634] sm:$0x1]
        %v997 = vlaneseq
        %v998 = vshrl.u32 %v997, 7
        %v999 = vsub.s32 0, %v998
        %v1000 = vrot.slane %v995, %v999
        %vm1002 = vcmask 261120
        %v1004 = vsel %vm1002, %v964, 0
        %1006 = vmatprep.subr.mxu0 0.0
        %1007 = vmatpush1.msra.mxu0 0.0
        %1008 = vmatprep.subr.mxu0 0.0
        %1009 = vmatpush1.msra.mxu0 0.0
        %1010 = vmatprep.subr.mxu0 0.0
        %1011 = vmatpush1.msra.mxu0 0.0
        %1012 = vmatprep.subr.mxu0 0.0
        %1013 = vmatpush1.msra.mxu0 0.0
        %1014 = vmatprep.subr.mxu0 0.0
        %1015 = vmatpush1.msra.mxu0 0.0
        %1016 = vmatprep.subr.mxu0 0.0
        %1017 = vmatpush1.msra.mxu0 0.0
        %1018 = vmatprep.subr.mxu0 0.0
        %1019 = vmatpush1.msra.mxu0 0.0
        %1020 = vmatprep.subr.mxu0 0.0
        %1021 = vmatpush1.msra.mxu0 0.0
        %1022 = vmatprep.subr.mxu0 0.0
        %1023 = vmatpush1.msra.mxu0 0.0
        %1024 = vmatprep.subr.mxu0 0.0
        %1025 = vmatpush1.msra.mxu0 0.0
        %1026 = vmatprep.subr.mxu0 0.0
        %1027 = vmatpush1.msra.mxu0 0.0
        %1028 = vmatprep.subr.mxu0 0.0
        %1029 = vmatpush1.msra.mxu0 0.0
        %1030 = vmatprep.subr.mxu0 0.0
        %1031 = vmatpush1.msra.mxu0 %v968
        %1032 = vmatprep.subr.mxu0 0.0
        %1033 = vmatpush1.msra.mxu0 %v967
        %1034 = vmatprep.subr.mxu0 0.0
        %1035 = vmatpush1.msra.mxu0 %v966
        %1036 = vmatprep.subr.mxu0 0.0
        %1037 = vmatpush1.msra.mxu0 %v965
        %1038 = vmatprep.subr.mxu0 0.0
        %1039 = vmatpush2.msra.mxu0 0.0
        %1040 = vmatprep.subr.mxu0 0.0
        %1041 = vmatpush2.msra.mxu0 0.0
        %1042 = vmatprep.subr.mxu0 0.0
        %1043 = vmatpush2.msra.mxu0 0.0
        %1044 = vmatprep.subr.mxu0 0.0
        %1045 = vmatpush2.msra.mxu0 0.0
        %1046 = vmatprep.subr.mxu0 0.0
        %1047 = vmatpush2.msra.mxu0 0.0
        %1048 = vmatprep.subr.mxu0 0.0
        %1049 = vmatpush2.msra.mxu0 0.0
        %1050 = vmatprep.subr.mxu0 0.0
        %1051 = vmatpush2.msra.mxu0 0.0
        %1052 = vmatprep.subr.mxu0 0.0
        %1053 = vmatpush2.msra.mxu0 0.0
        %1054 = vmatprep.subr.mxu0 0.0
        %1055 = vmatpush2.msra.mxu0 0.0
        %1056 = vmatprep.subr.mxu0 0.0
        %1057 = vmatpush2.msra.mxu0 0.0
        %1058 = vmatprep.subr.mxu0 0.0
        %1059 = vmatpush2.msra.mxu0 0.0
        %1060 = vmatprep.subr.mxu0 0.0
        %1061 = vmatpush2.msra.mxu0 0.0
        %1062 = vmatprep.subr.mxu0 0.0
        %1063 = vmatpush2.msra.mxu0 0.0
        %1064 = vmatprep.subr.mxu0 0.0
        %1065 = vmatpush2.msra.mxu0 0.0
        %1066 = vmatprep.subr.mxu0 0.0
        %1067 = vmatpush2.msra.mxu0 0.0
        %1068 = vmatprep.subr.mxu0 0.0
        %1069 = vmatpush2.msra.mxu0 0.0
        %1070 = vmatprep.mubr.f32.mxu0 0.0
        %1071 = vmatmul.mubr.f32.gmra.mxu0 %v1004
        %v1072 = vpop.f32.mrf.mxu0
        %v1073 = vadd.f32 %v1000, %v1072
        %v1074 = vpop.f32.mrf.mxu0
        %1075 = vdwg.mxu0
        %v1076 = vmul.f32 %v1073, 0.35355338
        %v1077 = vld [vmem:[%s642] sm:$0x1]
        %v1079 = vlaneseq
        %v1080 = vshrl.u32 %v1079, 7
        %v1081 = vsub.s32 0, %v1080
        %v1082 = vrot.slane %v1077, %v1081
        %1084 = vmatprep.subr.mxu0 0.0
        %1085 = vmatpush1.msra.mxu0 0.0
        %1086 = vmatprep.subr.mxu0 0.0
        %1087 = vmatpush1.msra.mxu0 0.0
        %1088 = vmatprep.subr.mxu0 0.0
        %1089 = vmatpush1.msra.mxu0 0.0
        %1090 = vmatprep.subr.mxu0 0.0
        %1091 = vmatpush1.msra.mxu0 0.0
        %1092 = vmatprep.subr.mxu0 0.0
        %1093 = vmatpush1.msra.mxu0 0.0
        %1094 = vmatprep.subr.mxu0 0.0
        %1095 = vmatpush1.msra.mxu0 0.0
        %1096 = vmatprep.subr.mxu0 0.0
        %1097 = vmatpush1.msra.mxu0 0.0
        %1098 = vmatprep.subr.mxu0 0.0
        %1099 = vmatpush1.msra.mxu0 0.0
        %1100 = vmatprep.subr.mxu0 0.0
        %1101 = vmatpush1.msra.mxu0 0.0
        %1102 = vmatprep.subr.mxu0 0.0
        %1103 = vmatpush1.msra.mxu0 0.0
        %1104 = vmatprep.subr.mxu0 0.0
        %1105 = vmatpush1.msra.mxu0 0.0
        %1106 = vmatprep.subr.mxu0 0.0
        %1107 = vmatpush1.msra.mxu0 0.0
        %1108 = vmatprep.subr.mxu0 0.0
        %1109 = vmatpush1.msra.mxu0 %v972
        %1110 = vmatprep.subr.mxu0 0.0
        %1111 = vmatpush1.msra.mxu0 %v971
        %1112 = vmatprep.subr.mxu0 0.0
        %1113 = vmatpush1.msra.mxu0 %v970
        %1114 = vmatprep.subr.mxu0 0.0
        %1115 = vmatpush1.msra.mxu0 %v969
        %1116 = vmatprep.subr.mxu0 0.0
        %1117 = vmatpush2.msra.mxu0 0.0
        %1118 = vmatprep.subr.mxu0 0.0
        %1119 = vmatpush2.msra.mxu0 0.0
        %1120 = vmatprep.subr.mxu0 0.0
        %1121 = vmatpush2.msra.mxu0 0.0
        %1122 = vmatprep.subr.mxu0 0.0
        %1123 = vmatpush2.msra.mxu0 0.0
        %1124 = vmatprep.subr.mxu0 0.0
        %1125 = vmatpush2.msra.mxu0 0.0
        %1126 = vmatprep.subr.mxu0 0.0
        %1127 = vmatpush2.msra.mxu0 0.0
        %1128 = vmatprep.subr.mxu0 0.0
        %1129 = vmatpush2.msra.mxu0 0.0
        %1130 = vmatprep.subr.mxu0 0.0
        %1131 = vmatpush2.msra.mxu0 0.0
        %1132 = vmatprep.subr.mxu0 0.0
        %1133 = vmatpush2.msra.mxu0 0.0
        %1134 = vmatprep.subr.mxu0 0.0
        %1135 = vmatpush2.msra.mxu0 0.0
        %1136 = vmatprep.subr.mxu0 0.0
        %1137 = vmatpush2.msra.mxu0 0.0
        %1138 = vmatprep.subr.mxu0 0.0
        %1139 = vmatpush2.msra.mxu0 0.0
        %1140 = vmatprep.subr.mxu0 0.0
        %1141 = vmatpush2.msra.mxu0 0.0
        %1142 = vmatprep.subr.mxu0 0.0
        %1143 = vmatpush2.msra.mxu0 0.0
        %1144 = vmatprep.subr.mxu0 0.0
        %1145 = vmatpush2.msra.mxu0 0.0
        %1146 = vmatprep.subr.mxu0 0.0
        %1147 = vmatpush2.msra.mxu0 0.0
        %1148 = vmatprep.mubr.f32.mxu0 0.0
        %1149 = vmatmul.mubr.f32.gmra.mxu0 %v1004
        %v1150 = vpop.f32.mrf.mxu0
        %v1151 = vadd.f32 %v1082, %v1150
        %v1152 = vpop.f32.mrf.mxu0
        %1153 = vdwg.mxu0
        %1155 = vrot.lane.b32.xlu0 %v1073, 96
        %v1156 = vpop.permute.xlu0 %1155
        %vm1157 = vcmask 64512
        %v1159 = vsel %vm1157, %v1076, 0
        %v1161 = vsel %vm1157, %v1156, 0
        %1163 = vmatprep.subr.mxu0 0.0
        %1164 = vmatpush1.xpose.msra.mxu0 0.0
        %1165 = vmatprep.subr.mxu0 0.0
        %1166 = vmatpush1.xpose.msra.mxu0 0.0
        %1167 = vmatprep.subr.mxu0 0.0
        %1168 = vmatpush1.xpose.msra.mxu0 0.0
        %1169 = vmatprep.subr.mxu0 0.0
        %1170 = vmatpush1.xpose.msra.mxu0 0.0
        %1171 = vmatprep.subr.mxu0 0.0
        %1172 = vmatpush1.xpose.msra.mxu0 0.0
        %1173 = vmatprep.subr.mxu0 0.0
        %1174 = vmatpush1.xpose.msra.mxu0 0.0
        %1175 = vmatprep.subr.mxu0 0.0
        %1176 = vmatpush1.xpose.msra.mxu0 0.0
        %1177 = vmatprep.subr.mxu0 0.0
        %1178 = vmatpush1.xpose.msra.mxu0 0.0
        %1179 = vmatprep.subr.mxu0 0.0
        %1180 = vmatpush1.xpose.msra.mxu0 0.0
        %1181 = vmatprep.subr.mxu0 0.0
        %1182 = vmatpush1.xpose.msra.mxu0 0.0
        %1183 = vmatprep.subr.mxu0 0.0
        %1184 = vmatpush1.xpose.msra.mxu0 0.0
        %1185 = vmatprep.subr.mxu0 0.0
        %1186 = vmatpush1.xpose.msra.mxu0 0.0
        %1187 = vmatprep.subr.mxu0 0.0
        %1188 = vmatpush1.xpose.msra.mxu0 0.0
        %1189 = vmatprep.subr.mxu0 0.0
        %1190 = vmatpush1.xpose.msra.mxu0 0.0
        %1191 = vmatprep.subr.mxu0 0.0
        %1192 = vmatpush1.xpose.msra.mxu0 0.0
        %1193 = vmatprep.subr.mxu0 0.0
        %1194 = vmatpush1.xpose.msra.mxu0 %v1161
        %1195 = vmatprep.subr.mxu0 0.0
        %1196 = vmatpush2.xpose.msra.mxu0 0.0
        %1197 = vmatprep.subr.mxu0 0.0
        %1198 = vmatpush2.xpose.msra.mxu0 0.0
        %1199 = vmatprep.subr.mxu0 0.0
        %1200 = vmatpush2.xpose.msra.mxu0 0.0
        %1201 = vmatprep.subr.mxu0 0.0
        %1202 = vmatpush2.xpose.msra.mxu0 0.0
        %1203 = vmatprep.subr.mxu0 0.0
        %1204 = vmatpush2.xpose.msra.mxu0 0.0
        %1205 = vmatprep.subr.mxu0 0.0
        %1206 = vmatpush2.xpose.msra.mxu0 0.0
        %1207 = vmatprep.subr.mxu0 0.0
        %1208 = vmatpush2.xpose.msra.mxu0 0.0
        %1209 = vmatprep.subr.mxu0 0.0
        %1210 = vmatpush2.xpose.msra.mxu0 0.0
        %1211 = vmatprep.subr.mxu0 0.0
        %1212 = vmatpush2.xpose.msra.mxu0 0.0
        %1213 = vmatprep.subr.mxu0 0.0
        %1214 = vmatpush2.xpose.msra.mxu0 0.0
        %1215 = vmatprep.subr.mxu0 0.0
        %1216 = vmatpush2.xpose.msra.mxu0 0.0
        %1217 = vmatprep.subr.mxu0 0.0
        %1218 = vmatpush2.xpose.msra.mxu0 0.0
        %1219 = vmatprep.subr.mxu0 0.0
        %1220 = vmatpush2.xpose.msra.mxu0 0.0
        %1221 = vmatprep.subr.mxu0 0.0
        %1222 = vmatpush2.xpose.msra.mxu0 0.0
        %1223 = vmatprep.subr.mxu0 0.0
        %1224 = vmatpush2.xpose.msra.mxu0 0.0
        %1225 = vmatprep.subr.mxu0 0.0
        %1226 = vmatpush2.xpose.msra.mxu0 0.0
        %1227 = vmatprep.mubr.f32.mxu0 0.0
        %1228 = vmatmul.mubr.f32.gmra.mxu0 %v1159
        %v1229 = vpop.f32.mrf.mxu0
        %v1230 = vadd.f32 0.0, %v1229
        %v1231 = vpop.f32.mrf.mxu0
        %1232 = vdwg.mxu0
        %1234 = vset.pattern.permute.xlu0 1
        %1235 = vperm.xlu0 %1234, %v1151
        %v1236 = vpop.permute.xlu0 %1235
        %v1238 = vmul.f32 %v1236, %v953
        %1239 = vset.pattern.permute.xlu0 0
        %1240 = vperm.xlu0 %1239, %v1151
        %v1241 = vpop.permute.xlu0 %1240
        %v1243 = vadd.f32 %v1241, %v1238
        %1244 = vset.pattern.permute.xlu0 2
        %1245 = vperm.xlu0 %1244, %v1151
        %v1246 = vpop.permute.xlu0 %1245
        %v1248 = vmul.f32 %v1246, %v955
        %v1249 = vadd.f32 %v1243, %v1248
        %1250 = vset.pattern.permute.xlu0 3
        %1251 = vperm.xlu0 %1250, %v1151
        %v1252 = vpop.permute.xlu0 %1251
        %v1254 = vmul.f32 %v1252, %v957
        %v1255 = vadd.f32 %v1249, %v1254
        %1256 = vset.pattern.permute.xlu0 4
        %1257 = vperm.xlu0 %1256, %v1151
        %v1258 = vpop.permute.xlu0 %1257
        %v1260 = vmul.f32 %v1258, %v959
        %v1261 = vadd.f32 %v1255, %v1260
        %1262 = vset.pattern.permute.xlu0 5
        %1263 = vperm.xlu0 %1262, %v1151
        %v1264 = vpop.permute.xlu0 %1263
        %v1266 = vmul.f32 %v1264, %v961
        %v1267 = vadd.f32 %v1261, %v1266
        %v1268 = vxor.u32 %v1267, 2147483648
        %v1269 = vmul.f32 %v1268, 1.442695
        %v1270 = vpow.pop %v1269
        %v1271 = vadd.f32 %v1270, 1.0
        %v1272 = vrcp.pop %v1271
        %v1273 = vmul.f32 1.0, %v1272
        %v1274 = vsel %vm952, 1, 0
        %v1275 = vlaneseq
        %v1276 = vshrl.u32 %v1275, 7
        %v1277 = vsub.s32 0, %v1276
        %v1278 = vrot.slane %v1274, %v1277
        %vm1279 = vcmp.eq.s32.totalorder %v1278, 1
        %v1280 = vsel %vm1279, -1e+30, %v1230
        %v1281 = vsel %vm1279, 0.0, %v1273
        %v1282 = vmax.f32 %v1281, 1e-06
        %v1283 = vlog2.pop %v1282
        %v1284 = vmul.f32 %v1283, 0.6931472
        %v1285 = vadd.f32 %v1284, %v1280
        %v1286 = vsel %vm1157, %v1285, -inf
        %1287 = vmax.xlane.f32.xlu0 %v1286
        %v1288 = vpop.xlane.xlu0 %1287
        %v1289 = vsub.f32 %v1285, %v1288
        %v1290 = vmul.f32 %v1289, 1.442695
        %v1291 = vpow.pop %v1290
        %v1292 = vsel %vm1157, %v1291, 0.0
        %1293 = vadd.xlane.f32.xlu0 %v1292
        %v1294 = vpop.xlane.xlu0 %1293
        %v1295 = vrcp.pop %v1294
        %v1296 = vmul.f32 %v1291, %v1295
        %1297 = vrot.lane.b32.xlu0 %v1073, 64
        %v1298 = vpop.permute.xlu0 %1297
        %v1301 = vsel %vm1157, %v1296, 0
        %1303 = vmatprep.subr.mxu0 0.0
        %1304 = vmatpush1.msra.mxu0 0.0
        %1305 = vmatprep.subr.mxu0 0.0
        %1306 = vmatpush1.msra.mxu0 0.0
        %1307 = vmatprep.subr.mxu0 0.0
        %1308 = vmatpush1.msra.mxu0 0.0
        %1309 = vmatprep.subr.mxu0 0.0
        %1310 = vmatpush1.msra.mxu0 0.0
        %1311 = vmatprep.subr.mxu0 0.0
        %1312 = vmatpush1.msra.mxu0 0.0
        %1313 = vmatprep.subr.mxu0 0.0
        %1314 = vmatpush1.msra.mxu0 0.0
        %1315 = vmatprep.subr.mxu0 0.0
        %1316 = vmatpush1.msra.mxu0 0.0
        %1317 = vmatprep.subr.mxu0 0.0
        %1318 = vmatpush1.msra.mxu0 0.0
        %1319 = vmatprep.subr.mxu0 0.0
        %1320 = vmatpush1.msra.mxu0 0.0
        %1321 = vmatprep.subr.mxu0 0.0
        %1322 = vmatpush1.msra.mxu0 0.0
        %1323 = vmatprep.subr.mxu0 0.0
        %1324 = vmatpush1.msra.mxu0 0.0
        %1325 = vmatprep.subr.mxu0 0.0
        %1326 = vmatpush1.msra.mxu0 0.0
        %1327 = vmatprep.subr.mxu0 0.0
        %1328 = vmatpush1.msra.mxu0 0.0
        %1329 = vmatprep.subr.mxu0 0.0
        %1330 = vmatpush1.msra.mxu0 0.0
        %1331 = vmatprep.subr.mxu0 0.0
        %1332 = vmatpush1.msra.mxu0 0.0
        %1333 = vmatprep.subr.mxu0 0.0
        %1334 = vmatpush1.msra.mxu0 %v1298
        %1335 = vmatprep.subr.mxu0 0.0
        %1336 = vmatpush2.msra.mxu0 0.0
        %1337 = vmatprep.subr.mxu0 0.0
        %1338 = vmatpush2.msra.mxu0 0.0
        %1339 = vmatprep.subr.mxu0 0.0
        %1340 = vmatpush2.msra.mxu0 0.0
        %1341 = vmatprep.subr.mxu0 0.0
        %1342 = vmatpush2.msra.mxu0 0.0
        %1343 = vmatprep.subr.mxu0 0.0
        %1344 = vmatpush2.msra.mxu0 0.0
        %1345 = vmatprep.subr.mxu0 0.0
        %1346 = vmatpush2.msra.mxu0 0.0
        %1347 = vmatprep.subr.mxu0 0.0
        %1348 = vmatpush2.msra.mxu0 0.0
        %1349 = vmatprep.subr.mxu0 0.0
        %1350 = vmatpush2.msra.mxu0 0.0
        %1351 = vmatprep.subr.mxu0 0.0
        %1352 = vmatpush2.msra.mxu0 0.0
        %1353 = vmatprep.subr.mxu0 0.0
        %1354 = vmatpush2.msra.mxu0 0.0
        %1355 = vmatprep.subr.mxu0 0.0
        %1356 = vmatpush2.msra.mxu0 0.0
        %1357 = vmatprep.subr.mxu0 0.0
        %1358 = vmatpush2.msra.mxu0 0.0
        %1359 = vmatprep.subr.mxu0 0.0
        %1360 = vmatpush2.msra.mxu0 0.0
        %1361 = vmatprep.subr.mxu0 0.0
        %1362 = vmatpush2.msra.mxu0 0.0
        %1363 = vmatprep.subr.mxu0 0.0
        %1364 = vmatpush2.msra.mxu0 0.0
        %1365 = vmatprep.subr.mxu0 0.0
        %1366 = vmatpush2.msra.mxu0 0.0
        %1367 = vmatprep.mubr.f32.mxu0 0.0
        %1368 = vmatmul.mubr.f32.gmra.mxu0 %v1301
        %v1369 = vpop.f32.mrf.mxu0
        %v1370 = vadd.f32 0.0, %v1369
        %v1371 = vpop.f32.mrf.mxu0
        %1372 = vdwg.mxu0
        %1373 = vrot.lane.b32.xlu0 %v1076, 120
        %v1374 = vpop.permute.xlu0 %1373
        %1375 = vrot.lane.b32.xlu0 %v1073, 88
        %v1376 = vpop.permute.xlu0 %1375
        %v1377 = vsel %vm1157, %v1374, 0
        %v1379 = vsel %vm1157, %v1376, 0
        %1381 = vmatprep.subr.mxu0 0.0
        %1382 = vmatpush1.xpose.msra.mxu0 0.0
        %1383 = vmatprep.subr.mxu0 0.0
        %1384 = vmatpush1.xpose.msra.mxu0 0.0
        %1385 = vmatprep.subr.mxu0 0.0
        %1386 = vmatpush1.xpose.msra.mxu0 0.0
        %1387 = vmatprep.subr.mxu0 0.0
        %1388 = vmatpush1.xpose.msra.mxu0 0.0
        %1389 = vmatprep.subr.mxu0 0.0
        %1390 = vmatpush1.xpose.msra.mxu0 0.0
        %1391 = vmatprep.subr.mxu0 0.0
        %1392 = vmatpush1.xpose.msra.mxu0 0.0
        %1393 = vmatprep.subr.mxu0 0.0
        %1394 = vmatpush1.xpose.msra.mxu0 0.0
        %1395 = vmatprep.subr.mxu0 0.0
        %1396 = vmatpush1.xpose.msra.mxu0 0.0
        %1397 = vmatprep.subr.mxu0 0.0
        %1398 = vmatpush1.xpose.msra.mxu0 0.0
        %1399 = vmatprep.subr.mxu0 0.0
        %1400 = vmatpush1.xpose.msra.mxu0 0.0
        %1401 = vmatprep.subr.mxu0 0.0
        %1402 = vmatpush1.xpose.msra.mxu0 0.0
        %1403 = vmatprep.subr.mxu0 0.0
        %1404 = vmatpush1.xpose.msra.mxu0 0.0
        %1405 = vmatprep.subr.mxu0 0.0
        %1406 = vmatpush1.xpose.msra.mxu0 0.0
        %1407 = vmatprep.subr.mxu0 0.0
        %1408 = vmatpush1.xpose.msra.mxu0 0.0
        %1409 = vmatprep.subr.mxu0 0.0
        %1410 = vmatpush1.xpose.msra.mxu0 0.0
        %1411 = vmatprep.subr.mxu0 0.0
        %1412 = vmatpush1.xpose.msra.mxu0 %v1379
        %1413 = vmatprep.subr.mxu0 0.0
        %1414 = vmatpush2.xpose.msra.mxu0 0.0
        %1415 = vmatprep.subr.mxu0 0.0
        %1416 = vmatpush2.xpose.msra.mxu0 0.0
        %1417 = vmatprep.subr.mxu0 0.0
        %1418 = vmatpush2.xpose.msra.mxu0 0.0
        %1419 = vmatprep.subr.mxu0 0.0
        %1420 = vmatpush2.xpose.msra.mxu0 0.0
        %1421 = vmatprep.subr.mxu0 0.0
        %1422 = vmatpush2.xpose.msra.mxu0 0.0
        %1423 = vmatprep.subr.mxu0 0.0
        %1424 = vmatpush2.xpose.msra.mxu0 0.0
        %1425 = vmatprep.subr.mxu0 0.0
        %1426 = vmatpush2.xpose.msra.mxu0 0.0
        %1427 = vmatprep.subr.mxu0 0.0
        %1428 = vmatpush2.xpose.msra.mxu0 0.0
        %1429 = vmatprep.subr.mxu0 0.0
        %1430 = vmatpush2.xpose.msra.mxu0 0.0
        %1431 = vmatprep.subr.mxu0 0.0
        %1432 = vmatpush2.xpose.msra.mxu0 0.0
        %1433 = vmatprep.subr.mxu0 0.0
        %1434 = vmatpush2.xpose.msra.mxu0 0.0
        %1435 = vmatprep.subr.mxu0 0.0
        %1436 = vmatpush2.xpose.msra.mxu0 0.0
        %1437 = vmatprep.subr.mxu0 0.0
        %1438 = vmatpush2.xpose.msra.mxu0 0.0
        %1439 = vmatprep.subr.mxu0 0.0
        %1440 = vmatpush2.xpose.msra.mxu0 0.0
        %1441 = vmatprep.subr.mxu0 0.0
        %1442 = vmatpush2.xpose.msra.mxu0 0.0
        %1443 = vmatprep.subr.mxu0 0.0
        %1444 = vmatpush2.xpose.msra.mxu0 0.0
        %1445 = vmatprep.mubr.f32.mxu0 0.0
        %1446 = vmatmul.mubr.f32.gmra.mxu0 %v1377
        %v1447 = vpop.f32.mrf.mxu0
        %v1448 = vadd.f32 0.0, %v1447
        %v1449 = vpop.f32.mrf.mxu0
        %1450 = vdwg.mxu0
        %1451 = vset.pattern.permute.xlu0 7
        %1452 = vperm.xlu0 %1451, %v1151
        %v1453 = vpop.permute.xlu0 %1452
        %v1455 = vmul.f32 %v1453, %v953
        %1456 = vset.pattern.permute.xlu0 6
        %1457 = vperm.xlu0 %1456, %v1151
        %v1458 = vpop.permute.xlu0 %1457
        %v1460 = vadd.f32 %v1458, %v1455
        %1461 = vset.pattern.permute.xlu0 8
        %1462 = vperm.xlu0 %1461, %v1151
        %v1463 = vpop.permute.xlu0 %1462
        %v1465 = vmul.f32 %v1463, %v955
        %v1466 = vadd.f32 %v1460, %v1465
        %1467 = vset.pattern.permute.xlu0 9
        %1468 = vperm.xlu0 %1467, %v1151
        %v1469 = vpop.permute.xlu0 %1468
        %v1471 = vmul.f32 %v1469, %v957
        %v1472 = vadd.f32 %v1466, %v1471
        %1473 = vset.pattern.permute.xlu0 10
        %1474 = vperm.xlu0 %1473, %v1151
        %v1475 = vpop.permute.xlu0 %1474
        %v1477 = vmul.f32 %v1475, %v959
        %v1478 = vadd.f32 %v1472, %v1477
        %1479 = vset.pattern.permute.xlu0 11
        %1480 = vperm.xlu0 %1479, %v1151
        %v1481 = vpop.permute.xlu0 %1480
        %v1483 = vmul.f32 %v1481, %v961
        %v1484 = vadd.f32 %v1478, %v1483
        %v1485 = vxor.u32 %v1484, 2147483648
        %v1486 = vmul.f32 %v1485, 1.442695
        %v1487 = vpow.pop %v1486
        %v1488 = vadd.f32 %v1487, 1.0
        %v1489 = vrcp.pop %v1488
        %v1490 = vmul.f32 1.0, %v1489
        %v1491 = vsel %vm1279, -1e+30, %v1448
        %v1492 = vsel %vm1279, 0.0, %v1490
        %v1493 = vmax.f32 %v1492, 1e-06
        %v1494 = vlog2.pop %v1493
        %v1495 = vmul.f32 %v1494, 0.6931472
        %v1496 = vadd.f32 %v1495, %v1491
        %v1497 = vsel %vm1157, %v1496, -inf
        %1498 = vmax.xlane.f32.xlu0 %v1497
        %v1499 = vpop.xlane.xlu0 %1498
        %v1500 = vsub.f32 %v1496, %v1499
        %v1501 = vmul.f32 %v1500, 1.442695
        %v1502 = vpow.pop %v1501
        %v1503 = vsel %vm1157, %v1502, 0.0
        %1504 = vadd.xlane.f32.xlu0 %v1503
        %v1505 = vpop.xlane.xlu0 %1504
        %v1506 = vrcp.pop %v1505
        %v1507 = vmul.f32 %v1502, %v1506
        %1508 = vrot.lane.b32.xlu0 %v1073, 56
        %v1509 = vpop.permute.xlu0 %1508
        %v1512 = vsel %vm1157, %v1507, 0
        %1514 = vmatprep.subr.mxu0 0.0
        %1515 = vmatpush1.msra.mxu0 0.0
        %1516 = vmatprep.subr.mxu0 0.0
        %1517 = vmatpush1.msra.mxu0 0.0
        %1518 = vmatprep.subr.mxu0 0.0
        %1519 = vmatpush1.msra.mxu0 0.0
        %1520 = vmatprep.subr.mxu0 0.0
        %1521 = vmatpush1.msra.mxu0 0.0
        %1522 = vmatprep.subr.mxu0 0.0
        %1523 = vmatpush1.msra.mxu0 0.0
        %1524 = vmatprep.subr.mxu0 0.0
        %1525 = vmatpush1.msra.mxu0 0.0
        %1526 = vmatprep.subr.mxu0 0.0
        %1527 = vmatpush1.msra.mxu0 0.0
        %1528 = vmatprep.subr.mxu0 0.0
        %1529 = vmatpush1.msra.mxu0 0.0
        %1530 = vmatprep.subr.mxu0 0.0
        %1531 = vmatpush1.msra.mxu0 0.0
        %1532 = vmatprep.subr.mxu0 0.0
        %1533 = vmatpush1.msra.mxu0 0.0
        %1534 = vmatprep.subr.mxu0 0.0
        %1535 = vmatpush1.msra.mxu0 0.0
        %1536 = vmatprep.subr.mxu0 0.0
        %1537 = vmatpush1.msra.mxu0 0.0
        %1538 = vmatprep.subr.mxu0 0.0
        %1539 = vmatpush1.msra.mxu0 0.0
        %1540 = vmatprep.subr.mxu0 0.0
        %1541 = vmatpush1.msra.mxu0 0.0
        %1542 = vmatprep.subr.mxu0 0.0
        %1543 = vmatpush1.msra.mxu0 0.0
        %1544 = vmatprep.subr.mxu0 0.0
        %1545 = vmatpush1.msra.mxu0 %v1509
        %1546 = vmatprep.subr.mxu0 0.0
        %1547 = vmatpush2.msra.mxu0 0.0
        %1548 = vmatprep.subr.mxu0 0.0
        %1549 = vmatpush2.msra.mxu0 0.0
        %1550 = vmatprep.subr.mxu0 0.0
        %1551 = vmatpush2.msra.mxu0 0.0
        %1552 = vmatprep.subr.mxu0 0.0
        %1553 = vmatpush2.msra.mxu0 0.0
        %1554 = vmatprep.subr.mxu0 0.0
        %1555 = vmatpush2.msra.mxu0 0.0
        %1556 = vmatprep.subr.mxu0 0.0
        %1557 = vmatpush2.msra.mxu0 0.0
        %1558 = vmatprep.subr.mxu0 0.0
        %1559 = vmatpush2.msra.mxu0 0.0
        %1560 = vmatprep.subr.mxu0 0.0
        %1561 = vmatpush2.msra.mxu0 0.0
        %1562 = vmatprep.subr.mxu0 0.0
        %1563 = vmatpush2.msra.mxu0 0.0
        %1564 = vmatprep.subr.mxu0 0.0
        %1565 = vmatpush2.msra.mxu0 0.0
        %1566 = vmatprep.subr.mxu0 0.0
        %1567 = vmatpush2.msra.mxu0 0.0
        %1568 = vmatprep.subr.mxu0 0.0
        %1569 = vmatpush2.msra.mxu0 0.0
        %1570 = vmatprep.subr.mxu0 0.0
        %1571 = vmatpush2.msra.mxu0 0.0
        %1572 = vmatprep.subr.mxu0 0.0
        %1573 = vmatpush2.msra.mxu0 0.0
        %1574 = vmatprep.subr.mxu0 0.0
        %1575 = vmatpush2.msra.mxu0 0.0
        %1576 = vmatprep.subr.mxu0 0.0
        %1577 = vmatpush2.msra.mxu0 0.0
        %1578 = vmatprep.mubr.f32.mxu0 0.0
        %1579 = vmatmul.mubr.f32.gmra.mxu0 %v1512
        %v1580 = vpop.f32.mrf.mxu0
        %v1581 = vadd.f32 0.0, %v1580
        %v1582 = vpop.f32.mrf.mxu0
        %1583 = vdwg.mxu0
        %1584 = vrot.lane.b32.xlu0 %v1076, 112
        %v1585 = vpop.permute.xlu0 %1584
        %1586 = vrot.lane.b32.xlu0 %v1073, 80
        %v1587 = vpop.permute.xlu0 %1586
        %v1588 = vsel %vm1157, %v1585, 0
        %v1590 = vsel %vm1157, %v1587, 0
        %1592 = vmatprep.subr.mxu0 0.0
        %1593 = vmatpush1.xpose.msra.mxu0 0.0
        %1594 = vmatprep.subr.mxu0 0.0
        %1595 = vmatpush1.xpose.msra.mxu0 0.0
        %1596 = vmatprep.subr.mxu0 0.0
        %1597 = vmatpush1.xpose.msra.mxu0 0.0
        %1598 = vmatprep.subr.mxu0 0.0
        %1599 = vmatpush1.xpose.msra.mxu0 0.0
        %1600 = vmatprep.subr.mxu0 0.0
        %1601 = vmatpush1.xpose.msra.mxu0 0.0
        %1602 = vmatprep.subr.mxu0 0.0
        %1603 = vmatpush1.xpose.msra.mxu0 0.0
        %1604 = vmatprep.subr.mxu0 0.0
        %1605 = vmatpush1.xpose.msra.mxu0 0.0
        %1606 = vmatprep.subr.mxu0 0.0
        %1607 = vmatpush1.xpose.msra.mxu0 0.0
        %1608 = vmatprep.subr.mxu0 0.0
        %1609 = vmatpush1.xpose.msra.mxu0 0.0
        %1610 = vmatprep.subr.mxu0 0.0
        %1611 = vmatpush1.xpose.msra.mxu0 0.0
        %1612 = vmatprep.subr.mxu0 0.0
        %1613 = vmatpush1.xpose.msra.mxu0 0.0
        %1614 = vmatprep.subr.mxu0 0.0
        %1615 = vmatpush1.xpose.msra.mxu0 0.0
        %1616 = vmatprep.subr.mxu0 0.0
        %1617 = vmatpush1.xpose.msra.mxu0 0.0
        %1618 = vmatprep.subr.mxu0 0.0
        %1619 = vmatpush1.xpose.msra.mxu0 0.0
        %1620 = vmatprep.subr.mxu0 0.0
        %1621 = vmatpush1.xpose.msra.mxu0 0.0
        %1622 = vmatprep.subr.mxu0 0.0
        %1623 = vmatpush1.xpose.msra.mxu0 %v1590
        %1624 = vmatprep.subr.mxu0 0.0
        %1625 = vmatpush2.xpose.msra.mxu0 0.0
        %1626 = vmatprep.subr.mxu0 0.0
        %1627 = vmatpush2.xpose.msra.mxu0 0.0
        %1628 = vmatprep.subr.mxu0 0.0
        %1629 = vmatpush2.xpose.msra.mxu0 0.0
        %1630 = vmatprep.subr.mxu0 0.0
        %1631 = vmatpush2.xpose.msra.mxu0 0.0
        %1632 = vmatprep.subr.mxu0 0.0
        %1633 = vmatpush2.xpose.msra.mxu0 0.0
        %1634 = vmatprep.subr.mxu0 0.0
        %1635 = vmatpush2.xpose.msra.mxu0 0.0
        %1636 = vmatprep.subr.mxu0 0.0
        %1637 = vmatpush2.xpose.msra.mxu0 0.0
        %1638 = vmatprep.subr.mxu0 0.0
        %1639 = vmatpush2.xpose.msra.mxu0 0.0
        %1640 = vmatprep.subr.mxu0 0.0
        %1641 = vmatpush2.xpose.msra.mxu0 0.0
        %1642 = vmatprep.subr.mxu0 0.0
        %1643 = vmatpush2.xpose.msra.mxu0 0.0
        %1644 = vmatprep.subr.mxu0 0.0
        %1645 = vmatpush2.xpose.msra.mxu0 0.0
        %1646 = vmatprep.subr.mxu0 0.0
        %1647 = vmatpush2.xpose.msra.mxu0 0.0
        %1648 = vmatprep.subr.mxu0 0.0
        %1649 = vmatpush2.xpose.msra.mxu0 0.0
        %1650 = vmatprep.subr.mxu0 0.0
        %1651 = vmatpush2.xpose.msra.mxu0 0.0
        %1652 = vmatprep.subr.mxu0 0.0
        %1653 = vmatpush2.xpose.msra.mxu0 0.0
        %1654 = vmatprep.subr.mxu0 0.0
        %1655 = vmatpush2.xpose.msra.mxu0 0.0
        %1656 = vmatprep.mubr.f32.mxu0 0.0
        %1657 = vmatmul.mubr.f32.gmra.mxu0 %v1588
        %v1658 = vpop.f32.mrf.mxu0
        %v1659 = vadd.f32 0.0, %v1658
        %v1660 = vpop.f32.mrf.mxu0
        %1661 = vdwg.mxu0
        %1662 = vset.pattern.permute.xlu0 13
        %1663 = vperm.xlu0 %1662, %v1151
        %v1664 = vpop.permute.xlu0 %1663
        %v1666 = vmul.f32 %v1664, %v953
        %1667 = vset.pattern.permute.xlu0 12
        %1668 = vperm.xlu0 %1667, %v1151
        %v1669 = vpop.permute.xlu0 %1668
        %v1671 = vadd.f32 %v1669, %v1666
        %1672 = vset.pattern.permute.xlu0 14
        %1673 = vperm.xlu0 %1672, %v1151
        %v1674 = vpop.permute.xlu0 %1673
        %v1676 = vmul.f32 %v1674, %v955
        %v1677 = vadd.f32 %v1671, %v1676
        %1678 = vset.pattern.permute.xlu0 15
        %1679 = vperm.xlu0 %1678, %v1151
        %v1680 = vpop.permute.xlu0 %1679
        %v1682 = vmul.f32 %v1680, %v957
        %v1683 = vadd.f32 %v1677, %v1682
        %1684 = vset.pattern.permute.xlu0 16
        %1685 = vperm.xlu0 %1684, %v1151
        %v1686 = vpop.permute.xlu0 %1685
        %v1688 = vmul.f32 %v1686, %v959
        %v1689 = vadd.f32 %v1683, %v1688
        %1690 = vset.pattern.permute.xlu0 17
        %1691 = vperm.xlu0 %1690, %v1151
        %v1692 = vpop.permute.xlu0 %1691
        %v1694 = vmul.f32 %v1692, %v961
        %v1695 = vadd.f32 %v1689, %v1694
        %v1696 = vxor.u32 %v1695, 2147483648
        %v1697 = vmul.f32 %v1696, 1.442695
        %v1698 = vpow.pop %v1697
        %v1699 = vadd.f32 %v1698, 1.0
        %v1700 = vrcp.pop %v1699
        %v1701 = vmul.f32 1.0, %v1700
        %v1702 = vsel %vm1279, -1e+30, %v1659
        %v1703 = vsel %vm1279, 0.0, %v1701
        %v1704 = vmax.f32 %v1703, 1e-06
        %v1705 = vlog2.pop %v1704
        %v1706 = vmul.f32 %v1705, 0.6931472
        %v1707 = vadd.f32 %v1706, %v1702
        %v1708 = vsel %vm1157, %v1707, -inf
        %1709 = vmax.xlane.f32.xlu0 %v1708
        %v1710 = vpop.xlane.xlu0 %1709
        %v1711 = vsub.f32 %v1707, %v1710
        %v1712 = vmul.f32 %v1711, 1.442695
        %v1713 = vpow.pop %v1712
        %v1714 = vsel %vm1157, %v1713, 0.0
        %1715 = vadd.xlane.f32.xlu0 %v1714
        %v1716 = vpop.xlane.xlu0 %1715
        %v1717 = vrcp.pop %v1716
        %v1718 = vmul.f32 %v1713, %v1717
        %1719 = vrot.lane.b32.xlu0 %v1073, 48
        %v1720 = vpop.permute.xlu0 %1719
        %v1723 = vsel %vm1157, %v1718, 0
        %1725 = vmatprep.subr.mxu0 0.0
        %1726 = vmatpush1.msra.mxu0 0.0
        %1727 = vmatprep.subr.mxu0 0.0
        %1728 = vmatpush1.msra.mxu0 0.0
        %1729 = vmatprep.subr.mxu0 0.0
        %1730 = vmatpush1.msra.mxu0 0.0
        %1731 = vmatprep.subr.mxu0 0.0
        %1732 = vmatpush1.msra.mxu0 0.0
        %1733 = vmatprep.subr.mxu0 0.0
        %1734 = vmatpush1.msra.mxu0 0.0
        %1735 = vmatprep.subr.mxu0 0.0
        %1736 = vmatpush1.msra.mxu0 0.0
        %1737 = vmatprep.subr.mxu0 0.0
        %1738 = vmatpush1.msra.mxu0 0.0
        %1739 = vmatprep.subr.mxu0 0.0
        %1740 = vmatpush1.msra.mxu0 0.0
        %1741 = vmatprep.subr.mxu0 0.0
        %1742 = vmatpush1.msra.mxu0 0.0
        %1743 = vmatprep.subr.mxu0 0.0
        %1744 = vmatpush1.msra.mxu0 0.0
        %1745 = vmatprep.subr.mxu0 0.0
        %1746 = vmatpush1.msra.mxu0 0.0
        %1747 = vmatprep.subr.mxu0 0.0
        %1748 = vmatpush1.msra.mxu0 0.0
        %1749 = vmatprep.subr.mxu0 0.0
        %1750 = vmatpush1.msra.mxu0 0.0
        %1751 = vmatprep.subr.mxu0 0.0
        %1752 = vmatpush1.msra.mxu0 0.0
        %1753 = vmatprep.subr.mxu0 0.0
        %1754 = vmatpush1.msra.mxu0 0.0
        %1755 = vmatprep.subr.mxu0 0.0
        %1756 = vmatpush1.msra.mxu0 %v1720
        %1757 = vmatprep.subr.mxu0 0.0
        %1758 = vmatpush2.msra.mxu0 0.0
        %1759 = vmatprep.subr.mxu0 0.0
        %1760 = vmatpush2.msra.mxu0 0.0
        %1761 = vmatprep.subr.mxu0 0.0
        %1762 = vmatpush2.msra.mxu0 0.0
        %1763 = vmatprep.subr.mxu0 0.0
        %1764 = vmatpush2.msra.mxu0 0.0
        %1765 = vmatprep.subr.mxu0 0.0
        %1766 = vmatpush2.msra.mxu0 0.0
        %1767 = vmatprep.subr.mxu0 0.0
        %1768 = vmatpush2.msra.mxu0 0.0
        %1769 = vmatprep.subr.mxu0 0.0
        %1770 = vmatpush2.msra.mxu0 0.0
        %1771 = vmatprep.subr.mxu0 0.0
        %1772 = vmatpush2.msra.mxu0 0.0
        %1773 = vmatprep.subr.mxu0 0.0
        %1774 = vmatpush2.msra.mxu0 0.0
        %1775 = vmatprep.subr.mxu0 0.0
        %1776 = vmatpush2.msra.mxu0 0.0
        %1777 = vmatprep.subr.mxu0 0.0
        %1778 = vmatpush2.msra.mxu0 0.0
        %1779 = vmatprep.subr.mxu0 0.0
        %1780 = vmatpush2.msra.mxu0 0.0
        %1781 = vmatprep.subr.mxu0 0.0
        %1782 = vmatpush2.msra.mxu0 0.0
        %1783 = vmatprep.subr.mxu0 0.0
        %1784 = vmatpush2.msra.mxu0 0.0
        %1785 = vmatprep.subr.mxu0 0.0
        %1786 = vmatpush2.msra.mxu0 0.0
        %1787 = vmatprep.subr.mxu0 0.0
        %1788 = vmatpush2.msra.mxu0 0.0
        %1789 = vmatprep.mubr.f32.mxu0 0.0
        %1790 = vmatmul.mubr.f32.gmra.mxu0 %v1723
        %v1791 = vpop.f32.mrf.mxu0
        %v1792 = vadd.f32 0.0, %v1791
        %v1793 = vpop.f32.mrf.mxu0
        %1794 = vdwg.mxu0
        %1795 = vrot.lane.b32.xlu0 %v1076, 104
        %v1796 = vpop.permute.xlu0 %1795
        %1797 = vrot.lane.b32.xlu0 %v1073, 72
        %v1798 = vpop.permute.xlu0 %1797
        %v1799 = vsel %vm1157, %v1796, 0
        %v1801 = vsel %vm1157, %v1798, 0
        %1803 = vmatprep.subr.mxu0 0.0
        %1804 = vmatpush1.xpose.msra.mxu0 0.0
        %1805 = vmatprep.subr.mxu0 0.0
        %1806 = vmatpush1.xpose.msra.mxu0 0.0
        %1807 = vmatprep.subr.mxu0 0.0
        %1808 = vmatpush1.xpose.msra.mxu0 0.0
        %1809 = vmatprep.subr.mxu0 0.0
        %1810 = vmatpush1.xpose.msra.mxu0 0.0
        %1811 = vmatprep.subr.mxu0 0.0
        %1812 = vmatpush1.xpose.msra.mxu0 0.0
        %1813 = vmatprep.subr.mxu0 0.0
        %1814 = vmatpush1.xpose.msra.mxu0 0.0
        %1815 = vmatprep.subr.mxu0 0.0
        %1816 = vmatpush1.xpose.msra.mxu0 0.0
        %1817 = vmatprep.subr.mxu0 0.0
        %1818 = vmatpush1.xpose.msra.mxu0 0.0
        %1819 = vmatprep.subr.mxu0 0.0
        %1820 = vmatpush1.xpose.msra.mxu0 0.0
        %1821 = vmatprep.subr.mxu0 0.0
        %1822 = vmatpush1.xpose.msra.mxu0 0.0
        %1823 = vmatprep.subr.mxu0 0.0
        %1824 = vmatpush1.xpose.msra.mxu0 0.0
        %1825 = vmatprep.subr.mxu0 0.0
        %1826 = vmatpush1.xpose.msra.mxu0 0.0
        %1827 = vmatprep.subr.mxu0 0.0
        %1828 = vmatpush1.xpose.msra.mxu0 0.0
        %1829 = vmatprep.subr.mxu0 0.0
        %1830 = vmatpush1.xpose.msra.mxu0 0.0
        %1831 = vmatprep.subr.mxu0 0.0
        %1832 = vmatpush1.xpose.msra.mxu0 0.0
        %1833 = vmatprep.subr.mxu0 0.0
        %1834 = vmatpush1.xpose.msra.mxu0 %v1801
        %1835 = vmatprep.subr.mxu0 0.0
        %1836 = vmatpush2.xpose.msra.mxu0 0.0
        %1837 = vmatprep.subr.mxu0 0.0
        %1838 = vmatpush2.xpose.msra.mxu0 0.0
        %1839 = vmatprep.subr.mxu0 0.0
        %1840 = vmatpush2.xpose.msra.mxu0 0.0
        %1841 = vmatprep.subr.mxu0 0.0
        %1842 = vmatpush2.xpose.msra.mxu0 0.0
        %1843 = vmatprep.subr.mxu0 0.0
        %1844 = vmatpush2.xpose.msra.mxu0 0.0
        %1845 = vmatprep.subr.mxu0 0.0
        %1846 = vmatpush2.xpose.msra.mxu0 0.0
        %1847 = vmatprep.subr.mxu0 0.0
        %1848 = vmatpush2.xpose.msra.mxu0 0.0
        %1849 = vmatprep.subr.mxu0 0.0
        %1850 = vmatpush2.xpose.msra.mxu0 0.0
        %1851 = vmatprep.subr.mxu0 0.0
        %1852 = vmatpush2.xpose.msra.mxu0 0.0
        %1853 = vmatprep.subr.mxu0 0.0
        %1854 = vmatpush2.xpose.msra.mxu0 0.0
        %1855 = vmatprep.subr.mxu0 0.0
        %1856 = vmatpush2.xpose.msra.mxu0 0.0
        %1857 = vmatprep.subr.mxu0 0.0
        %1858 = vmatpush2.xpose.msra.mxu0 0.0
        %1859 = vmatprep.subr.mxu0 0.0
        %1860 = vmatpush2.xpose.msra.mxu0 0.0
        %1861 = vmatprep.subr.mxu0 0.0
        %1862 = vmatpush2.xpose.msra.mxu0 0.0
        %1863 = vmatprep.subr.mxu0 0.0
        %1864 = vmatpush2.xpose.msra.mxu0 0.0
        %1865 = vmatprep.subr.mxu0 0.0
        %1866 = vmatpush2.xpose.msra.mxu0 0.0
        %1867 = vmatprep.mubr.f32.mxu0 0.0
        %1868 = vmatmul.mubr.f32.gmra.mxu0 %v1799
        %v1869 = vpop.f32.mrf.mxu0
        %v1870 = vadd.f32 0.0, %v1869
        %v1871 = vpop.f32.mrf.mxu0
        %1872 = vdwg.mxu0
        %1873 = vset.pattern.permute.xlu0 19
        %1874 = vperm.xlu0 %1873, %v1151
        %v1875 = vpop.permute.xlu0 %1874
        %v1877 = vmul.f32 %v1875, %v953
        %1878 = vset.pattern.permute.xlu0 18
        %1879 = vperm.xlu0 %1878, %v1151
        %v1880 = vpop.permute.xlu0 %1879
        %v1882 = vadd.f32 %v1880, %v1877
        %1883 = vset.pattern.permute.xlu0 20
        %1884 = vperm.xlu0 %1883, %v1151
        %v1885 = vpop.permute.xlu0 %1884
        %v1887 = vmul.f32 %v1885, %v955
        %v1888 = vadd.f32 %v1882, %v1887
        %1889 = vset.pattern.permute.xlu0 21
        %1890 = vperm.xlu0 %1889, %v1151
        %v1891 = vpop.permute.xlu0 %1890
        %v1893 = vmul.f32 %v1891, %v957
        %v1894 = vadd.f32 %v1888, %v1893
        %1895 = vset.pattern.permute.xlu0 22
        %1896 = vperm.xlu0 %1895, %v1151
        %v1897 = vpop.permute.xlu0 %1896
        %v1899 = vmul.f32 %v1897, %v959
        %v1900 = vadd.f32 %v1894, %v1899
        %1901 = vset.pattern.permute.xlu0 23
        %1902 = vperm.xlu0 %1901, %v1151
        %v1903 = vpop.permute.xlu0 %1902
        %v1905 = vmul.f32 %v1903, %v961
        %v1906 = vadd.f32 %v1900, %v1905
        %v1907 = vxor.u32 %v1906, 2147483648
        %v1908 = vmul.f32 %v1907, 1.442695
        %v1909 = vpow.pop %v1908
        %v1910 = vadd.f32 %v1909, 1.0
        %v1911 = vrcp.pop %v1910
        %v1912 = vmul.f32 1.0, %v1911
        %v1913 = vsel %vm1279, -1e+30, %v1870
        %v1914 = vsel %vm1279, 0.0, %v1912
        %v1915 = vmax.f32 %v1914, 1e-06
        %v1916 = vlog2.pop %v1915
        %v1917 = vmul.f32 %v1916, 0.6931472
        %v1918 = vadd.f32 %v1917, %v1913
        %v1919 = vsel %vm1157, %v1918, -inf
        %1920 = vmax.xlane.f32.xlu0 %v1919
        %v1921 = vpop.xlane.xlu0 %1920
        %v1922 = vsub.f32 %v1918, %v1921
        %v1923 = vmul.f32 %v1922, 1.442695
        %v1924 = vpow.pop %v1923
        %v1925 = vsel %vm1157, %v1924, 0.0
        %1926 = vadd.xlane.f32.xlu0 %v1925
        %v1927 = vpop.xlane.xlu0 %1926
        %v1928 = vrcp.pop %v1927
        %v1929 = vmul.f32 %v1924, %v1928
        %1930 = vrot.lane.b32.xlu0 %v1073, 40
        %v1931 = vpop.permute.xlu0 %1930
        %v1934 = vsel %vm1157, %v1929, 0
        %1936 = vmatprep.subr.mxu0 0.0
        %1937 = vmatpush1.msra.mxu0 0.0
        %1938 = vmatprep.subr.mxu0 0.0
        %1939 = vmatpush1.msra.mxu0 0.0
        %1940 = vmatprep.subr.mxu0 0.0
        %1941 = vmatpush1.msra.mxu0 0.0
        %1942 = vmatprep.subr.mxu0 0.0
        %1943 = vmatpush1.msra.mxu0 0.0
        %1944 = vmatprep.subr.mxu0 0.0
        %1945 = vmatpush1.msra.mxu0 0.0
        %1946 = vmatprep.subr.mxu0 0.0
        %1947 = vmatpush1.msra.mxu0 0.0
        %1948 = vmatprep.subr.mxu0 0.0
        %1949 = vmatpush1.msra.mxu0 0.0
        %1950 = vmatprep.subr.mxu0 0.0
        %1951 = vmatpush1.msra.mxu0 0.0
        %1952 = vmatprep.subr.mxu0 0.0
        %1953 = vmatpush1.msra.mxu0 0.0
        %1954 = vmatprep.subr.mxu0 0.0
        %1955 = vmatpush1.msra.mxu0 0.0
        %1956 = vmatprep.subr.mxu0 0.0
        %1957 = vmatpush1.msra.mxu0 0.0
        %1958 = vmatprep.subr.mxu0 0.0
        %1959 = vmatpush1.msra.mxu0 0.0
        %1960 = vmatprep.subr.mxu0 0.0
        %1961 = vmatpush1.msra.mxu0 0.0
        %1962 = vmatprep.subr.mxu0 0.0
        %1963 = vmatpush1.msra.mxu0 0.0
        %1964 = vmatprep.subr.mxu0 0.0
        %1965 = vmatpush1.msra.mxu0 0.0
        %1966 = vmatprep.subr.mxu0 0.0
        %1967 = vmatpush1.msra.mxu0 %v1931
        %1968 = vmatprep.subr.mxu0 0.0
        %1969 = vmatpush2.msra.mxu0 0.0
        %1970 = vmatprep.subr.mxu0 0.0
        %1971 = vmatpush2.msra.mxu0 0.0
        %1972 = vmatprep.subr.mxu0 0.0
        %1973 = vmatpush2.msra.mxu0 0.0
        %1974 = vmatprep.subr.mxu0 0.0
        %1975 = vmatpush2.msra.mxu0 0.0
        %1976 = vmatprep.subr.mxu0 0.0
        %1977 = vmatpush2.msra.mxu0 0.0
        %1978 = vmatprep.subr.mxu0 0.0
        %1979 = vmatpush2.msra.mxu0 0.0
        %1980 = vmatprep.subr.mxu0 0.0
        %1981 = vmatpush2.msra.mxu0 0.0
        %1982 = vmatprep.subr.mxu0 0.0
        %1983 = vmatpush2.msra.mxu0 0.0
        %1984 = vmatprep.subr.mxu0 0.0
        %1985 = vmatpush2.msra.mxu0 0.0
        %1986 = vmatprep.subr.mxu0 0.0
        %1987 = vmatpush2.msra.mxu0 0.0
        %1988 = vmatprep.subr.mxu0 0.0
        %1989 = vmatpush2.msra.mxu0 0.0
        %1990 = vmatprep.subr.mxu0 0.0
        %1991 = vmatpush2.msra.mxu0 0.0
        %1992 = vmatprep.subr.mxu0 0.0
        %1993 = vmatpush2.msra.mxu0 0.0
        %1994 = vmatprep.subr.mxu0 0.0
        %1995 = vmatpush2.msra.mxu0 0.0
        %1996 = vmatprep.subr.mxu0 0.0
        %1997 = vmatpush2.msra.mxu0 0.0
        %1998 = vmatprep.subr.mxu0 0.0
        %1999 = vmatpush2.msra.mxu0 0.0
        %2000 = vmatprep.mubr.f32.mxu0 0.0
        %2001 = vmatmul.mubr.f32.gmra.mxu0 %v1934
        %v2002 = vpop.f32.mrf.mxu0
        %v2003 = vadd.f32 0.0, %v2002
        %v2004 = vpop.f32.mrf.mxu0
        %2005 = vdwg.mxu0
        %2007 = vrot.lane.b32.xlu0 %v1581, 8
        %v2008 = vpop.permute.xlu0 %2007
        %2011 = vrot.lane.b32.xlu0 %v1792, 16
        %v2012 = vpop.permute.xlu0 %2011
        %2015 = vrot.lane.b32.xlu0 %v2003, 24
        %v2016 = vpop.permute.xlu0 %2015
        %v2018 = vsel %vm1157, %v1370, %v2008
        %vm2019 = vcmask 130048
        %v2020 = vsel %vm2019, %v2018, %v2012
        %vm2021 = vcmask 195584
        %v2022 = vsel %vm2021, %v2020, %v2016
        %v2023 = vlaneseq
        %v2024 = vshrl.u32 %v2023, 7
        %v2025 = vsub.s32 0, %v2024
        %v2026 = vrot.slane %v989, %v2025
        %v2028 = vsel %vm1002, %v2022, 0
        %2030 = vmatprep.subr.mxu0 0.0
        %2031 = vmatpush1.msra.mxu0 0.0
        %2032 = vmatprep.subr.mxu0 0.0
        %2033 = vmatpush1.msra.mxu0 0.0
        %2034 = vmatprep.subr.mxu0 0.0
        %2035 = vmatpush1.msra.mxu0 0.0
        %2036 = vmatprep.subr.mxu0 0.0
        %2037 = vmatpush1.msra.mxu0 0.0
        %2038 = vmatprep.subr.mxu0 0.0
        %2039 = vmatpush1.msra.mxu0 0.0
        %2040 = vmatprep.subr.mxu0 0.0
        %2041 = vmatpush1.msra.mxu0 0.0
        %2042 = vmatprep.subr.mxu0 0.0
        %2043 = vmatpush1.msra.mxu0 0.0
        %2044 = vmatprep.subr.mxu0 0.0
        %2045 = vmatpush1.msra.mxu0 0.0
        %2046 = vmatprep.subr.mxu0 0.0
        %2047 = vmatpush1.msra.mxu0 0.0
        %2048 = vmatprep.subr.mxu0 0.0
        %2049 = vmatpush1.msra.mxu0 0.0
        %2050 = vmatprep.subr.mxu0 0.0
        %2051 = vmatpush1.msra.mxu0 0.0
        %2052 = vmatprep.subr.mxu0 0.0
        %2053 = vmatpush1.msra.mxu0 0.0
        %2054 = vmatprep.subr.mxu0 0.0
        %2055 = vmatpush1.msra.mxu0 %v976
        %2056 = vmatprep.subr.mxu0 0.0
        %2057 = vmatpush1.msra.mxu0 %v975
        %2058 = vmatprep.subr.mxu0 0.0
        %2059 = vmatpush1.msra.mxu0 %v974
        %2060 = vmatprep.subr.mxu0 0.0
        %2061 = vmatpush1.msra.mxu0 %v973
        %2062 = vmatprep.subr.mxu0 0.0
        %2063 = vmatpush2.msra.mxu0 0.0
        %2064 = vmatprep.subr.mxu0 0.0
        %2065 = vmatpush2.msra.mxu0 0.0
        %2066 = vmatprep.subr.mxu0 0.0
        %2067 = vmatpush2.msra.mxu0 0.0
        %2068 = vmatprep.subr.mxu0 0.0
        %2069 = vmatpush2.msra.mxu0 0.0
        %2070 = vmatprep.subr.mxu0 0.0
        %2071 = vmatpush2.msra.mxu0 0.0
        %2072 = vmatprep.subr.mxu0 0.0
        %2073 = vmatpush2.msra.mxu0 0.0
        %2074 = vmatprep.subr.mxu0 0.0
        %2075 = vmatpush2.msra.mxu0 0.0
        %2076 = vmatprep.subr.mxu0 0.0
        %2077 = vmatpush2.msra.mxu0 0.0
        %2078 = vmatprep.subr.mxu0 0.0
        %2079 = vmatpush2.msra.mxu0 0.0
        %2080 = vmatprep.subr.mxu0 0.0
        %2081 = vmatpush2.msra.mxu0 0.0
        %2082 = vmatprep.subr.mxu0 0.0
        %2083 = vmatpush2.msra.mxu0 0.0
        %2084 = vmatprep.subr.mxu0 0.0
        %2085 = vmatpush2.msra.mxu0 0.0
        %2086 = vmatprep.subr.mxu0 0.0
        %2087 = vmatpush2.msra.mxu0 0.0
        %2088 = vmatprep.subr.mxu0 0.0
        %2089 = vmatpush2.msra.mxu0 0.0
        %2090 = vmatprep.subr.mxu0 0.0
        %2091 = vmatpush2.msra.mxu0 0.0
        %2092 = vmatprep.subr.mxu0 0.0
        %2093 = vmatpush2.msra.mxu0 0.0
        %2094 = vmatprep.mubr.f32.mxu0 0.0
        %2095 = vmatmul.mubr.f32.gmra.mxu0 %v2028
        %v2096 = vpop.f32.mrf.mxu0
        %v2097 = vadd.f32 %v2026, %v2096
        %v2098 = vpop.f32.mrf.mxu0
        %2099 = vdwg.mxu0
        %v2100 = vadd.f32 %v964, %v2097
        %v2101 = vsel %vm1002, %v2100, 0.0
        %2102 = vadd.xlane.f32.xlu0 %v2101
        %v2103 = vpop.xlane.xlu0 %2102
        %v2104 = vrcp.pop 32.0
        %v2105 = vmul.f32 %v2103, %v2104
        %v2106 = vsub.f32 %v2100, %v2105
        %v2107 = vmul.f32 %v2106, %v2106
        %v2108 = vsel %vm1002, %v2107, 0.0
        %2109 = vadd.xlane.f32.xlu0 %v2108
        %v2110 = vpop.xlane.xlu0 %2109
        %v2111 = vmul.f32 %v2110, %v2104
        %v2112 = vadd.f32 %v2111, 1e-05
        %v2113 = vrsqrt.pop %v2112
        %v2114 = vmul.f32 %v2106, %v2113
        %v2115 = vlaneseq
        %v2116 = vshrl.u32 %v2115, 7
        %v2117 = vsub.s32 0, %v2116
        %v2118 = vrot.slane %v990, %v2117
        %v2119 = vmul.f32 %v2114, %v2118
        %v2120 = vlaneseq
        %v2121 = vshrl.u32 %v2120, 7
        %v2122 = vsub.s32 0, %v2121
        %v2123 = vrot.slane %v991, %v2122
        %v2124 = vadd.f32 %v2119, %v2123
        %v2125 = vld [vmem:[%s655] sm:$0x1]
        %v2127 = vlaneseq
        %v2128 = vshrl.u32 %v2127, 7
        %v2129 = vsub.s32 0, %v2128
        %v2130 = vrot.slane %v2125, %v2129
        %v2133 = vsel %vm1002, %v2124, 0
        %2135 = vmatprep.subr.mxu0 0.0
        %2136 = vmatpush1.msra.mxu0 0.0
        %2137 = vmatprep.subr.mxu0 0.0
        %2138 = vmatpush1.msra.mxu0 0.0
        %2139 = vmatprep.subr.mxu0 0.0
        %2140 = vmatpush1.msra.mxu0 0.0
        %2141 = vmatprep.subr.mxu0 0.0
        %2142 = vmatpush1.msra.mxu0 0.0
        %2143 = vmatprep.subr.mxu0 0.0
        %2144 = vmatpush1.msra.mxu0 0.0
        %2145 = vmatprep.subr.mxu0 0.0
        %2146 = vmatpush1.msra.mxu0 0.0
        %2147 = vmatprep.subr.mxu0 0.0
        %2148 = vmatpush1.msra.mxu0 0.0
        %2149 = vmatprep.subr.mxu0 0.0
        %2150 = vmatpush1.msra.mxu0 0.0
        %2151 = vmatprep.subr.mxu0 0.0
        %2152 = vmatpush1.msra.mxu0 0.0
        %2153 = vmatprep.subr.mxu0 0.0
        %2154 = vmatpush1.msra.mxu0 0.0
        %2155 = vmatprep.subr.mxu0 0.0
        %2156 = vmatpush1.msra.mxu0 0.0
        %2157 = vmatprep.subr.mxu0 0.0
        %2158 = vmatpush1.msra.mxu0 0.0
        %2159 = vmatprep.subr.mxu0 0.0
        %2160 = vmatpush1.msra.mxu0 %v980
        %2161 = vmatprep.subr.mxu0 0.0
        %2162 = vmatpush1.msra.mxu0 %v979
        %2163 = vmatprep.subr.mxu0 0.0
        %2164 = vmatpush1.msra.mxu0 %v978
        %2165 = vmatprep.subr.mxu0 0.0
        %2166 = vmatpush1.msra.mxu0 %v977
        %2167 = vmatprep.subr.mxu0 0.0
        %2168 = vmatpush2.msra.mxu0 0.0
        %2169 = vmatprep.subr.mxu0 0.0
        %2170 = vmatpush2.msra.mxu0 0.0
        %2171 = vmatprep.subr.mxu0 0.0
        %2172 = vmatpush2.msra.mxu0 0.0
        %2173 = vmatprep.subr.mxu0 0.0
        %2174 = vmatpush2.msra.mxu0 0.0
        %2175 = vmatprep.subr.mxu0 0.0
        %2176 = vmatpush2.msra.mxu0 0.0
        %2177 = vmatprep.subr.mxu0 0.0
        %2178 = vmatpush2.msra.mxu0 0.0
        %2179 = vmatprep.subr.mxu0 0.0
        %2180 = vmatpush2.msra.mxu0 0.0
        %2181 = vmatprep.subr.mxu0 0.0
        %2182 = vmatpush2.msra.mxu0 0.0
        %2183 = vmatprep.subr.mxu0 0.0
        %2184 = vmatpush2.msra.mxu0 0.0
        %2185 = vmatprep.subr.mxu0 0.0
        %2186 = vmatpush2.msra.mxu0 0.0
        %2187 = vmatprep.subr.mxu0 0.0
        %2188 = vmatpush2.msra.mxu0 0.0
        %2189 = vmatprep.subr.mxu0 0.0
        %2190 = vmatpush2.msra.mxu0 0.0
        %2191 = vmatprep.subr.mxu0 0.0
        %2192 = vmatpush2.msra.mxu0 0.0
        %2193 = vmatprep.subr.mxu0 0.0
        %2194 = vmatpush2.msra.mxu0 0.0
        %2195 = vmatprep.subr.mxu0 0.0
        %2196 = vmatpush2.msra.mxu0 0.0
        %2197 = vmatprep.subr.mxu0 0.0
        %2198 = vmatpush2.msra.mxu0 0.0
        %2199 = vmatprep.mubr.f32.mxu0 0.0
        %2200 = vmatmul.mubr.f32.gmra.mxu0 %v2133
        %v2201 = vpop.f32.mrf.mxu0
        %v2202 = vadd.f32 %v2130, %v2201
        %v2203 = vpop.f32.mrf.mxu0
        %2204 = vdwg.mxu0
        %v2205 = vmul.f32 %v2202, 0.5
        %v2206 = vmul.f32 %v2202, 0.044715
        %v2207 = vmul.f32 %v2206, %v2202
        %v2208 = vmul.f32 %v2207, %v2202
        %v2209 = vadd.f32 %v2202, %v2208
        %v2210 = vmul.f32 %v2209, 0.7978846
        %v2211 = vtanh.pop %v2210
        %v2212 = vadd.f32 %v2211, 1.0
        %v2213 = vmul.f32 %v2205, %v2212
        %v2214 = vlaneseq
        %v2215 = vshrl.u32 %v2214, 7
        %v2216 = vsub.s32 0, %v2215
        %v2217 = vrot.slane %v992, %v2216
        %vm2218 = vcmask 523264
        %v2220 = vsel %vm2218, %v2213, 0
        %2222 = vmatprep.subr.mxu0 0.0
        %2223 = vmatpush1.msra.mxu0 0.0
        %2224 = vmatprep.subr.mxu0 0.0
        %2225 = vmatpush1.msra.mxu0 0.0
        %2226 = vmatprep.subr.mxu0 0.0
        %2227 = vmatpush1.msra.mxu0 0.0
        %2228 = vmatprep.subr.mxu0 0.0
        %2229 = vmatpush1.msra.mxu0 0.0
        %2230 = vmatprep.subr.mxu0 0.0
        %2231 = vmatpush1.msra.mxu0 0.0
        %2232 = vmatprep.subr.mxu0 0.0
        %2233 = vmatpush1.msra.mxu0 0.0
        %2234 = vmatprep.subr.mxu0 0.0
        %2235 = vmatpush1.msra.mxu0 0.0
        %2236 = vmatprep.subr.mxu0 0.0
        %2237 = vmatpush1.msra.mxu0 0.0
        %2238 = vmatprep.subr.mxu0 0.0
        %2239 = vmatpush1.msra.mxu0 %v988
        %2240 = vmatprep.subr.mxu0 0.0
        %2241 = vmatpush1.msra.mxu0 %v987
        %2242 = vmatprep.subr.mxu0 0.0
        %2243 = vmatpush1.msra.mxu0 %v986
        %2244 = vmatprep.subr.mxu0 0.0
        %2245 = vmatpush1.msra.mxu0 %v985
        %2246 = vmatprep.subr.mxu0 0.0
        %2247 = vmatpush1.msra.mxu0 %v984
        %2248 = vmatprep.subr.mxu0 0.0
        %2249 = vmatpush1.msra.mxu0 %v983
        %2250 = vmatprep.subr.mxu0 0.0
        %2251 = vmatpush1.msra.mxu0 %v982
        %2252 = vmatprep.subr.mxu0 0.0
        %2253 = vmatpush1.msra.mxu0 %v981
        %2254 = vmatprep.subr.mxu0 0.0
        %2255 = vmatpush2.msra.mxu0 0.0
        %2256 = vmatprep.subr.mxu0 0.0
        %2257 = vmatpush2.msra.mxu0 0.0
        %2258 = vmatprep.subr.mxu0 0.0
        %2259 = vmatpush2.msra.mxu0 0.0
        %2260 = vmatprep.subr.mxu0 0.0
        %2261 = vmatpush2.msra.mxu0 0.0
        %2262 = vmatprep.subr.mxu0 0.0
        %2263 = vmatpush2.msra.mxu0 0.0
        %2264 = vmatprep.subr.mxu0 0.0
        %2265 = vmatpush2.msra.mxu0 0.0
        %2266 = vmatprep.subr.mxu0 0.0
        %2267 = vmatpush2.msra.mxu0 0.0
        %2268 = vmatprep.subr.mxu0 0.0
        %2269 = vmatpush2.msra.mxu0 0.0
        %2270 = vmatprep.subr.mxu0 0.0
        %2271 = vmatpush2.msra.mxu0 0.0
        %2272 = vmatprep.subr.mxu0 0.0
        %2273 = vmatpush2.msra.mxu0 0.0
        %2274 = vmatprep.subr.mxu0 0.0
        %2275 = vmatpush2.msra.mxu0 0.0
        %2276 = vmatprep.subr.mxu0 0.0
        %2277 = vmatpush2.msra.mxu0 0.0
        %2278 = vmatprep.subr.mxu0 0.0
        %2279 = vmatpush2.msra.mxu0 0.0
        %2280 = vmatprep.subr.mxu0 0.0
        %2281 = vmatpush2.msra.mxu0 0.0
        %2282 = vmatprep.subr.mxu0 0.0
        %2283 = vmatpush2.msra.mxu0 0.0
        %2284 = vmatprep.subr.mxu0 0.0
        %2285 = vmatpush2.msra.mxu0 0.0
        %2286 = vmatprep.mubr.f32.mxu0 0.0
        %2287 = vmatmul.mubr.f32.gmra.mxu0 %v2220
        %v2288 = vpop.f32.mrf.mxu0
        %v2289 = vadd.f32 %v2217, %v2288
        %v2290 = vpop.f32.mrf.mxu0
        %2291 = vdwg.mxu0
        %v2292 = vadd.f32 %v2124, %v2289
        %v2293 = vsel %vm1002, %v2292, 0.0
        %2294 = vadd.xlane.f32.xlu0 %v2293
        %v2295 = vpop.xlane.xlu0 %2294
        %v2296 = vmul.f32 %v2295, %v2104
        %v2297 = vsub.f32 %v2292, %v2296
        %v2298 = vmul.f32 %v2297, %v2297
        %v2299 = vsel %vm1002, %v2298, 0.0
        %2300 = vadd.xlane.f32.xlu0 %v2299
        %v2301 = vpop.xlane.xlu0 %2300
        %v2302 = vmul.f32 %v2301, %v2104
        %v2303 = vadd.f32 %v2302, 1e-05
        %v2304 = vrsqrt.pop %v2303
        %v2305 = vmul.f32 %v2297, %v2304
        %v2306 = vlaneseq
        %v2307 = vshrl.u32 %v2306, 7
        %v2308 = vsub.s32 0, %v2307
        %v2309 = vrot.slane %v993, %v2308
        %v2310 = vmul.f32 %v2305, %v2309
        %v2311 = vlaneseq
        %v2312 = vshrl.u32 %v2311, 7
        %v2313 = vsub.s32 0, %v2312
        %v2314 = vrot.slane %v994, %v2313
        %v2315 = vadd.f32 %v2310, %v2314
        %2316 = vst.msk [vmem:[#allocation2] sm:$0xff] %vm1002, %v2315
        %p2317 = scmp.eq.s32.totalorder %s33, 1
        // Predicated region
        $region81: #{tpu_custom_call.1} parent=75 // pred_check
          %p2318 = pneg %p2317
        $region82: #{tpu_custom_call.1} parent=75 // pred_check_branch
          %2320 = sbr.rel (%p2318) target = $region84
        $region83: #{tpu_custom_call.1} parent=75 // pred_region
          %2321 = vst.msk [vmem:[%s615] sm:$0xff] %vm1002, %v2315
        $region84: #{tpu_custom_call.1} parent=75 // pred_fallthru
          _
        %s2322 = sand.u32 %s402, 1
        %s2323 = scalar_lea.sflag [#allocation6], %s2322
        %s2324 = sand.u32 %s402, 1
        %s2325 = smul.addr %s2324, 8
        %s2326 = scalar_lea.vmem [#allocation5], %s2325
        // Predicated region
        $region85: #{tpu_custom_call.1} parent=75 // pred_check
          %p2327 = pneg %p412
        $region86: #{tpu_custom_call.1} parent=75 // pred_check_branch
          %2329 = sbr.rel (%p2327) target = $region88
        $region87: #{tpu_custom_call.1} parent=75 // pred_region
          %s2331 = ssub.s32 128, 128
          %2332 = vsyncadd %s2323, %s2331
          %s2333 = smul.addr %s32, 128
          %s2334 = scalar_lea.hbm %s14, %s2333
          %s2336 = sshll.u32 %s2326, 4
          %s2337 = int_to_ptr.vmem [resolvable:$true] %s2336
          %2339 = dma.vmem_to_hbm [thread:$0]  %s2337, 128, %s2334, %s2323
        $region88: #{tpu_custom_call.1} parent=75 // pred_fallthru
          _
      $region76: #{tpu_custom_call.1} parent=5 // pred_fallthru
        _
      %p2340 = scmp.le.s32.totalorder 2, %s23
      // Predicated region
      $region89: #{tpu_custom_call.1} parent=5 // pred_check
        %p2341 = pneg %p2340
      $region90: #{tpu_custom_call.1} parent=5 // pred_check_branch
        %2343 = sbr.rel (%p2341) target = $region92
      $region91: #{tpu_custom_call.1} parent=5 // pred_region
        %s2344 = ssub.s32 %s23, 2
        // Predicated region
        $region93: #{tpu_custom_call.1} parent=91 // pred_check
          %p2345 = pneg %p418
        $region94: #{tpu_custom_call.1} parent=91 // pred_check_branch
          %2347 = sbr.rel (%p2345) target = $region96
        $region95: #{tpu_custom_call.1} parent=91 // pred_region
          %s2348 = sand.u32 %s403, 1
          %s2349 = scalar_lea.sflag [#allocation6], %s2348
          %s2350 = sand.u32 %s403, 1
          %s2351 = smul.addr %s2350, 8
          %s2352 = scalar_lea.vmem [#allocation5], %s2351
          %2353 = dma.done %s2349, 128
        $region96: #{tpu_custom_call.1} parent=91 // pred_fallthru
          _
      $region92: #{tpu_custom_call.1} parent=5 // pred_fallthru
        _
    $region6: #{tpu_custom_call.1} parent=1 // loop_footer
      %s27 = sadd.s32 1, %s23
    $region7: #{tpu_custom_call.1} parent=1 // loop_footer_branch
      %22 = sbr.rel target = $region3
    $region8: #{tpu_custom_call.1} parent=1 // loop_exit
      _
    %2354 = vsyncpa [#allocation6], 1
    %s2355 = scalar_lea.sflag [#allocation6], 1
    %2356 = vsyncpa %s2355, 1

</llo_original>
